<compile_context>
chip_gen: v7x
topology: tpu7x:2x2x1
jax: 0.10.0
libtpu: 0.0.40
codegen_flags: <defaults>
</compile_context>

<pallas_src>
import functools

import jax
import jax.numpy as jnp
from jax.experimental import pallas as pl
from jax.experimental.pallas import tpu as pltpu


# ---------------------------------------------------------------------------
# Pallas kernel: fused dilated conv + folded BN + ELU for one (batch, H-tile)
# ---------------------------------------------------------------------------

def _aspp_kernel(x_ref, w_ref, s_ref, b_ref, o_ref, acc_ref, *, kh, kw, dil, th, wo):
    """x_ref : (1, th + (kh-1)*dil, Wp, Cin)  bf16 padded-input tile (with halo rows)
       w_ref : (kh*kw, Cin, Cout_pad)         bf16 per-tap weights
       s_ref : (1, Cout_pad)                  f32 folded BN scale
       b_ref : (1, Cout_pad)                  f32 folded BN bias
       o_ref : (1, th*wo, Cout_pad)           output rows (row-major over (h, w))
       acc_ref: (th*wo, Cout_pad)             f32 VMEM accumulator
    """
    acc_ref[...] = jnp.zeros_like(acc_ref)
    cin = x_ref.shape[-1]
    # Statically-unrolled tap loop: each dilated tap is a shifted slice of the
    # resident VMEM input tile -> one small MXU matmul accumulated in f32.
    for ki in range(kh):
        for kj in range(kw):
            xs = x_ref[0, ki * dil:ki * dil + th, kj * dil:kj * dil + wo, :]
            xs = xs.reshape(th * wo, cin)
            acc_ref[...] += jnp.dot(xs, w_ref[ki * kw + kj],
                                    preferred_element_type=jnp.float32)
    y = acc_ref[...] * s_ref[...] + b_ref[...]
    # ELU(alpha=1). TODO(synk): jnp.expm1 would be marginally more accurate near 0,
    # but exp is used to stay on guaranteed-lowered Mosaic primitives.
    y = jnp.where(y > 0.0, y, jnp.exp(jnp.minimum(y, 0.0)) - 1.0)
    o_ref[...] = y[None, :, :].astype(o_ref.dtype)


# ---------------------------------------------------------------------------
# Wrapper
# ---------------------------------------------------------------------------

def aspp_forward(x_nchw, w_oihw, bn_scale, bn_bias, *, padding, dilation):
    B, Cin, H, W = x_nchw.shape
    Cout, _, KH, KW = w_oihw.shape
    d, p = dilation, padding
    Ho = H + 2 * p - d * (KH - 1)
    Wo = W + 2 * p - d * (KW - 1)
    halo = d * (KH - 1)

    # NCHW -> NHWC, zero-pad spatially once, cast to bf16 for the MXU inputs.
    x = jnp.transpose(x_nchw, (0, 2, 3, 1))
    x = jnp.pad(x, ((0, 0), (p, p), (p, p), (0, 0))).astype(jnp.bfloat16)
    Wp = x.shape[2]

    # Lane-dense output channels (pad Cout up to a multiple of 128, slice after).
    Cout_pad = -(-Cout // 128) * 128
    w = jnp.transpose(w_oihw, (2, 3, 1, 0)).reshape(KH * KW, Cin, Cout)
    w = jnp.pad(w, ((0, 0), (0, 0), (0, Cout_pad - Cout))).astype(jnp.bfloat16)
    s2 = jnp.pad(bn_scale.astype(jnp.float32), (0, Cout_pad - Cout)).reshape(1, Cout_pad)
    b2 = jnp.pad(bn_bias.astype(jnp.float32), (0, Cout_pad - Cout)).reshape(1, Cout_pad)

    # Output-row tile: target a few hundred rows (th*Wo) per step, bounded by an
    # explicit VMEM budget (conservative for v7x's 64 MiB physical VMEM).
    vmem_budget = 8 * 1024 * 1024

    def step_bytes(t):
        in_b = (t + halo) * Wp * Cin * 2           # bf16 input tile
        out_b = t * Wo * Cout_pad * 4              # f32 output tile
        return 2 * in_b + 2 * out_b + t * Wo * Cout_pad * 4   # 2x buffers + scratch

    th = max(1, min(Ho, max(1, 512 // max(Wo, 1))))
    while th > 1 and step_bytes(th) > vmem_budget:
        th -= 1
    while Ho % th != 0:
        th -= 1
    if th < Ho and (th * Wo) % 8 != 0:
        th = Ho                                    # keep output block (8,128)-friendly
    n_ht = Ho // th

    # Halo'd H tiles of the padded input -> one flat parallel grid axis.
    if n_ht == 1:
        x_tiles = x                                # (B, th+halo, Wp, Cin): no duplication
    else:
        x_tiles = jnp.concatenate(
            [x[:, i * th:i * th + th + halo][:, None] for i in range(n_ht)], axis=1
        ).reshape(B * n_ht, th + halo, Wp, Cin)

    kernel = functools.partial(_aspp_kernel, kh=KH, kw=KW, dil=d, th=th, wo=Wo)
    out = pl.pallas_call(
        kernel,
        out_shape=jax.ShapeDtypeStruct((B * n_ht, th * Wo, Cout_pad), jnp.float32),
        grid=(B * n_ht,),
        in_specs=[
            pl.BlockSpec((1, th + halo, Wp, Cin), lambda i: (i, 0, 0, 0)),
            pl.BlockSpec((KH * KW, Cin, Cout_pad), lambda i: (0, 0, 0)),
            pl.BlockSpec((1, Cout_pad), lambda i: (0, 0)),
            pl.BlockSpec((1, Cout_pad), lambda i: (0, 0)),
        ],
        out_specs=pl.BlockSpec((1, th * Wo, Cout_pad), lambda i: (i, 0, 0)),
        scratch_shapes=[pltpu.VMEM((th * Wo, Cout_pad), jnp.float32)],
        compiler_params=pltpu.CompilerParams(
            dimension_semantics=("parallel",),
            vmem_limit_bytes=32 * 1024 * 1024,
        ),
    )(x_tiles, w, s2, b2)

    out = out.reshape(B, Ho, Wo, Cout_pad)[..., :Cout]
    return jnp.transpose(out, (0, 3, 1, 2))        # NHWC -> NCHW


# ---------------------------------------------------------------------------
# Plain-JAX reference (for a loose numerical self-check) and parameter init
# ---------------------------------------------------------------------------

def aspp_reference(x_nchw, w_oihw, bn_scale, bn_bias, *, padding, dilation):
    y = jax.lax.conv_general_dilated(
        x_nchw, w_oihw, window_strides=(1, 1),
        padding=[(padding, padding), (padding, padding)],
        rhs_dilation=(dilation, dilation),
        dimension_numbers=("NCHW", "OIHW", "NCHW"))
    y = y * bn_scale[None, :, None, None] + bn_bias[None, :, None, None]
    return jnp.where(y > 0.0, y, jnp.exp(jnp.minimum(y, 0.0)) - 1.0)


def init_params(key, inplanes, planes, kernel_size):
    kw_, kg, kb, km, kv = jax.random.split(key, 5)
    w = 0.2 * jax.random.normal(kw_, (planes, inplanes, kernel_size, kernel_size),
                                jnp.float32)
    gamma = 1.0 + 0.1 * jax.random.normal(kg, (planes,), jnp.float32)
    beta = 0.1 * jax.random.normal(kb, (planes,), jnp.float32)
    mean = 0.1 * jax.random.normal(km, (planes,), jnp.float32)
    var = 0.5 + jax.random.uniform(kv, (planes,), jnp.float32)
    eps = 1e-5
    scale = gamma / jnp.sqrt(var + eps)       # BatchNorm2d eval mode, folded
    bias = beta - mean * scale
    return w, scale, bias


if __name__ == "__main__":
    B, Cin, Cout, H, W = 2, 4, 8, 16, 16
    kernel_size, dilation = 3, 2
    padding = dilation                         # typical ASPP atrous branch
    key = jax.random.PRNGKey(0)
    kx, kp = jax.random.split(key)
    x = jax.random.normal(kx, (B, Cin, H, W), jnp.float32)
    w, bn_scale, bn_bias = init_params(kp, Cin, Cout, kernel_size)

    fwd = jax.jit(functools.partial(aspp_forward, padding=padding, dilation=dilation))
    out = jax.block_until_ready(fwd(x, w, bn_scale, bn_bias))

    assert out.shape == (B, Cout, H, W), out.shape
    assert bool(jnp.all(jnp.isfinite(out)))
    ref = aspp_reference(x, w, bn_scale, bn_bias, padding=padding, dilation=dilation)
    max_err = float(jnp.max(jnp.abs(out - ref)))
    # bf16 matmul inputs with f32 accumulation: loose tolerance vs f32 reference.
    assert max_err < 0.1, max_err
    print("KERNEL_OK")
</pallas_src>

<mosaic_0001>
module attributes {stable_mosaic.version = 11 : i64} {
  func.func @_aspp_kernel(%arg0: i32, %arg1: memref<1x20x20x4xbf16, #tpu.memory_space<vmem>>, %arg2: memref<9x4x128xbf16, #tpu.memory_space<vmem>>, %arg3: memref<1x128xf32, #tpu.memory_space<vmem>>, %arg4: memref<1x128xf32, #tpu.memory_space<vmem>>, %arg5: memref<1x256x128xf32, #tpu.memory_space<vmem>>, %arg6: memref<256x128xf32, #tpu.memory_space<vmem>>) attributes {dimension_semantics = [#tpu.dimension_semantics<parallel>], iteration_bounds = array<i64: 2>, scalar_prefetch = 0 : i64, scratch_operands = 1 : i64, tpu.core_type = #tpu.core_type<tc>, window_params = [{transform_indices = @transform_0, window_bounds = array<i64: 1, 20, 20, 4>}, {pipeline_mode = #tpu.pipeline_mode<synchronous>, transform_indices = @transform_1, window_bounds = array<i64: 9, 4, 128>}, {pipeline_mode = #tpu.pipeline_mode<synchronous>, transform_indices = @transform_2, window_bounds = array<i64: 1, 128>}, {pipeline_mode = #tpu.pipeline_mode<synchronous>, transform_indices = @transform_3, window_bounds = array<i64: 1, 128>}, {transform_indices = @transform_4, window_bounds = array<i64: 1, 256, 128>}]} {
    %cst = arith.constant 0.000000e+00 : f32
    %0 = vector.broadcast %cst : f32 to vector<256x128xf32>
    %c0 = arith.constant 0 : index
    %c0_0 = arith.constant 0 : index
    %1 = vector.load %arg6[%c0, %c0_0] : memref<256x128xf32, #tpu.memory_space<vmem>>, vector<256x128xf32>
    tpu.vector_store %arg6[%c0, %c0_0], %0 {strides = array<i32>} : memref<256x128xf32, #tpu.memory_space<vmem>>, vector<256x128xf32>,
    %c0_1 = arith.constant 0 : index
    %c0_2 = arith.constant 0 : index
    %c0_3 = arith.constant 0 : index
    %c0_4 = arith.constant 0 : index
    %2 = vector.load %arg1[%c0_1, %c0_2, %c0_3, %c0_4] : memref<1x20x20x4xbf16, #tpu.memory_space<vmem>>, vector<1x16x16x4xbf16>
    %3 = vector.shape_cast %2 : vector<1x16x16x4xbf16> to vector<16x16x4xbf16>
    %4 = vector.shape_cast %3 : vector<16x16x4xbf16> to vector<256x4xbf16>
    %c0_5 = arith.constant 0 : index
    %c0_6 = arith.constant 0 : index
    %5 = vector.load %arg6[%c0_5, %c0_6] : memref<256x128xf32, #tpu.memory_space<vmem>>, vector<256x128xf32>
    %c0_7 = arith.constant 0 : index
    %c0_8 = arith.constant 0 : index
    %c0_9 = arith.constant 0 : index
    %6 = vector.load %arg2[%c0_7, %c0_8, %c0_9] : memref<9x4x128xbf16, #tpu.memory_space<vmem>>, vector<1x4x128xbf16>
    %7 = vector.shape_cast %6 : vector<1x4x128xbf16> to vector<4x128xbf16>
    %cst_10 = arith.constant dense<0.000000e+00> : vector<256x128xf32>
    %8 = tpu.matmul %4, %7, %cst_10 {dimension_numbers = #tpu.dot_dimension_numbers<[1], [0], [0], [1], [0, 0, 1, 1], [], []>} : vector<256x4xbf16>, vector<4x128xbf16>, vector<256x128xf32> -> vector<256x128xf32>
    %9 = arith.addf %5, %8 : vector<256x128xf32>
    %c0_11 = arith.constant 0 : index
    %c0_12 = arith.constant 0 : index
    %10 = vector.load %arg6[%c0_11, %c0_12] : memref<256x128xf32, #tpu.memory_space<vmem>>, vector<256x128xf32>
    tpu.vector_store %arg6[%c0_11, %c0_12], %9 {strides = array<i32>} : memref<256x128xf32, #tpu.memory_space<vmem>>, vector<256x128xf32>,
    %c0_13 = arith.constant 0 : index
    %c0_14 = arith.constant 0 : index
    %c2 = arith.constant 2 : index
    %c0_15 = arith.constant 0 : index
    %11 = vector.load %arg1[%c0_13, %c0_14, %c2, %c0_15] : memref<1x20x20x4xbf16, #tpu.memory_space<vmem>>, vector<1x16x16x4xbf16>
    %12 = vector.shape_cast %11 : vector<1x16x16x4xbf16> to vector<16x16x4xbf16>
    %13 = vector.shape_cast %12 : vector<16x16x4xbf16> to vector<256x4xbf16>
    %c0_16 = arith.constant 0 : index
    %c0_17 = arith.constant 0 : index
    %14 = vector.load %arg6[%c0_16, %c0_17] : memref<256x128xf32, #tpu.memory_space<vmem>>, vector<256x128xf32>
    %c1 = arith.constant 1 : index
    %c0_18 = arith.constant 0 : index
    %c0_19 = arith.constant 0 : index
    %15 = vector.load %arg2[%c1, %c0_18, %c0_19] : memref<9x4x128xbf16, #tpu.memory_space<vmem>>, vector<1x4x128xbf16>
    %16 = vector.shape_cast %15 : vector<1x4x128xbf16> to vector<4x128xbf16>
    %cst_20 = arith.constant dense<0.000000e+00> : vector<256x128xf32>
    %17 = tpu.matmul %13, %16, %cst_20 {dimension_numbers = #tpu.dot_dimension_numbers<[1], [0], [0], [1], [0, 0, 1, 1], [], []>} : vector<256x4xbf16>, vector<4x128xbf16>, vector<256x128xf32> -> vector<256x128xf32>
    %18 = arith.addf %14, %17 : vector<256x128xf32>
    %c0_21 = arith.constant 0 : index
    %c0_22 = arith.constant 0 : index
    %19 = vector.load %arg6[%c0_21, %c0_22] : memref<256x128xf32, #tpu.memory_space<vmem>>, vector<256x128xf32>
    tpu.vector_store %arg6[%c0_21, %c0_22], %18 {strides = array<i32>} : memref<256x128xf32, #tpu.memory_space<vmem>>, vector<256x128xf32>,
    %c0_23 = arith.constant 0 : index
    %c0_24 = arith.constant 0 : index
    %c4 = arith.constant 4 : index
    %c0_25 = arith.constant 0 : index
    %20 = vector.load %arg1[%c0_23, %c0_24, %c4, %c0_25] : memref<1x20x20x4xbf16, #tpu.memory_space<vmem>>, vector<1x16x16x4xbf16>
    %21 = vector.shape_cast %20 : vector<1x16x16x4xbf16> to vector<16x16x4xbf16>
    %22 = vector.shape_cast %21 : vector<16x16x4xbf16> to vector<256x4xbf16>
    %c0_26 = arith.constant 0 : index
    %c0_27 = arith.constant 0 : index
    %23 = vector.load %arg6[%c0_26, %c0_27] : memref<256x128xf32, #tpu.memory_space<vmem>>, vector<256x128xf32>
    %c2_28 = arith.constant 2 : index
    %c0_29 = arith.constant 0 : index
    %c0_30 = arith.constant 0 : index
    %24 = vector.load %arg2[%c2_28, %c0_29, %c0_30] : memref<9x4x128xbf16, #tpu.memory_space<vmem>>, vector<1x4x128xbf16>
    %25 = vector.shape_cast %24 : vector<1x4x128xbf16> to vector<4x128xbf16>
    %cst_31 = arith.constant dense<0.000000e+00> : vector<256x128xf32>
    %26 = tpu.matmul %22, %25, %cst_31 {dimension_numbers = #tpu.dot_dimension_numbers<[1], [0], [0], [1], [0, 0, 1, 1], [], []>} : vector<256x4xbf16>, vector<4x128xbf16>, vector<256x128xf32> -> vector<256x128xf32>
    %27 = arith.addf %23, %26 : vector<256x128xf32>
    %c0_32 = arith.constant 0 : index
    %c0_33 = arith.constant 0 : index
    %28 = vector.load %arg6[%c0_32, %c0_33] : memref<256x128xf32, #tpu.memory_space<vmem>>, vector<256x128xf32>
    tpu.vector_store %arg6[%c0_32, %c0_33], %27 {strides = array<i32>} : memref<256x128xf32, #tpu.memory_space<vmem>>, vector<256x128xf32>,
    %c0_34 = arith.constant 0 : index
    %c2_35 = arith.constant 2 : index
    %c0_36 = arith.constant 0 : index
    %c0_37 = arith.constant 0 : index
    %29 = vector.load %arg1[%c0_34, %c2_35, %c0_36, %c0_37] : memref<1x20x20x4xbf16, #tpu.memory_space<vmem>>, vector<1x16x16x4xbf16>
    %30 = vector.shape_cast %29 : vector<1x16x16x4xbf16> to vector<16x16x4xbf16>
    %31 = vector.shape_cast %30 : vector<16x16x4xbf16> to vector<256x4xbf16>
    %c0_38 = arith.constant 0 : index
    %c0_39 = arith.constant 0 : index
    %32 = vector.load %arg6[%c0_38, %c0_39] : memref<256x128xf32, #tpu.memory_space<vmem>>, vector<256x128xf32>
    %c3 = arith.constant 3 : index
    %c0_40 = arith.constant 0 : index
    %c0_41 = arith.constant 0 : index
    %33 = vector.load %arg2[%c3, %c0_40, %c0_41] : memref<9x4x128xbf16, #tpu.memory_space<vmem>>, vector<1x4x128xbf16>
    %34 = vector.shape_cast %33 : vector<1x4x128xbf16> to vector<4x128xbf16>
    %cst_42 = arith.constant dense<0.000000e+00> : vector<256x128xf32>
    %35 = tpu.matmul %31, %34, %cst_42 {dimension_numbers = #tpu.dot_dimension_numbers<[1], [0], [0], [1], [0, 0, 1, 1], [], []>} : vector<256x4xbf16>, vector<4x128xbf16>, vector<256x128xf32> -> vector<256x128xf32>
    %36 = arith.addf %32, %35 : vector<256x128xf32>
    %c0_43 = arith.constant 0 : index
    %c0_44 = arith.constant 0 : index
    %37 = vector.load %arg6[%c0_43, %c0_44] : memref<256x128xf32, #tpu.memory_space<vmem>>, vector<256x128xf32>
    tpu.vector_store %arg6[%c0_43, %c0_44], %36 {strides = array<i32>} : memref<256x128xf32, #tpu.memory_space<vmem>>, vector<256x128xf32>,
    %c0_45 = arith.constant 0 : index
    %c2_46 = arith.constant 2 : index
    %c2_47 = arith.constant 2 : index
    %c0_48 = arith.constant 0 : index
    %38 = vector.load %arg1[%c0_45, %c2_46, %c2_47, %c0_48] : memref<1x20x20x4xbf16, #tpu.memory_space<vmem>>, vector<1x16x16x4xbf16>
    %39 = vector.shape_cast %38 : vector<1x16x16x4xbf16> to vector<16x16x4xbf16>
    %40 = vector.shape_cast %39 : vector<16x16x4xbf16> to vector<256x4xbf16>
    %c0_49 = arith.constant 0 : index
    %c0_50 = arith.constant 0 : index
    %41 = vector.load %arg6[%c0_49, %c0_50] : memref<256x128xf32, #tpu.memory_space<vmem>>, vector<256x128xf32>
    %c4_51 = arith.constant 4 : index
    %c0_52 = arith.constant 0 : index
    %c0_53 = arith.constant 0 : index
    %42 = vector.load %arg2[%c4_51, %c0_52, %c0_53] : memref<9x4x128xbf16, #tpu.memory_space<vmem>>, vector<1x4x128xbf16>
    %43 = vector.shape_cast %42 : vector<1x4x128xbf16> to vector<4x128xbf16>
    %cst_54 = arith.constant dense<0.000000e+00> : vector<256x128xf32>
    %44 = tpu.matmul %40, %43, %cst_54 {dimension_numbers = #tpu.dot_dimension_numbers<[1], [0], [0], [1], [0, 0, 1, 1], [], []>} : vector<256x4xbf16>, vector<4x128xbf16>, vector<256x128xf32> -> vector<256x128xf32>
    %45 = arith.addf %41, %44 : vector<256x128xf32>
    %c0_55 = arith.constant 0 : index
    %c0_56 = arith.constant 0 : index
    %46 = vector.load %arg6[%c0_55, %c0_56] : memref<256x128xf32, #tpu.memory_space<vmem>>, vector<256x128xf32>
    tpu.vector_store %arg6[%c0_55, %c0_56], %45 {strides = array<i32>} : memref<256x128xf32, #tpu.memory_space<vmem>>, vector<256x128xf32>,
    %c0_57 = arith.constant 0 : index
    %c2_58 = arith.constant 2 : index
    %c4_59 = arith.constant 4 : index
    %c0_60 = arith.constant 0 : index
    %47 = vector.load %arg1[%c0_57, %c2_58, %c4_59, %c0_60] : memref<1x20x20x4xbf16, #tpu.memory_space<vmem>>, vector<1x16x16x4xbf16>
    %48 = vector.shape_cast %47 : vector<1x16x16x4xbf16> to vector<16x16x4xbf16>
    %49 = vector.shape_cast %48 : vector<16x16x4xbf16> to vector<256x4xbf16>
    %c0_61 = arith.constant 0 : index
    %c0_62 = arith.constant 0 : index
    %50 = vector.load %arg6[%c0_61, %c0_62] : memref<256x128xf32, #tpu.memory_space<vmem>>, vector<256x128xf32>
    %c5 = arith.constant 5 : index
    %c0_63 = arith.constant 0 : index
    %c0_64 = arith.constant 0 : index
    %51 = vector.load %arg2[%c5, %c0_63, %c0_64] : memref<9x4x128xbf16, #tpu.memory_space<vmem>>, vector<1x4x128xbf16>
    %52 = vector.shape_cast %51 : vector<1x4x128xbf16> to vector<4x128xbf16>
    %cst_65 = arith.constant dense<0.000000e+00> : vector<256x128xf32>
    %53 = tpu.matmul %49, %52, %cst_65 {dimension_numbers = #tpu.dot_dimension_numbers<[1], [0], [0], [1], [0, 0, 1, 1], [], []>} : vector<256x4xbf16>, vector<4x128xbf16>, vector<256x128xf32> -> vector<256x128xf32>
    %54 = arith.addf %50, %53 : vector<256x128xf32>
    %c0_66 = arith.constant 0 : index
    %c0_67 = arith.constant 0 : index
    %55 = vector.load %arg6[%c0_66, %c0_67] : memref<256x128xf32, #tpu.memory_space<vmem>>, vector<256x128xf32>
    tpu.vector_store %arg6[%c0_66, %c0_67], %54 {strides = array<i32>} : memref<256x128xf32, #tpu.memory_space<vmem>>, vector<256x128xf32>,
    %c0_68 = arith.constant 0 : index
    %c4_69 = arith.constant 4 : index
    %c0_70 = arith.constant 0 : index
    %c0_71 = arith.constant 0 : index
    %56 = vector.load %arg1[%c0_68, %c4_69, %c0_70, %c0_71] : memref<1x20x20x4xbf16, #tpu.memory_space<vmem>>, vector<1x16x16x4xbf16>
    %57 = vector.shape_cast %56 : vector<1x16x16x4xbf16> to vector<16x16x4xbf16>
    %58 = vector.shape_cast %57 : vector<16x16x4xbf16> to vector<256x4xbf16>
    %c0_72 = arith.constant 0 : index
    %c0_73 = arith.constant 0 : index
    %59 = vector.load %arg6[%c0_72, %c0_73] : memref<256x128xf32, #tpu.memory_space<vmem>>, vector<256x128xf32>
    %c6 = arith.constant 6 : index
    %c0_74 = arith.constant 0 : index
    %c0_75 = arith.constant 0 : index
    %60 = vector.load %arg2[%c6, %c0_74, %c0_75] : memref<9x4x128xbf16, #tpu.memory_space<vmem>>, vector<1x4x128xbf16>
    %61 = vector.shape_cast %60 : vector<1x4x128xbf16> to vector<4x128xbf16>
    %cst_76 = arith.constant dense<0.000000e+00> : vector<256x128xf32>
    %62 = tpu.matmul %58, %61, %cst_76 {dimension_numbers = #tpu.dot_dimension_numbers<[1], [0], [0], [1], [0, 0, 1, 1], [], []>} : vector<256x4xbf16>, vector<4x128xbf16>, vector<256x128xf32> -> vector<256x128xf32>
    %63 = arith.addf %59, %62 : vector<256x128xf32>
    %c0_77 = arith.constant 0 : index
    %c0_78 = arith.constant 0 : index
    %64 = vector.load %arg6[%c0_77, %c0_78] : memref<256x128xf32, #tpu.memory_space<vmem>>, vector<256x128xf32>
    tpu.vector_store %arg6[%c0_77, %c0_78], %63 {strides = array<i32>} : memref<256x128xf32, #tpu.memory_space<vmem>>, vector<256x128xf32>,
    %c0_79 = arith.constant 0 : index
    %c4_80 = arith.constant 4 : index
    %c2_81 = arith.constant 2 : index
    %c0_82 = arith.constant 0 : index
    %65 = vector.load %arg1[%c0_79, %c4_80, %c2_81, %c0_82] : memref<1x20x20x4xbf16, #tpu.memory_space<vmem>>, vector<1x16x16x4xbf16>
    %66 = vector.shape_cast %65 : vector<1x16x16x4xbf16> to vector<16x16x4xbf16>
    %67 = vector.shape_cast %66 : vector<16x16x4xbf16> to vector<256x4xbf16>
    %c0_83 = arith.constant 0 : index
    %c0_84 = arith.constant 0 : index
    %68 = vector.load %arg6[%c0_83, %c0_84] : memref<256x128xf32, #tpu.memory_space<vmem>>, vector<256x128xf32>
    %c7 = arith.constant 7 : index
    %c0_85 = arith.constant 0 : index
    %c0_86 = arith.constant 0 : index
    %69 = vector.load %arg2[%c7, %c0_85, %c0_86] : memref<9x4x128xbf16, #tpu.memory_space<vmem>>, vector<1x4x128xbf16>
    %70 = vector.shape_cast %69 : vector<1x4x128xbf16> to vector<4x128xbf16>
    %cst_87 = arith.constant dense<0.000000e+00> : vector<256x128xf32>
    %71 = tpu.matmul %67, %70, %cst_87 {dimension_numbers = #tpu.dot_dimension_numbers<[1], [0], [0], [1], [0, 0, 1, 1], [], []>} : vector<256x4xbf16>, vector<4x128xbf16>, vector<256x128xf32> -> vector<256x128xf32>
    %72 = arith.addf %68, %71 : vector<256x128xf32>
    %c0_88 = arith.constant 0 : index
    %c0_89 = arith.constant 0 : index
    %73 = vector.load %arg6[%c0_88, %c0_89] : memref<256x128xf32, #tpu.memory_space<vmem>>, vector<256x128xf32>
    tpu.vector_store %arg6[%c0_88, %c0_89], %72 {strides = array<i32>} : memref<256x128xf32, #tpu.memory_space<vmem>>, vector<256x128xf32>,
    %c0_90 = arith.constant 0 : index
    %c4_91 = arith.constant 4 : index
    %c4_92 = arith.constant 4 : index
    %c0_93 = arith.constant 0 : index
    %74 = vector.load %arg1[%c0_90, %c4_91, %c4_92, %c0_93] : memref<1x20x20x4xbf16, #tpu.memory_space<vmem>>, vector<1x16x16x4xbf16>
    %75 = vector.shape_cast %74 : vector<1x16x16x4xbf16> to vector<16x16x4xbf16>
    %76 = vector.shape_cast %75 : vector<16x16x4xbf16> to vector<256x4xbf16>
    %c0_94 = arith.constant 0 : index
    %c0_95 = arith.constant 0 : index
    %77 = vector.load %arg6[%c0_94, %c0_95] : memref<256x128xf32, #tpu.memory_space<vmem>>, vector<256x128xf32>
    %c8 = arith.constant 8 : index
    %c0_96 = arith.constant 0 : index
    %c0_97 = arith.constant 0 : index
    %78 = vector.load %arg2[%c8, %c0_96, %c0_97] : memref<9x4x128xbf16, #tpu.memory_space<vmem>>, vector<1x4x128xbf16>
    %79 = vector.shape_cast %78 : vector<1x4x128xbf16> to vector<4x128xbf16>
    %cst_98 = arith.constant dense<0.000000e+00> : vector<256x128xf32>
    %80 = tpu.matmul %76, %79, %cst_98 {dimension_numbers = #tpu.dot_dimension_numbers<[1], [0], [0], [1], [0, 0, 1, 1], [], []>} : vector<256x4xbf16>, vector<4x128xbf16>, vector<256x128xf32> -> vector<256x128xf32>
    %81 = arith.addf %77, %80 : vector<256x128xf32>
    %c0_99 = arith.constant 0 : index
    %c0_100 = arith.constant 0 : index
    %82 = vector.load %arg6[%c0_99, %c0_100] : memref<256x128xf32, #tpu.memory_space<vmem>>, vector<256x128xf32>
    tpu.vector_store %arg6[%c0_99, %c0_100], %81 {strides = array<i32>} : memref<256x128xf32, #tpu.memory_space<vmem>>, vector<256x128xf32>,
    %c0_101 = arith.constant 0 : index
    %c0_102 = arith.constant 0 : index
    %83 = vector.load %arg6[%c0_101, %c0_102] : memref<256x128xf32, #tpu.memory_space<vmem>>, vector<256x128xf32>
    %c0_103 = arith.constant 0 : index
    %c0_104 = arith.constant 0 : index
    %84 = vector.load %arg3[%c0_103, %c0_104] : memref<1x128xf32, #tpu.memory_space<vmem>>, vector<1x128xf32>
    %85 = vector.broadcast %84 : vector<1x128xf32> to vector<256x128xf32>
    %86 = arith.mulf %83, %85 : vector<256x128xf32>
    %c0_105 = arith.constant 0 : index
    %c0_106 = arith.constant 0 : index
    %87 = vector.load %arg4[%c0_105, %c0_106] : memref<1x128xf32, #tpu.memory_space<vmem>>, vector<1x128xf32>
    %88 = vector.broadcast %87 : vector<1x128xf32> to vector<256x128xf32>
    %89 = arith.addf %86, %88 : vector<256x128xf32>
    %cst_107 = arith.constant 0.000000e+00 : f32
    %90 = vector.broadcast %cst_107 : f32 to vector<256x128xf32>
    %91 = arith.cmpf ogt, %89, %90 : vector<256x128xf32>
    %cst_108 = arith.constant 0.000000e+00 : f32
    %92 = vector.broadcast %cst_108 : f32 to vector<256x128xf32>
    %93 = arith.minimumf %89, %92 : vector<256x128xf32>
    %94 = math.exp %93 : vector<256x128xf32>
    %cst_109 = arith.constant 1.000000e+00 : f32
    %95 = vector.broadcast %cst_109 : f32 to vector<256x128xf32>
    %96 = arith.subf %94, %95 : vector<256x128xf32>
    %97 = arith.select %91, %89, %96 : vector<256x128xi1>, vector<256x128xf32>
    %98 = vector.shape_cast %97 : vector<256x128xf32> to vector<1x256x128xf32>
    %c0_110 = arith.constant 0 : index
    %c0_111 = arith.constant 0 : index
    %c0_112 = arith.constant 0 : index
    %99 = vector.load %arg5[%c0_110, %c0_111, %c0_112] : memref<1x256x128xf32, #tpu.memory_space<vmem>>, vector<1x256x128xf32>
    tpu.vector_store %arg5[%c0_110, %c0_111, %c0_112], %98 {strides = array<i32>} : memref<1x256x128xf32, #tpu.memory_space<vmem>>, vector<1x256x128xf32>,
    return
  }
  func.func @transform_0(%arg0: i32) -> (i32, i32, i32, i32) {
    %c0_i32 = arith.constant 0 : i32
    %c0_i32_0 = arith.constant 0 : i32
    %c0_i32_1 = arith.constant 0 : i32
    %c0_i32_2 = arith.constant 0 : i32
    return %arg0, %c0_i32, %c0_i32_0, %c0_i32_1 : i32, i32, i32, i32
  }
  func.func @transform_1(%arg0: i32) -> (i32, i32, i32) {
    %c0_i32 = arith.constant 0 : i32
    %c0_i32_0 = arith.constant 0 : i32
    %c0_i32_1 = arith.constant 0 : i32
    %c0_i32_2 = arith.constant 0 : i32
    return %c0_i32, %c0_i32_0, %c0_i32_1 : i32, i32, i32
  }
  func.func @transform_2(%arg0: i32) -> (i32, i32) {
    %c0_i32 = arith.constant 0 : i32
    %c0_i32_0 = arith.constant 0 : i32
    %c0_i32_1 = arith.constant 0 : i32
    return %c0_i32, %c0_i32_0 : i32, i32
  }
  func.func @transform_3(%arg0: i32) -> (i32, i32) {
    %c0_i32 = arith.constant 0 : i32
    %c0_i32_0 = arith.constant 0 : i32
    %c0_i32_1 = arith.constant 0 : i32
    return %c0_i32, %c0_i32_0 : i32, i32
  }
  func.func @transform_4(%arg0: i32) -> (i32, i32, i32) {
    %c0_i32 = arith.constant 0 : i32
    %c0_i32_0 = arith.constant 0 : i32
    %c0_i32_1 = arith.constant 0 : i32
    return %arg0, %c0_i32, %c0_i32_0 : i32, i32, i32
  }
}

</mosaic_0001>

<llo_original>
// kernel: aspp_forward.1
$region0: #{aspp_forward.1}
  #allocation0 [shape = 'u32[]', space=smem, size = 0x4, offset = 0x4, fixed_abs, tag = 'smem constant byte address 0x4 - core index']
  #allocation1 [shape = 'u32[144,128]{1,0:T(1,128)}', space=vmem, size = 0x12000, scoped, tag = 'internal scratch']
  #allocation2 [shape = 'f32[256,128]{1,0:T(8,128)}', space=vmem, size = 0x20000, scoped, tag = 'scratch operand']
  %s0 = inlined_call_operand.vmem [shape: bf16[2,20,20,4], index: 0, kind: input, shape index: {}]
  %s1 = inlined_call_operand.vmem [shape: bf16[9,4,128], index: 1, kind: input, shape index: {}]
  %s2 = inlined_call_operand.vmem [shape: f32[1,128], index: 2, kind: input, shape index: {}]
  %s3 = inlined_call_operand.vmem [shape: f32[1,128], index: 3, kind: input, shape index: {}]
  %s4 = inlined_call_operand.vmem [shape: f32[2,256,128], index: 4, kind: output, shape index: {}]
  %s5 = sld [smem:[#allocation0]]
  $region49: #{aspp_forward.1} parent=0
    _
  %s7 = ssub.s32 1, %s5
  %s8 = scalar_select 0, %s7, %s5
  loop: start=0, step=1, limit=4
  $region2: #{aspp_forward.1} parent=0 // loop_pre_header
    _
  $region3: #{aspp_forward.1} parent=0 // loop_header
    %s10 = sphi 0, %s14
    %p11 = scmp.ge.s32.totalorder %s10, 4
    %s20 = sphi 0, %s22
    %s23 = sphi 0, %s20
    %s24 = sphi 0, %s23
    %s40 = sphi 0, %s24
    %s44 = sphi 0, %s44
    %s46 = sphi 0, %s44
    %s47 = sphi 0, %s46
    %s61 = sphi 0, %s47
    %s65 = sphi 0, %s65
    %s67 = sphi 0, %s65
    %s68 = sphi 0, %s67
    %s82 = sphi 0, %s68
    %s86 = sphi 0, %s86
    %s88 = sphi 0, %s86
    %s89 = sphi 0, %s88
    %s103 = sphi 0, %s89
    %s109 = sphi 0, %s111
    %s112 = sphi 0, %s109
    %s113 = sphi 0, %s112
    %s129 = sphi 0, %s113
  $region4: #{aspp_forward.1} parent=0 // loop_header_branch
    %13 = sbr.rel (%p11) target = $region8
  $region5: #{aspp_forward.1} parent=0 // loop_body
    %s15 = ssub.s32 %s10, 1
    %s16 = ssub.s32 %s10, 2
    %s17 = sadd.s32 %s10, 1
    %s18 = ssub.s32 %s10, %s17
    %p19 = scmp.eq.s32.totalorder %s18, 0
    %s21 = sadd.s32 %s20, 1
    %s22 = scalar_select %p19, %s20, %s21
    %p25 = pneg %p19
    %p26 = scmp.eq.s32.totalorder %s10, 1
    %p27 = por %p25, %p26
    %p28 = scmp.ne.s32.totalorder %s20, %s23
    %p29 = scmp.eq.s32.totalorder %s10, 0
    %p30 = por %p28, %p29
    %p31 = scmp.ne.s32.totalorder %s20, %s23
    %p32 = scmp.eq.s32.totalorder %s15, 1
    %p33 = por %p31, %p32
    %p34 = scmp.ne.s32.totalorder %s23, %s24
    %p35 = scmp.eq.s32.totalorder %s15, 0
    %p36 = por %p34, %p35
    %p37 = scmp.ne.s32.totalorder %s23, %s24
    %p38 = scmp.eq.s32.totalorder %s16, 1
    %p39 = por %p37, %p38
    %p41 = scmp.ne.s32.totalorder %s24, %s40
    %p42 = scmp.eq.s32.totalorder %s16, 0
    %p43 = por %p41, %p42
    %s45 = sadd.s32 %s44, 1
    %p48 = scmp.eq.s32.totalorder %s10, 1
    %p49 = scmp.ne.s32.totalorder %s44, %s46
    %p50 = scmp.eq.s32.totalorder %s10, 0
    %p51 = por %p49, %p50
    %p52 = scmp.ne.s32.totalorder %s44, %s46
    %p53 = scmp.eq.s32.totalorder %s15, 1
    %p54 = por %p52, %p53
    %p55 = scmp.ne.s32.totalorder %s46, %s47
    %p56 = scmp.eq.s32.totalorder %s15, 0
    %p57 = por %p55, %p56
    %p58 = scmp.ne.s32.totalorder %s46, %s47
    %p59 = scmp.eq.s32.totalorder %s16, 1
    %p60 = por %p58, %p59
    %p62 = scmp.ne.s32.totalorder %s47, %s61
    %p63 = scmp.eq.s32.totalorder %s16, 0
    %p64 = por %p62, %p63
    %s66 = sadd.s32 %s65, 1
    %p69 = scmp.eq.s32.totalorder %s10, 1
    %p70 = scmp.ne.s32.totalorder %s65, %s67
    %p71 = scmp.eq.s32.totalorder %s10, 0
    %p72 = por %p70, %p71
    %p73 = scmp.ne.s32.totalorder %s65, %s67
    %p74 = scmp.eq.s32.totalorder %s15, 1
    %p75 = por %p73, %p74
    %p76 = scmp.ne.s32.totalorder %s67, %s68
    %p77 = scmp.eq.s32.totalorder %s15, 0
    %p78 = por %p76, %p77
    %p79 = scmp.ne.s32.totalorder %s67, %s68
    %p80 = scmp.eq.s32.totalorder %s16, 1
    %p81 = por %p79, %p80
    %p83 = scmp.ne.s32.totalorder %s68, %s82
    %p84 = scmp.eq.s32.totalorder %s16, 0
    %p85 = por %p83, %p84
    %s87 = sadd.s32 %s86, 1
    %p90 = scmp.eq.s32.totalorder %s10, 1
    %p91 = scmp.ne.s32.totalorder %s86, %s88
    %p92 = scmp.eq.s32.totalorder %s10, 0
    %p93 = por %p91, %p92
    %p94 = scmp.ne.s32.totalorder %s86, %s88
    %p95 = scmp.eq.s32.totalorder %s15, 1
    %p96 = por %p94, %p95
    %p97 = scmp.ne.s32.totalorder %s88, %s89
    %p98 = scmp.eq.s32.totalorder %s15, 0
    %p99 = por %p97, %p98
    %p100 = scmp.ne.s32.totalorder %s88, %s89
    %p101 = scmp.eq.s32.totalorder %s16, 1
    %p102 = por %p100, %p101
    %p104 = scmp.ne.s32.totalorder %s89, %s103
    %p105 = scmp.eq.s32.totalorder %s16, 0
    %p106 = por %p104, %p105
    %s107 = ssub.s32 %s10, %s17
    %p108 = scmp.eq.s32.totalorder %s107, 0
    %s110 = sadd.s32 %s109, 1
    %s111 = scalar_select %p108, %s109, %s110
    %p114 = pneg %p108
    %p115 = scmp.eq.s32.totalorder %s10, 1
    %p116 = por %p114, %p115
    %p117 = scmp.ne.s32.totalorder %s109, %s112
    %p118 = scmp.eq.s32.totalorder %s10, 0
    %p119 = por %p117, %p118
    %p120 = scmp.ne.s32.totalorder %s109, %s112
    %p121 = scmp.eq.s32.totalorder %s15, 1
    %p122 = por %p120, %p121
    %p123 = scmp.ne.s32.totalorder %s112, %s113
    %p124 = scmp.eq.s32.totalorder %s15, 0
    %p125 = por %p123, %p124
    %p126 = scmp.ne.s32.totalorder %s112, %s113
    %p127 = scmp.eq.s32.totalorder %s16, 1
    %p128 = por %p126, %p127
    %p130 = scmp.ne.s32.totalorder %s113, %s129
    %p131 = scmp.eq.s32.totalorder %s16, 0
    %p132 = por %p130, %p131
    %p133 = scmp.le.s32.totalorder 1, %s10
    %p134 = scmp.lt.s32.totalorder %s10, 3
    %p135 = pnand %p133, %p134
    %p136 = pneg %p135
    // Predicated region
    $region9: #{aspp_forward.1} parent=5 // pred_check
      _
    $region10: #{aspp_forward.1} parent=5 // pred_check_branch
      %138 = sbr.rel (%p135) target = $region12
    $region11: #{aspp_forward.1} parent=5 // pred_region
      %s139 = ssub.s32 %s10, 1
      // Predicated region
      $region13: #{aspp_forward.1} parent=11 // pred_check
        %p140 = pneg %p57
      $region14: #{aspp_forward.1} parent=11 // pred_check_branch
        %142 = sbr.rel (%p140) target = $region16
      $region15: #{aspp_forward.1} parent=11 // pred_region
        _
      $region16: #{aspp_forward.1} parent=11 // pred_fallthru
        _
      // Predicated region
      $region17: #{aspp_forward.1} parent=11 // pred_check
        %p143 = pneg %p78
      $region18: #{aspp_forward.1} parent=11 // pred_check_branch
        %145 = sbr.rel (%p143) target = $region20
      $region19: #{aspp_forward.1} parent=11 // pred_region
        _
      $region20: #{aspp_forward.1} parent=11 // pred_fallthru
        _
      // Predicated region
      $region21: #{aspp_forward.1} parent=11 // pred_check
        %p146 = pneg %p99
      $region22: #{aspp_forward.1} parent=11 // pred_check_branch
        %148 = sbr.rel (%p146) target = $region24
      $region23: #{aspp_forward.1} parent=11 // pred_region
        _
      $region24: #{aspp_forward.1} parent=11 // pred_fallthru
        _
    $region12: #{aspp_forward.1} parent=5 // pred_fallthru
      _
    %p149 = scmp.lt.s32.totalorder %s10, 2
    // Predicated region
    $region25: #{aspp_forward.1} parent=5 // pred_check
      %p150 = pneg %p149
    $region26: #{aspp_forward.1} parent=5 // pred_check_branch
      %152 = sbr.rel (%p150) target = $region28
    $region27: #{aspp_forward.1} parent=5 // pred_region
      // Predicated region
      $region29: #{aspp_forward.1} parent=27 // pred_check
        %p153 = pneg %p30
      $region30: #{aspp_forward.1} parent=27 // pred_check_branch
        %155 = sbr.rel (%p153) target = $region32
      $region31: #{aspp_forward.1} parent=27 // pred_region
        %p156 = scmp.lt.s32.totalorder %s10, 1
        %s157 = scalar_select %p156, %s10, 1
        %s158 = smul.addr %s157, 60
        %s159 = smul.addr %s158, 4
        %s160 = scalar_lea.vmem %s0, %s159
      $region32: #{aspp_forward.1} parent=27 // pred_fallthru
        _
    $region28: #{aspp_forward.1} parent=5 // pred_fallthru
      _
    %p161 = scmp.le.s32.totalorder 1, %s10
    %p162 = scmp.lt.s32.totalorder %s10, 3
    %p163 = pnand %p161, %p162
    %p164 = pneg %p163
    // Predicated region
    $region33: #{aspp_forward.1} parent=5 // pred_check
      _
    $region34: #{aspp_forward.1} parent=5 // pred_check_branch
      %166 = sbr.rel (%p163) target = $region36
    $region35: #{aspp_forward.1} parent=5 // pred_region
      %s167 = ssub.s32 %s10, 1
      %p168 = scmp.lt.s32.totalorder %s15, 1
      %s169 = scalar_select %p168, %s15, 1
      %s170 = smul.addr %s169, 60
      %s171 = smul.addr %s170, 4
      %s172 = scalar_lea.vmem %s0, %s171
      %p173 = pneg %p36
      %p174 = pneg %p33
      %p175 = pneg %p57
      %p176 = pneg %p54
      %p177 = pneg %p78
      %p178 = pneg %p75
      %p179 = pneg %p99
      %p180 = pneg %p96
      %p181 = pneg %p125
      %p182 = pneg %p122
      %p183 = scmp.lt.s32.totalorder %s15, 1
      %s184 = scalar_select %p183, %s15, 1
      %s185 = smul.addr %s184, 32
      %s186 = smul.addr %s185, 8
      %s187 = scalar_lea.vmem %s4, %s186
      %p188 = scmp.lt.s32.totalorder %s15, 1
      %s189 = scalar_select %p188, %s15, 1
      %s190 = smul.addr %s189, 60
      %s191 = smul.addr %s190, 4
      %s192 = scalar_lea.vmem %s0, %s191
      %p193 = scmp.lt.s32.totalorder %s15, 1
      %s194 = scalar_select %p193, %s15, 1
      %s195 = smul.addr %s194, 32
      %s196 = smul.addr %s195, 8
      %s197 = scalar_lea.vmem %s4, %s196
      %199 = vst [vmem:[#allocation2] sm:$0xff] 0.0
      %200 = vst [vmem:[#allocation2 + $0x8] sm:$0xff] 0.0
      %201 = vst [vmem:[#allocation2 + $0x10] sm:$0xff] 0.0
      %202 = vst [vmem:[#allocation2 + $0x18] sm:$0xff] 0.0
      %203 = vst [vmem:[#allocation2 + $0x20] sm:$0xff] 0.0
      %204 = vst [vmem:[#allocation2 + $0x28] sm:$0xff] 0.0
      %205 = vst [vmem:[#allocation2 + $0x30] sm:$0xff] 0.0
      %206 = vst [vmem:[#allocation2 + $0x38] sm:$0xff] 0.0
      %207 = vst [vmem:[#allocation2 + $0x40] sm:$0xff] 0.0
      %208 = vst [vmem:[#allocation2 + $0x48] sm:$0xff] 0.0
      %209 = vst [vmem:[#allocation2 + $0x50] sm:$0xff] 0.0
      %210 = vst [vmem:[#allocation2 + $0x58] sm:$0xff] 0.0
      %211 = vst [vmem:[#allocation2 + $0x60] sm:$0xff] 0.0
      %212 = vst [vmem:[#allocation2 + $0x68] sm:$0xff] 0.0
      %213 = vst [vmem:[#allocation2 + $0x70] sm:$0xff] 0.0
      %214 = vst [vmem:[#allocation2 + $0x78] sm:$0xff] 0.0
      %215 = vst [vmem:[#allocation2 + $0x80] sm:$0xff] 0.0
      %216 = vst [vmem:[#allocation2 + $0x88] sm:$0xff] 0.0
      %217 = vst [vmem:[#allocation2 + $0x90] sm:$0xff] 0.0
      %218 = vst [vmem:[#allocation2 + $0x98] sm:$0xff] 0.0
      %219 = vst [vmem:[#allocation2 + $0xa0] sm:$0xff] 0.0
      %220 = vst [vmem:[#allocation2 + $0xa8] sm:$0xff] 0.0
      %221 = vst [vmem:[#allocation2 + $0xb0] sm:$0xff] 0.0
      %222 = vst [vmem:[#allocation2 + $0xb8] sm:$0xff] 0.0
      %223 = vst [vmem:[#allocation2 + $0xc0] sm:$0xff] 0.0
      %224 = vst [vmem:[#allocation2 + $0xc8] sm:$0xff] 0.0
      %225 = vst [vmem:[#allocation2 + $0xd0] sm:$0xff] 0.0
      %226 = vst [vmem:[#allocation2 + $0xd8] sm:$0xff] 0.0
      %227 = vst [vmem:[#allocation2 + $0xe0] sm:$0xff] 0.0
      %228 = vst [vmem:[#allocation2 + $0xe8] sm:$0xff] 0.0
      %229 = vst [vmem:[#allocation2 + $0xf0] sm:$0xff] 0.0
      %230 = vst [vmem:[#allocation2 + $0xf8] sm:$0xff] 0.0
      %v231 = vld [vmem:[%s192] sm:$0xf]
      %v232 = vld [vmem:[%s192 + $0x4] sm:$0xf]
      %v233 = vld [vmem:[%s192 + $0xc] sm:$0xf]
      %v234 = vld [vmem:[%s192 + $0x10] sm:$0xf]
      %v235 = vld [vmem:[%s192 + $0x18] sm:$0xf]
      %v236 = vld [vmem:[%s192 + $0x1c] sm:$0xf]
      %v237 = vld [vmem:[%s192 + $0x24] sm:$0xf]
      %v238 = vld [vmem:[%s192 + $0x28] sm:$0xf]
      %v239 = vld [vmem:[%s192 + $0x30] sm:$0xf]
      %v240 = vld [vmem:[%s192 + $0x34] sm:$0xf]
      %v241 = vld [vmem:[%s192 + $0x3c] sm:$0xf]
      %v242 = vld [vmem:[%s192 + $0x40] sm:$0xf]
      %v243 = vld [vmem:[%s192 + $0x48] sm:$0xf]
      %v244 = vld [vmem:[%s192 + $0x4c] sm:$0xf]
      %v245 = vld [vmem:[%s192 + $0x54] sm:$0xf]
      %v246 = vld [vmem:[%s192 + $0x58] sm:$0xf]
      %v247 = vld [vmem:[%s192 + $0x60] sm:$0xf]
      %v248 = vld [vmem:[%s192 + $0x64] sm:$0xf]
      %v249 = vld [vmem:[%s192 + $0x6c] sm:$0xf]
      %v250 = vld [vmem:[%s192 + $0x70] sm:$0xf]
      %v251 = vld [vmem:[%s192 + $0x78] sm:$0xf]
      %v252 = vld [vmem:[%s192 + $0x7c] sm:$0xf]
      %v253 = vld [vmem:[%s192 + $0x84] sm:$0xf]
      %v254 = vld [vmem:[%s192 + $0x88] sm:$0xf]
      %v255 = vld [vmem:[%s192 + $0x90] sm:$0xf]
      %v256 = vld [vmem:[%s192 + $0x94] sm:$0xf]
      %v257 = vld [vmem:[%s192 + $0x9c] sm:$0xf]
      %v258 = vld [vmem:[%s192 + $0xa0] sm:$0xf]
      %v259 = vld [vmem:[%s192 + $0xa8] sm:$0xf]
      %v260 = vld [vmem:[%s192 + $0xac] sm:$0xf]
      %v261 = vld [vmem:[%s192 + $0xb4] sm:$0xf]
      %v262 = vld [vmem:[%s192 + $0xb8] sm:$0xf]
      %v263 = vld [vmem:[#allocation2] sm:$0xff]
      %v264 = vld [vmem:[#allocation2 + $0x8] sm:$0xff]
      %v265 = vld [vmem:[#allocation2 + $0x10] sm:$0xff]
      %v266 = vld [vmem:[#allocation2 + $0x18] sm:$0xff]
      %v267 = vld [vmem:[#allocation2 + $0x20] sm:$0xff]
      %v268 = vld [vmem:[#allocation2 + $0x28] sm:$0xff]
      %v269 = vld [vmem:[#allocation2 + $0x30] sm:$0xff]
      %v270 = vld [vmem:[#allocation2 + $0x38] sm:$0xff]
      %v271 = vld [vmem:[#allocation2 + $0x40] sm:$0xff]
      %v272 = vld [vmem:[#allocation2 + $0x48] sm:$0xff]
      %v273 = vld [vmem:[#allocation2 + $0x50] sm:$0xff]
      %v274 = vld [vmem:[#allocation2 + $0x58] sm:$0xff]
      %v275 = vld [vmem:[#allocation2 + $0x60] sm:$0xff]
      %v276 = vld [vmem:[#allocation2 + $0x68] sm:$0xff]
      %v277 = vld [vmem:[#allocation2 + $0x70] sm:$0xff]
      %v278 = vld [vmem:[#allocation2 + $0x78] sm:$0xff]
      %v279 = vld [vmem:[#allocation2 + $0x80] sm:$0xff]
      %v280 = vld [vmem:[#allocation2 + $0x88] sm:$0xff]
      %v281 = vld [vmem:[#allocation2 + $0x90] sm:$0xff]
      %v282 = vld [vmem:[#allocation2 + $0x98] sm:$0xff]
      %v283 = vld [vmem:[#allocation2 + $0xa0] sm:$0xff]
      %v284 = vld [vmem:[#allocation2 + $0xa8] sm:$0xff]
      %v285 = vld [vmem:[#allocation2 + $0xb0] sm:$0xff]
      %v286 = vld [vmem:[#allocation2 + $0xb8] sm:$0xff]
      %v287 = vld [vmem:[#allocation2 + $0xc0] sm:$0xff]
      %v288 = vld [vmem:[#allocation2 + $0xc8] sm:$0xff]
      %v289 = vld [vmem:[#allocation2 + $0xd0] sm:$0xff]
      %v290 = vld [vmem:[#allocation2 + $0xd8] sm:$0xff]
      %v291 = vld [vmem:[#allocation2 + $0xe0] sm:$0xff]
      %v292 = vld [vmem:[#allocation2 + $0xe8] sm:$0xff]
      %v293 = vld [vmem:[#allocation2 + $0xf0] sm:$0xff]
      %v294 = vld [vmem:[#allocation2 + $0xf8] sm:$0xff]
      %v295 = vld [vmem:[%s1] sm:$0x3]
      %v328 = vunpack.c.l.b16 %v231
      %v329 = vunpack.c.l.b16 %v232
      %v330 = vunpack.c.l.b16 %v233
      %v331 = vunpack.c.l.b16 %v234
      %v332 = vunpack.c.l.b16 %v235
      %v333 = vunpack.c.l.b16 %v236
      %v334 = vunpack.c.l.b16 %v237
      %v335 = vunpack.c.l.b16 %v238
      %v336 = vunpack.c.l.b16 %v239
      %v337 = vunpack.c.l.b16 %v240
      %v338 = vunpack.c.l.b16 %v241
      %v339 = vunpack.c.l.b16 %v242
      %v340 = vunpack.c.l.b16 %v243
      %v341 = vunpack.c.l.b16 %v244
      %v342 = vunpack.c.l.b16 %v245
      %v343 = vunpack.c.l.b16 %v246
      %v344 = vunpack.c.l.b16 %v247
      %v345 = vunpack.c.l.b16 %v248
      %v346 = vunpack.c.l.b16 %v249
      %v347 = vunpack.c.l.b16 %v250
      %v348 = vunpack.c.l.b16 %v251
      %v349 = vunpack.c.l.b16 %v252
      %v350 = vunpack.c.l.b16 %v253
      %v351 = vunpack.c.l.b16 %v254
      %v352 = vunpack.c.l.b16 %v255
      %v353 = vunpack.c.l.b16 %v256
      %v354 = vunpack.c.l.b16 %v257
      %v355 = vunpack.c.l.b16 %v258
      %v356 = vunpack.c.l.b16 %v259
      %v357 = vunpack.c.l.b16 %v260
      %v358 = vunpack.c.l.b16 %v261
      %v359 = vunpack.c.l.b16 %v262
      %v360 = vpack.c.b16 %v329, %v328
      %v361 = vpack.c.b16 %v331, %v330
      %v362 = vpack.c.b16 %v333, %v332
      %v363 = vpack.c.b16 %v335, %v334
      %v364 = vpack.c.b16 %v337, %v336
      %v365 = vpack.c.b16 %v339, %v338
      %v366 = vpack.c.b16 %v341, %v340
      %v367 = vpack.c.b16 %v343, %v342
      %v368 = vpack.c.b16 %v345, %v344
      %v369 = vpack.c.b16 %v347, %v346
      %v370 = vpack.c.b16 %v349, %v348
      %v371 = vpack.c.b16 %v351, %v350
      %v372 = vpack.c.b16 %v353, %v352
      %v373 = vpack.c.b16 %v355, %v354
      %v374 = vpack.c.b16 %v357, %v356
      %v375 = vpack.c.b16 %v359, %v358
      %vm376 = vcmask 31744
      %v378 = vsel %vm376, %v360, 0
      %v381 = vsel %vm376, %v361, 0
      %v384 = vsel %vm376, %v362, 0
      %v387 = vsel %vm376, %v363, 0
      %v390 = vsel %vm376, %v364, 0
      %v393 = vsel %vm376, %v365, 0
      %v396 = vsel %vm376, %v366, 0
      %v399 = vsel %vm376, %v367, 0
      %v402 = vsel %vm376, %v368, 0
      %v405 = vsel %vm376, %v369, 0
      %v408 = vsel %vm376, %v370, 0
      %v411 = vsel %vm376, %v371, 0
      %v414 = vsel %vm376, %v372, 0
      %v417 = vsel %vm376, %v373, 0
      %v420 = vsel %vm376, %v374, 0
      %v423 = vsel %vm376, %v375, 0
      %vm425 = vcmask 1041408
      %v427 = vsel %vm425, %v295, 0
      %429 = vmatprep.subr.bf16.mxu0 0
      %430 = vmatpush1.bf16.msra.mxu0 %v427
      %431 = vmatprep.subr.bf16.mxu0 0
      %432 = vmatpush1.bf16.msra.mxu0 0
      %433 = vmatprep.subr.bf16.mxu0 0
      %434 = vmatpush1.bf16.msra.mxu0 0
      %435 = vmatprep.subr.bf16.mxu0 0
      %436 = vmatpush1.bf16.msra.mxu0 0
      %437 = vmatprep.subr.bf16.mxu0 0
      %438 = vmatpush1.bf16.msra.mxu0 0
      %439 = vmatprep.subr.bf16.mxu0 0
      %440 = vmatpush1.bf16.msra.mxu0 0
      %441 = vmatprep.subr.bf16.mxu0 0
      %442 = vmatpush1.bf16.msra.mxu0 0
      %443 = vmatprep.subr.bf16.mxu0 0
      %444 = vmatpush1.bf16.msra.mxu0 0
      %445 = vmatprep.subr.bf16.mxu0 0
      %446 = vmatpush1.bf16.msra.mxu0 0
      %447 = vmatprep.subr.bf16.mxu0 0
      %448 = vmatpush1.bf16.msra.mxu0 0
      %449 = vmatprep.subr.bf16.mxu0 0
      %450 = vmatpush1.bf16.msra.mxu0 0
      %451 = vmatprep.subr.bf16.mxu0 0
      %452 = vmatpush1.bf16.msra.mxu0 0
      %453 = vmatprep.subr.bf16.mxu0 0
      %454 = vmatpush1.bf16.msra.mxu0 0
      %455 = vmatprep.subr.bf16.mxu0 0
      %456 = vmatpush1.bf16.msra.mxu0 0
      %457 = vmatprep.subr.bf16.mxu0 0
      %458 = vmatpush1.bf16.msra.mxu0 0
      %459 = vmatprep.subr.bf16.mxu0 0
      %460 = vmatpush1.bf16.msra.mxu0 0
      %461 = vmatprep.mubr.bf16.mxu0 0
      %462 = vmatmul.mubr.bf16.gmra.mrb[0].mxu0 %v378
      %v463 = vpop.f32.mrb[0].mxu0
      %v464 = vadd.f32 0.0, %v463
      %v465 = vpop.f32.mrb[0].mxu0
      %v466 = vpop.f32.mrb[0].mxu0
      %v467 = vadd.f32 0.0, %v466
      %v468 = vpop.f32.mrb[0].mxu0
      %469 = vmatprep.mubr.bf16.mxu0 0
      %470 = vmatmul.mubr.bf16.gmra.mrb[0].mxu0 %v381
      %v471 = vpop.f32.mrb[0].mxu0
      %v472 = vadd.f32 0.0, %v471
      %v473 = vpop.f32.mrb[0].mxu0
      %v474 = vpop.f32.mrb[0].mxu0
      %v475 = vadd.f32 0.0, %v474
      %v476 = vpop.f32.mrb[0].mxu0
      %477 = vmatprep.mubr.bf16.mxu0 0
      %478 = vmatmul.mubr.bf16.gmra.mrb[0].mxu0 %v384
      %v479 = vpop.f32.mrb[0].mxu0
      %v480 = vadd.f32 0.0, %v479
      %v481 = vpop.f32.mrb[0].mxu0
      %v482 = vpop.f32.mrb[0].mxu0
      %v483 = vadd.f32 0.0, %v482
      %v484 = vpop.f32.mrb[0].mxu0
      %485 = vmatprep.mubr.bf16.mxu0 0
      %486 = vmatmul.mubr.bf16.gmra.mrb[0].mxu0 %v387
      %v487 = vpop.f32.mrb[0].mxu0
      %v488 = vadd.f32 0.0, %v487
      %v489 = vpop.f32.mrb[0].mxu0
      %v490 = vpop.f32.mrb[0].mxu0
      %v491 = vadd.f32 0.0, %v490
      %v492 = vpop.f32.mrb[0].mxu0
      %493 = vmatprep.mubr.bf16.mxu0 0
      %494 = vmatmul.mubr.bf16.gmra.mrb[0].mxu0 %v390
      %v495 = vpop.f32.mrb[0].mxu0
      %v496 = vadd.f32 0.0, %v495
      %v497 = vpop.f32.mrb[0].mxu0
      %v498 = vpop.f32.mrb[0].mxu0
      %v499 = vadd.f32 0.0, %v498
      %v500 = vpop.f32.mrb[0].mxu0
      %501 = vmatprep.mubr.bf16.mxu0 0
      %502 = vmatmul.mubr.bf16.gmra.mrb[0].mxu0 %v393
      %v503 = vpop.f32.mrb[0].mxu0
      %v504 = vadd.f32 0.0, %v503
      %v505 = vpop.f32.mrb[0].mxu0
      %v506 = vpop.f32.mrb[0].mxu0
      %v507 = vadd.f32 0.0, %v506
      %v508 = vpop.f32.mrb[0].mxu0
      %509 = vmatprep.mubr.bf16.mxu0 0
      %510 = vmatmul.mubr.bf16.gmra.mrb[0].mxu0 %v396
      %v511 = vpop.f32.mrb[0].mxu0
      %v512 = vadd.f32 0.0, %v511
      %v513 = vpop.f32.mrb[0].mxu0
      %v514 = vpop.f32.mrb[0].mxu0
      %v515 = vadd.f32 0.0, %v514
      %v516 = vpop.f32.mrb[0].mxu0
      %517 = vmatprep.mubr.bf16.mxu0 0
      %518 = vmatmul.mubr.bf16.gmra.mrb[0].mxu0 %v399
      %v519 = vpop.f32.mrb[0].mxu0
      %v520 = vadd.f32 0.0, %v519
      %v521 = vpop.f32.mrb[0].mxu0
      %v522 = vpop.f32.mrb[0].mxu0
      %v523 = vadd.f32 0.0, %v522
      %v524 = vpop.f32.mrb[0].mxu0
      %525 = vmatprep.mubr.bf16.mxu0 0
      %526 = vmatmul.mubr.bf16.gmra.mrb[0].mxu0 %v402
      %v527 = vpop.f32.mrb[0].mxu0
      %v528 = vadd.f32 0.0, %v527
      %v529 = vpop.f32.mrb[0].mxu0
      %v530 = vpop.f32.mrb[0].mxu0
      %v531 = vadd.f32 0.0, %v530
      %v532 = vpop.f32.mrb[0].mxu0
      %533 = vmatprep.mubr.bf16.mxu0 0
      %534 = vmatmul.mubr.bf16.gmra.mrb[0].mxu0 %v405
      %v535 = vpop.f32.mrb[0].mxu0
      %v536 = vadd.f32 0.0, %v535
      %v537 = vpop.f32.mrb[0].mxu0
      %v538 = vpop.f32.mrb[0].mxu0
      %v539 = vadd.f32 0.0, %v538
      %v540 = vpop.f32.mrb[0].mxu0
      %541 = vmatprep.mubr.bf16.mxu0 0
      %542 = vmatmul.mubr.bf16.gmra.mrb[0].mxu0 %v408
      %v543 = vpop.f32.mrb[0].mxu0
      %v544 = vadd.f32 0.0, %v543
      %v545 = vpop.f32.mrb[0].mxu0
      %v546 = vpop.f32.mrb[0].mxu0
      %v547 = vadd.f32 0.0, %v546
      %v548 = vpop.f32.mrb[0].mxu0
      %549 = vmatprep.mubr.bf16.mxu0 0
      %550 = vmatmul.mubr.bf16.gmra.mrb[0].mxu0 %v411
      %v551 = vpop.f32.mrb[0].mxu0
      %v552 = vadd.f32 0.0, %v551
      %v553 = vpop.f32.mrb[0].mxu0
      %v554 = vpop.f32.mrb[0].mxu0
      %v555 = vadd.f32 0.0, %v554
      %v556 = vpop.f32.mrb[0].mxu0
      %557 = vmatprep.mubr.bf16.mxu0 0
      %558 = vmatmul.mubr.bf16.gmra.mrb[0].mxu0 %v414
      %v559 = vpop.f32.mrb[0].mxu0
      %v560 = vadd.f32 0.0, %v559
      %v561 = vpop.f32.mrb[0].mxu0
      %v562 = vpop.f32.mrb[0].mxu0
      %v563 = vadd.f32 0.0, %v562
      %v564 = vpop.f32.mrb[0].mxu0
      %565 = vmatprep.mubr.bf16.mxu0 0
      %566 = vmatmul.mubr.bf16.gmra.mrb[0].mxu0 %v417
      %v567 = vpop.f32.mrb[0].mxu0
      %v568 = vadd.f32 0.0, %v567
      %v569 = vpop.f32.mrb[0].mxu0
      %v570 = vpop.f32.mrb[0].mxu0
      %v571 = vadd.f32 0.0, %v570
      %v572 = vpop.f32.mrb[0].mxu0
      %573 = vmatprep.mubr.bf16.mxu0 0
      %574 = vmatmul.mubr.bf16.gmra.mrb[0].mxu0 %v420
      %v575 = vpop.f32.mrb[0].mxu0
      %v576 = vadd.f32 0.0, %v575
      %v577 = vpop.f32.mrb[0].mxu0
      %v578 = vpop.f32.mrb[0].mxu0
      %v579 = vadd.f32 0.0, %v578
      %v580 = vpop.f32.mrb[0].mxu0
      %581 = vmatprep.mubr.bf16.mxu0 0
      %582 = vmatmul.mubr.bf16.gmra.mrb[0].mxu0 %v423
      %v583 = vpop.f32.mrb[0].mxu0
      %v584 = vadd.f32 0.0, %v583
      %v585 = vpop.f32.mrb[0].mxu0
      %v586 = vpop.f32.mrb[0].mxu0
      %v587 = vadd.f32 0.0, %v586
      %v588 = vpop.f32.mrb[0].mxu0
      %589 = vdwg.mxu0
      %v590 = vadd.f32 %v263, %v464
      %v591 = vadd.f32 %v264, %v467
      %v592 = vadd.f32 %v265, %v472
      %v593 = vadd.f32 %v266, %v475
      %v594 = vadd.f32 %v267, %v480
      %v595 = vadd.f32 %v268, %v483
      %v596 = vadd.f32 %v269, %v488
      %v597 = vadd.f32 %v270, %v491
      %v598 = vadd.f32 %v271, %v496
      %v599 = vadd.f32 %v272, %v499
      %v600 = vadd.f32 %v273, %v504
      %v601 = vadd.f32 %v274, %v507
      %v602 = vadd.f32 %v275, %v512
      %v603 = vadd.f32 %v276, %v515
      %v604 = vadd.f32 %v277, %v520
      %v605 = vadd.f32 %v278, %v523
      %v606 = vadd.f32 %v279, %v528
      %v607 = vadd.f32 %v280, %v531
      %v608 = vadd.f32 %v281, %v536
      %v609 = vadd.f32 %v282, %v539
      %v610 = vadd.f32 %v283, %v544
      %v611 = vadd.f32 %v284, %v547
      %v612 = vadd.f32 %v285, %v552
      %v613 = vadd.f32 %v286, %v555
      %v614 = vadd.f32 %v287, %v560
      %v615 = vadd.f32 %v288, %v563
      %v616 = vadd.f32 %v289, %v568
      %v617 = vadd.f32 %v290, %v571
      %v618 = vadd.f32 %v291, %v576
      %v619 = vadd.f32 %v292, %v579
      %v620 = vadd.f32 %v293, %v584
      %v621 = vadd.f32 %v294, %v587
      %622 = vst [vmem:[#allocation2] sm:$0xff] %v590
      %623 = vst [vmem:[#allocation2 + $0x8] sm:$0xff] %v591
      %624 = vst [vmem:[#allocation2 + $0x10] sm:$0xff] %v592
      %625 = vst [vmem:[#allocation2 + $0x18] sm:$0xff] %v593
      %626 = vst [vmem:[#allocation2 + $0x20] sm:$0xff] %v594
      %627 = vst [vmem:[#allocation2 + $0x28] sm:$0xff] %v595
      %628 = vst [vmem:[#allocation2 + $0x30] sm:$0xff] %v596
      %629 = vst [vmem:[#allocation2 + $0x38] sm:$0xff] %v597
      %630 = vst [vmem:[#allocation2 + $0x40] sm:$0xff] %v598
      %631 = vst [vmem:[#allocation2 + $0x48] sm:$0xff] %v599
      %632 = vst [vmem:[#allocation2 + $0x50] sm:$0xff] %v600
      %633 = vst [vmem:[#allocation2 + $0x58] sm:$0xff] %v601
      %634 = vst [vmem:[#allocation2 + $0x60] sm:$0xff] %v602
      %635 = vst [vmem:[#allocation2 + $0x68] sm:$0xff] %v603
      %636 = vst [vmem:[#allocation2 + $0x70] sm:$0xff] %v604
      %637 = vst [vmem:[#allocation2 + $0x78] sm:$0xff] %v605
      %638 = vst [vmem:[#allocation2 + $0x80] sm:$0xff] %v606
      %639 = vst [vmem:[#allocation2 + $0x88] sm:$0xff] %v607
      %640 = vst [vmem:[#allocation2 + $0x90] sm:$0xff] %v608
      %641 = vst [vmem:[#allocation2 + $0x98] sm:$0xff] %v609
      %642 = vst [vmem:[#allocation2 + $0xa0] sm:$0xff] %v610
      %643 = vst [vmem:[#allocation2 + $0xa8] sm:$0xff] %v611
      %644 = vst [vmem:[#allocation2 + $0xb0] sm:$0xff] %v612
      %645 = vst [vmem:[#allocation2 + $0xb8] sm:$0xff] %v613
      %646 = vst [vmem:[#allocation2 + $0xc0] sm:$0xff] %v614
      %647 = vst [vmem:[#allocation2 + $0xc8] sm:$0xff] %v615
      %648 = vst [vmem:[#allocation2 + $0xd0] sm:$0xff] %v616
      %649 = vst [vmem:[#allocation2 + $0xd8] sm:$0xff] %v617
      %650 = vst [vmem:[#allocation2 + $0xe0] sm:$0xff] %v618
      %651 = vst [vmem:[#allocation2 + $0xe8] sm:$0xff] %v619
      %652 = vst [vmem:[#allocation2 + $0xf0] sm:$0xff] %v620
      %653 = vst [vmem:[#allocation2 + $0xf8] sm:$0xff] %v621
      %v654 = vld [vmem:[%s192] sm:$0xe]
      %v655 = vld [vmem:[%s192 + $0x4] sm:$0xf]
      %v656 = vld [vmem:[%s192 + $0x8] sm:$0x1]
      %v657 = vld [vmem:[%s192 + $0xc] sm:$0xe]
      %v658 = vld [vmem:[%s192 + $0x10] sm:$0xf]
      %v659 = vld [vmem:[%s192 + $0x14] sm:$0x1]
      %v660 = vld [vmem:[%s192 + $0x18] sm:$0xe]
      %v661 = vld [vmem:[%s192 + $0x1c] sm:$0xf]
      %v662 = vld [vmem:[%s192 + $0x20] sm:$0x1]
      %v663 = vld [vmem:[%s192 + $0x24] sm:$0xe]
      %v664 = vld [vmem:[%s192 + $0x28] sm:$0xf]
      %v665 = vld [vmem:[%s192 + $0x2c] sm:$0x1]
      %v666 = vld [vmem:[%s192 + $0x30] sm:$0xe]
      %v667 = vld [vmem:[%s192 + $0x34] sm:$0xf]
      %v668 = vld [vmem:[%s192 + $0x38] sm:$0x1]
      %v669 = vld [vmem:[%s192 + $0x3c] sm:$0xe]
      %v670 = vld [vmem:[%s192 + $0x40] sm:$0xf]
      %v671 = vld [vmem:[%s192 + $0x44] sm:$0x1]
      %v672 = vld [vmem:[%s192 + $0x48] sm:$0xe]
      %v673 = vld [vmem:[%s192 + $0x4c] sm:$0xf]
      %v674 = vld [vmem:[%s192 + $0x50] sm:$0x1]
      %v675 = vld [vmem:[%s192 + $0x54] sm:$0xe]
      %v676 = vld [vmem:[%s192 + $0x58] sm:$0xf]
      %v677 = vld [vmem:[%s192 + $0x5c] sm:$0x1]
      %v678 = vld [vmem:[%s192 + $0x60] sm:$0xe]
      %v679 = vld [vmem:[%s192 + $0x64] sm:$0xf]
      %v680 = vld [vmem:[%s192 + $0x68] sm:$0x1]
      %v681 = vld [vmem:[%s192 + $0x6c] sm:$0xe]
      %v682 = vld [vmem:[%s192 + $0x70] sm:$0xf]
      %v683 = vld [vmem:[%s192 + $0x74] sm:$0x1]
      %v684 = vld [vmem:[%s192 + $0x78] sm:$0xe]
      %v685 = vld [vmem:[%s192 + $0x7c] sm:$0xf]
      %v686 = vld [vmem:[%s192 + $0x80] sm:$0x1]
      %v687 = vld [vmem:[%s192 + $0x84] sm:$0xe]
      %v688 = vld [vmem:[%s192 + $0x88] sm:$0xf]
      %v689 = vld [vmem:[%s192 + $0x8c] sm:$0x1]
      %v690 = vld [vmem:[%s192 + $0x90] sm:$0xe]
      %v691 = vld [vmem:[%s192 + $0x94] sm:$0xf]
      %v692 = vld [vmem:[%s192 + $0x98] sm:$0x1]
      %v693 = vld [vmem:[%s192 + $0x9c] sm:$0xe]
      %v694 = vld [vmem:[%s192 + $0xa0] sm:$0xf]
      %v695 = vld [vmem:[%s192 + $0xa4] sm:$0x1]
      %v696 = vld [vmem:[%s192 + $0xa8] sm:$0xe]
      %v697 = vld [vmem:[%s192 + $0xac] sm:$0xf]
      %v698 = vld [vmem:[%s192 + $0xb0] sm:$0x1]
      %v699 = vld [vmem:[%s192 + $0xb4] sm:$0xe]
      %v700 = vld [vmem:[%s192 + $0xb8] sm:$0xf]
      %v701 = vld [vmem:[%s192 + $0xbc] sm:$0x1]
      %vm750 = vcmask 1042432
      %vm751 = vcmask 1046532
      %vm752 = vmor %vm750, %vm751
      %v753 = vrot.slane %v654, 5
      %v754 = vrot.slane %v753, 4
      %v755 = vrot.slane %v655, 5
      %v756 = vsel %vm752, %v754, %v755
      %v757 = vrot.slane %v755, 4
      %v758 = vrot.slane %v656, 5
      %v759 = vsel %vm752, %v757, %v758
      %v760 = vrot.slane %v657, 5
      %v761 = vrot.slane %v760, 4
      %v762 = vrot.slane %v658, 5
      %v763 = vsel %vm752, %v761, %v762
      %v764 = vrot.slane %v762, 4
      %v765 = vrot.slane %v659, 5
      %v766 = vsel %vm752, %v764, %v765
      %v767 = vrot.slane %v660, 5
      %v768 = vrot.slane %v767, 4
      %v769 = vrot.slane %v661, 5
      %v770 = vsel %vm752, %v768, %v769
      %v771 = vrot.slane %v769, 4
      %v772 = vrot.slane %v662, 5
      %v773 = vsel %vm752, %v771, %v772
      %v774 = vrot.slane %v663, 5
      %v775 = vrot.slane %v774, 4
      %v776 = vrot.slane %v664, 5
      %v777 = vsel %vm752, %v775, %v776
      %v778 = vrot.slane %v776, 4
      %v779 = vrot.slane %v665, 5
      %v780 = vsel %vm752, %v778, %v779
      %v781 = vrot.slane %v666, 5
      %v782 = vrot.slane %v781, 4
      %v783 = vrot.slane %v667, 5
      %v784 = vsel %vm752, %v782, %v783
      %v785 = vrot.slane %v783, 4
      %v786 = vrot.slane %v668, 5
      %v787 = vsel %vm752, %v785, %v786
      %v788 = vrot.slane %v669, 5
      %v789 = vrot.slane %v788, 4
      %v790 = vrot.slane %v670, 5
      %v791 = vsel %vm752, %v789, %v790
      %v792 = vrot.slane %v790, 4
      %v793 = vrot.slane %v671, 5
      %v794 = vsel %vm752, %v792, %v793
      %v795 = vrot.slane %v672, 5
      %v796 = vrot.slane %v795, 4
      %v797 = vrot.slane %v673, 5
      %v798 = vsel %vm752, %v796, %v797
      %v799 = vrot.slane %v797, 4
      %v800 = vrot.slane %v674, 5
      %v801 = vsel %vm752, %v799, %v800
      %v802 = vrot.slane %v675, 5
      %v803 = vrot.slane %v802, 4
      %v804 = vrot.slane %v676, 5
      %v805 = vsel %vm752, %v803, %v804
      %v806 = vrot.slane %v804, 4
      %v807 = vrot.slane %v677, 5
      %v808 = vsel %vm752, %v806, %v807
      %v809 = vrot.slane %v678, 5
      %v810 = vrot.slane %v809, 4
      %v811 = vrot.slane %v679, 5
      %v812 = vsel %vm752, %v810, %v811
      %v813 = vrot.slane %v811, 4
      %v814 = vrot.slane %v680, 5
      %v815 = vsel %vm752, %v813, %v814
      %v816 = vrot.slane %v681, 5
      %v817 = vrot.slane %v816, 4
      %v818 = vrot.slane %v682, 5
      %v819 = vsel %vm752, %v817, %v818
      %v820 = vrot.slane %v818, 4
      %v821 = vrot.slane %v683, 5
      %v822 = vsel %vm752, %v820, %v821
      %v823 = vrot.slane %v684, 5
      %v824 = vrot.slane %v823, 4
      %v825 = vrot.slane %v685, 5
      %v826 = vsel %vm752, %v824, %v825
      %v827 = vrot.slane %v825, 4
      %v828 = vrot.slane %v686, 5
      %v829 = vsel %vm752, %v827, %v828
      %v830 = vrot.slane %v687, 5
      %v831 = vrot.slane %v830, 4
      %v832 = vrot.slane %v688, 5
      %v833 = vsel %vm752, %v831, %v832
      %v834 = vrot.slane %v832, 4
      %v835 = vrot.slane %v689, 5
      %v836 = vsel %vm752, %v834, %v835
      %v837 = vrot.slane %v690, 5
      %v838 = vrot.slane %v837, 4
      %v839 = vrot.slane %v691, 5
      %v840 = vsel %vm752, %v838, %v839
      %v841 = vrot.slane %v839, 4
      %v842 = vrot.slane %v692, 5
      %v843 = vsel %vm752, %v841, %v842
      %v844 = vrot.slane %v693, 5
      %v845 = vrot.slane %v844, 4
      %v846 = vrot.slane %v694, 5
      %v847 = vsel %vm752, %v845, %v846
      %v848 = vrot.slane %v846, 4
      %v849 = vrot.slane %v695, 5
      %v850 = vsel %vm752, %v848, %v849
      %v851 = vrot.slane %v696, 5
      %v852 = vrot.slane %v851, 4
      %v853 = vrot.slane %v697, 5
      %v854 = vsel %vm752, %v852, %v853
      %v855 = vrot.slane %v853, 4
      %v856 = vrot.slane %v698, 5
      %v857 = vsel %vm752, %v855, %v856
      %v858 = vrot.slane %v699, 5
      %v859 = vrot.slane %v858, 4
      %v860 = vrot.slane %v700, 5
      %v861 = vsel %vm752, %v859, %v860
      %v862 = vrot.slane %v860, 4
      %v863 = vrot.slane %v701, 5
      %v864 = vsel %vm752, %v862, %v863
      %v865 = vld [vmem:[#allocation2] sm:$0xff]
      %v866 = vld [vmem:[#allocation2 + $0x8] sm:$0xff]
      %v867 = vld [vmem:[#allocation2 + $0x10] sm:$0xff]
      %v868 = vld [vmem:[#allocation2 + $0x18] sm:$0xff]
      %v869 = vld [vmem:[#allocation2 + $0x20] sm:$0xff]
      %v870 = vld [vmem:[#allocation2 + $0x28] sm:$0xff]
      %v871 = vld [vmem:[#allocation2 + $0x30] sm:$0xff]
      %v872 = vld [vmem:[#allocation2 + $0x38] sm:$0xff]
      %v873 = vld [vmem:[#allocation2 + $0x40] sm:$0xff]
      %v874 = vld [vmem:[#allocation2 + $0x48] sm:$0xff]
      %v875 = vld [vmem:[#allocation2 + $0x50] sm:$0xff]
      %v876 = vld [vmem:[#allocation2 + $0x58] sm:$0xff]
      %v877 = vld [vmem:[#allocation2 + $0x60] sm:$0xff]
      %v878 = vld [vmem:[#allocation2 + $0x68] sm:$0xff]
      %v879 = vld [vmem:[#allocation2 + $0x70] sm:$0xff]
      %v880 = vld [vmem:[#allocation2 + $0x78] sm:$0xff]
      %v881 = vld [vmem:[#allocation2 + $0x80] sm:$0xff]
      %v882 = vld [vmem:[#allocation2 + $0x88] sm:$0xff]
      %v883 = vld [vmem:[#allocation2 + $0x90] sm:$0xff]
      %v884 = vld [vmem:[#allocation2 + $0x98] sm:$0xff]
      %v885 = vld [vmem:[#allocation2 + $0xa0] sm:$0xff]
      %v886 = vld [vmem:[#allocation2 + $0xa8] sm:$0xff]
      %v887 = vld [vmem:[#allocation2 + $0xb0] sm:$0xff]
      %v888 = vld [vmem:[#allocation2 + $0xb8] sm:$0xff]
      %v889 = vld [vmem:[#allocation2 + $0xc0] sm:$0xff]
      %v890 = vld [vmem:[#allocation2 + $0xc8] sm:$0xff]
      %v891 = vld [vmem:[#allocation2 + $0xd0] sm:$0xff]
      %v892 = vld [vmem:[#allocation2 + $0xd8] sm:$0xff]
      %v893 = vld [vmem:[#allocation2 + $0xe0] sm:$0xff]
      %v894 = vld [vmem:[#allocation2 + $0xe8] sm:$0xff]
      %v895 = vld [vmem:[#allocation2 + $0xf0] sm:$0xff]
      %v896 = vld [vmem:[#allocation2 + $0xf8] sm:$0xff]
      %s897 = scalar_lea.vmem %s1, 2
      %v898 = vld [vmem:[%s897] sm:$0x3]
      %v899 = vunpack.c.l.b16 %v756
      %v900 = vunpack.c.l.b16 %v759
      %v901 = vunpack.c.l.b16 %v763
      %v902 = vunpack.c.l.b16 %v766
      %v903 = vunpack.c.l.b16 %v770
      %v904 = vunpack.c.l.b16 %v773
      %v905 = vunpack.c.l.b16 %v777
      %v906 = vunpack.c.l.b16 %v780
      %v907 = vunpack.c.l.b16 %v784
      %v908 = vunpack.c.l.b16 %v787
      %v909 = vunpack.c.l.b16 %v791
      %v910 = vunpack.c.l.b16 %v794
      %v911 = vunpack.c.l.b16 %v798
      %v912 = vunpack.c.l.b16 %v801
      %v913 = vunpack.c.l.b16 %v805
      %v914 = vunpack.c.l.b16 %v808
      %v915 = vunpack.c.l.b16 %v812
      %v916 = vunpack.c.l.b16 %v815
      %v917 = vunpack.c.l.b16 %v819
      %v918 = vunpack.c.l.b16 %v822
      %v919 = vunpack.c.l.b16 %v826
      %v920 = vunpack.c.l.b16 %v829
      %v921 = vunpack.c.l.b16 %v833
      %v922 = vunpack.c.l.b16 %v836
      %v923 = vunpack.c.l.b16 %v840
      %v924 = vunpack.c.l.b16 %v843
      %v925 = vunpack.c.l.b16 %v847
      %v926 = vunpack.c.l.b16 %v850
      %v927 = vunpack.c.l.b16 %v854
      %v928 = vunpack.c.l.b16 %v857
      %v929 = vunpack.c.l.b16 %v861
      %v930 = vunpack.c.l.b16 %v864
      %v931 = vpack.c.b16 %v900, %v899
      %v932 = vpack.c.b16 %v902, %v901
      %v933 = vpack.c.b16 %v904, %v903
      %v934 = vpack.c.b16 %v906, %v905
      %v935 = vpack.c.b16 %v908, %v907
      %v936 = vpack.c.b16 %v910, %v909
      %v937 = vpack.c.b16 %v912, %v911
      %v938 = vpack.c.b16 %v914, %v913
      %v939 = vpack.c.b16 %v916, %v915
      %v940 = vpack.c.b16 %v918, %v917
      %v941 = vpack.c.b16 %v920, %v919
      %v942 = vpack.c.b16 %v922, %v921
      %v943 = vpack.c.b16 %v924, %v923
      %v944 = vpack.c.b16 %v926, %v925
      %v945 = vpack.c.b16 %v928, %v927
      %v946 = vpack.c.b16 %v930, %v929
      %v948 = vsel %vm376, %v931, 0
      %v951 = vsel %vm376, %v932, 0
      %v954 = vsel %vm376, %v933, 0
      %v957 = vsel %vm376, %v934, 0
      %v960 = vsel %vm376, %v935, 0
      %v963 = vsel %vm376, %v936, 0
      %v966 = vsel %vm376, %v937, 0
      %v969 = vsel %vm376, %v938, 0
      %v972 = vsel %vm376, %v939, 0
      %v975 = vsel %vm376, %v940, 0
      %v978 = vsel %vm376, %v941, 0
      %v981 = vsel %vm376, %v942, 0
      %v984 = vsel %vm376, %v943, 0
      %v987 = vsel %vm376, %v944, 0
      %v990 = vsel %vm376, %v945, 0
      %v993 = vsel %vm376, %v946, 0
      %v996 = vsel %vm425, %v898, 0
      %998 = vmatprep.subr.bf16.mxu0 0
      %999 = vmatpush1.bf16.msra.mxu0 %v996
      %1000 = vmatprep.subr.bf16.mxu0 0
      %1001 = vmatpush1.bf16.msra.mxu0 0
      %1002 = vmatprep.subr.bf16.mxu0 0
      %1003 = vmatpush1.bf16.msra.mxu0 0
      %1004 = vmatprep.subr.bf16.mxu0 0
      %1005 = vmatpush1.bf16.msra.mxu0 0
      %1006 = vmatprep.subr.bf16.mxu0 0
      %1007 = vmatpush1.bf16.msra.mxu0 0
      %1008 = vmatprep.subr.bf16.mxu0 0
      %1009 = vmatpush1.bf16.msra.mxu0 0
      %1010 = vmatprep.subr.bf16.mxu0 0
      %1011 = vmatpush1.bf16.msra.mxu0 0
      %1012 = vmatprep.subr.bf16.mxu0 0
      %1013 = vmatpush1.bf16.msra.mxu0 0
      %1014 = vmatprep.subr.bf16.mxu0 0
      %1015 = vmatpush1.bf16.msra.mxu0 0
      %1016 = vmatprep.subr.bf16.mxu0 0
      %1017 = vmatpush1.bf16.msra.mxu0 0
      %1018 = vmatprep.subr.bf16.mxu0 0
      %1019 = vmatpush1.bf16.msra.mxu0 0
      %1020 = vmatprep.subr.bf16.mxu0 0
      %1021 = vmatpush1.bf16.msra.mxu0 0
      %1022 = vmatprep.subr.bf16.mxu0 0
      %1023 = vmatpush1.bf16.msra.mxu0 0
      %1024 = vmatprep.subr.bf16.mxu0 0
      %1025 = vmatpush1.bf16.msra.mxu0 0
      %1026 = vmatprep.subr.bf16.mxu0 0
      %1027 = vmatpush1.bf16.msra.mxu0 0
      %1028 = vmatprep.subr.bf16.mxu0 0
      %1029 = vmatpush1.bf16.msra.mxu0 0
      %1030 = vmatprep.mubr.bf16.mxu0 0
      %1031 = vmatmul.mubr.bf16.gmra.mrb[0].mxu0 %v948
      %v1032 = vpop.f32.mrb[0].mxu0
      %v1033 = vadd.f32 0.0, %v1032
      %v1034 = vpop.f32.mrb[0].mxu0
      %v1035 = vpop.f32.mrb[0].mxu0
      %v1036 = vadd.f32 0.0, %v1035
      %v1037 = vpop.f32.mrb[0].mxu0
      %1038 = vmatprep.mubr.bf16.mxu0 0
      %1039 = vmatmul.mubr.bf16.gmra.mrb[0].mxu0 %v951
      %v1040 = vpop.f32.mrb[0].mxu0
      %v1041 = vadd.f32 0.0, %v1040
      %v1042 = vpop.f32.mrb[0].mxu0
      %v1043 = vpop.f32.mrb[0].mxu0
      %v1044 = vadd.f32 0.0, %v1043
      %v1045 = vpop.f32.mrb[0].mxu0
      %1046 = vmatprep.mubr.bf16.mxu0 0
      %1047 = vmatmul.mubr.bf16.gmra.mrb[0].mxu0 %v954
      %v1048 = vpop.f32.mrb[0].mxu0
      %v1049 = vadd.f32 0.0, %v1048
      %v1050 = vpop.f32.mrb[0].mxu0
      %v1051 = vpop.f32.mrb[0].mxu0
      %v1052 = vadd.f32 0.0, %v1051
      %v1053 = vpop.f32.mrb[0].mxu0
      %1054 = vmatprep.mubr.bf16.mxu0 0
      %1055 = vmatmul.mubr.bf16.gmra.mrb[0].mxu0 %v957
      %v1056 = vpop.f32.mrb[0].mxu0
      %v1057 = vadd.f32 0.0, %v1056
      %v1058 = vpop.f32.mrb[0].mxu0
      %v1059 = vpop.f32.mrb[0].mxu0
      %v1060 = vadd.f32 0.0, %v1059
      %v1061 = vpop.f32.mrb[0].mxu0
      %1062 = vmatprep.mubr.bf16.mxu0 0
      %1063 = vmatmul.mubr.bf16.gmra.mrb[0].mxu0 %v960
      %v1064 = vpop.f32.mrb[0].mxu0
      %v1065 = vadd.f32 0.0, %v1064
      %v1066 = vpop.f32.mrb[0].mxu0
      %v1067 = vpop.f32.mrb[0].mxu0
      %v1068 = vadd.f32 0.0, %v1067
      %v1069 = vpop.f32.mrb[0].mxu0
      %1070 = vmatprep.mubr.bf16.mxu0 0
      %1071 = vmatmul.mubr.bf16.gmra.mrb[0].mxu0 %v963
      %v1072 = vpop.f32.mrb[0].mxu0
      %v1073 = vadd.f32 0.0, %v1072
      %v1074 = vpop.f32.mrb[0].mxu0
      %v1075 = vpop.f32.mrb[0].mxu0
      %v1076 = vadd.f32 0.0, %v1075
      %v1077 = vpop.f32.mrb[0].mxu0
      %1078 = vmatprep.mubr.bf16.mxu0 0
      %1079 = vmatmul.mubr.bf16.gmra.mrb[0].mxu0 %v966
      %v1080 = vpop.f32.mrb[0].mxu0
      %v1081 = vadd.f32 0.0, %v1080
      %v1082 = vpop.f32.mrb[0].mxu0
      %v1083 = vpop.f32.mrb[0].mxu0
      %v1084 = vadd.f32 0.0, %v1083
      %v1085 = vpop.f32.mrb[0].mxu0
      %1086 = vmatprep.mubr.bf16.mxu0 0
      %1087 = vmatmul.mubr.bf16.gmra.mrb[0].mxu0 %v969
      %v1088 = vpop.f32.mrb[0].mxu0
      %v1089 = vadd.f32 0.0, %v1088
      %v1090 = vpop.f32.mrb[0].mxu0
      %v1091 = vpop.f32.mrb[0].mxu0
      %v1092 = vadd.f32 0.0, %v1091
      %v1093 = vpop.f32.mrb[0].mxu0
      %1094 = vmatprep.mubr.bf16.mxu0 0
      %1095 = vmatmul.mubr.bf16.gmra.mrb[0].mxu0 %v972
      %v1096 = vpop.f32.mrb[0].mxu0
      %v1097 = vadd.f32 0.0, %v1096
      %v1098 = vpop.f32.mrb[0].mxu0
      %v1099 = vpop.f32.mrb[0].mxu0
      %v1100 = vadd.f32 0.0, %v1099
      %v1101 = vpop.f32.mrb[0].mxu0
      %1102 = vmatprep.mubr.bf16.mxu0 0
      %1103 = vmatmul.mubr.bf16.gmra.mrb[0].mxu0 %v975
      %v1104 = vpop.f32.mrb[0].mxu0
      %v1105 = vadd.f32 0.0, %v1104
      %v1106 = vpop.f32.mrb[0].mxu0
      %v1107 = vpop.f32.mrb[0].mxu0
      %v1108 = vadd.f32 0.0, %v1107
      %v1109 = vpop.f32.mrb[0].mxu0
      %1110 = vmatprep.mubr.bf16.mxu0 0
      %1111 = vmatmul.mubr.bf16.gmra.mrb[0].mxu0 %v978
      %v1112 = vpop.f32.mrb[0].mxu0
      %v1113 = vadd.f32 0.0, %v1112
      %v1114 = vpop.f32.mrb[0].mxu0
      %v1115 = vpop.f32.mrb[0].mxu0
      %v1116 = vadd.f32 0.0, %v1115
      %v1117 = vpop.f32.mrb[0].mxu0
      %1118 = vmatprep.mubr.bf16.mxu0 0
      %1119 = vmatmul.mubr.bf16.gmra.mrb[0].mxu0 %v981
      %v1120 = vpop.f32.mrb[0].mxu0
      %v1121 = vadd.f32 0.0, %v1120
      %v1122 = vpop.f32.mrb[0].mxu0
      %v1123 = vpop.f32.mrb[0].mxu0
      %v1124 = vadd.f32 0.0, %v1123
      %v1125 = vpop.f32.mrb[0].mxu0
      %1126 = vmatprep.mubr.bf16.mxu0 0
      %1127 = vmatmul.mubr.bf16.gmra.mrb[0].mxu0 %v984
      %v1128 = vpop.f32.mrb[0].mxu0
      %v1129 = vadd.f32 0.0, %v1128
      %v1130 = vpop.f32.mrb[0].mxu0
      %v1131 = vpop.f32.mrb[0].mxu0
      %v1132 = vadd.f32 0.0, %v1131
      %v1133 = vpop.f32.mrb[0].mxu0
      %1134 = vmatprep.mubr.bf16.mxu0 0
      %1135 = vmatmul.mubr.bf16.gmra.mrb[0].mxu0 %v987
      %v1136 = vpop.f32.mrb[0].mxu0
      %v1137 = vadd.f32 0.0, %v1136
      %v1138 = vpop.f32.mrb[0].mxu0
      %v1139 = vpop.f32.mrb[0].mxu0
      %v1140 = vadd.f32 0.0, %v1139
      %v1141 = vpop.f32.mrb[0].mxu0
      %1142 = vmatprep.mubr.bf16.mxu0 0
      %1143 = vmatmul.mubr.bf16.gmra.mrb[0].mxu0 %v990
      %v1144 = vpop.f32.mrb[0].mxu0
      %v1145 = vadd.f32 0.0, %v1144
      %v1146 = vpop.f32.mrb[0].mxu0
      %v1147 = vpop.f32.mrb[0].mxu0
      %v1148 = vadd.f32 0.0, %v1147
      %v1149 = vpop.f32.mrb[0].mxu0
      %1150 = vmatprep.mubr.bf16.mxu0 0
      %1151 = vmatmul.mubr.bf16.gmra.mrb[0].mxu0 %v993
      %v1152 = vpop.f32.mrb[0].mxu0
      %v1153 = vadd.f32 0.0, %v1152
      %v1154 = vpop.f32.mrb[0].mxu0
      %v1155 = vpop.f32.mrb[0].mxu0
      %v1156 = vadd.f32 0.0, %v1155
      %v1157 = vpop.f32.mrb[0].mxu0
      %1158 = vdwg.mxu0
      %v1159 = vadd.f32 %v865, %v1033
      %v1160 = vadd.f32 %v866, %v1036
      %v1161 = vadd.f32 %v867, %v1041
      %v1162 = vadd.f32 %v868, %v1044
      %v1163 = vadd.f32 %v869, %v1049
      %v1164 = vadd.f32 %v870, %v1052
      %v1165 = vadd.f32 %v871, %v1057
      %v1166 = vadd.f32 %v872, %v1060
      %v1167 = vadd.f32 %v873, %v1065
      %v1168 = vadd.f32 %v874, %v1068
      %v1169 = vadd.f32 %v875, %v1073
      %v1170 = vadd.f32 %v876, %v1076
      %v1171 = vadd.f32 %v877, %v1081
      %v1172 = vadd.f32 %v878, %v1084
      %v1173 = vadd.f32 %v879, %v1089
      %v1174 = vadd.f32 %v880, %v1092
      %v1175 = vadd.f32 %v881, %v1097
      %v1176 = vadd.f32 %v882, %v1100
      %v1177 = vadd.f32 %v883, %v1105
      %v1178 = vadd.f32 %v884, %v1108
      %v1179 = vadd.f32 %v885, %v1113
      %v1180 = vadd.f32 %v886, %v1116
      %v1181 = vadd.f32 %v887, %v1121
      %v1182 = vadd.f32 %v888, %v1124
      %v1183 = vadd.f32 %v889, %v1129
      %v1184 = vadd.f32 %v890, %v1132
      %v1185 = vadd.f32 %v891, %v1137
      %v1186 = vadd.f32 %v892, %v1140
      %v1187 = vadd.f32 %v893, %v1145
      %v1188 = vadd.f32 %v894, %v1148
      %v1189 = vadd.f32 %v895, %v1153
      %v1190 = vadd.f32 %v896, %v1156
      %1191 = vst [vmem:[#allocation2] sm:$0xff] %v1159
      %1192 = vst [vmem:[#allocation2 + $0x8] sm:$0xff] %v1160
      %1193 = vst [vmem:[#allocation2 + $0x10] sm:$0xff] %v1161
      %1194 = vst [vmem:[#allocation2 + $0x18] sm:$0xff] %v1162
      %1195 = vst [vmem:[#allocation2 + $0x20] sm:$0xff] %v1163
      %1196 = vst [vmem:[#allocation2 + $0x28] sm:$0xff] %v1164
      %1197 = vst [vmem:[#allocation2 + $0x30] sm:$0xff] %v1165
      %1198 = vst [vmem:[#allocation2 + $0x38] sm:$0xff] %v1166
      %1199 = vst [vmem:[#allocation2 + $0x40] sm:$0xff] %v1167
      %1200 = vst [vmem:[#allocation2 + $0x48] sm:$0xff] %v1168
      %1201 = vst [vmem:[#allocation2 + $0x50] sm:$0xff] %v1169
      %1202 = vst [vmem:[#allocation2 + $0x58] sm:$0xff] %v1170
      %1203 = vst [vmem:[#allocation2 + $0x60] sm:$0xff] %v1171
      %1204 = vst [vmem:[#allocation2 + $0x68] sm:$0xff] %v1172
      %1205 = vst [vmem:[#allocation2 + $0x70] sm:$0xff] %v1173
      %1206 = vst [vmem:[#allocation2 + $0x78] sm:$0xff] %v1174
      %1207 = vst [vmem:[#allocation2 + $0x80] sm:$0xff] %v1175
      %1208 = vst [vmem:[#allocation2 + $0x88] sm:$0xff] %v1176
      %1209 = vst [vmem:[#allocation2 + $0x90] sm:$0xff] %v1177
      %1210 = vst [vmem:[#allocation2 + $0x98] sm:$0xff] %v1178
      %1211 = vst [vmem:[#allocation2 + $0xa0] sm:$0xff] %v1179
      %1212 = vst [vmem:[#allocation2 + $0xa8] sm:$0xff] %v1180
      %1213 = vst [vmem:[#allocation2 + $0xb0] sm:$0xff] %v1181
      %1214 = vst [vmem:[#allocation2 + $0xb8] sm:$0xff] %v1182
      %1215 = vst [vmem:[#allocation2 + $0xc0] sm:$0xff] %v1183
      %1216 = vst [vmem:[#allocation2 + $0xc8] sm:$0xff] %v1184
      %1217 = vst [vmem:[#allocation2 + $0xd0] sm:$0xff] %v1185
      %1218 = vst [vmem:[#allocation2 + $0xd8] sm:$0xff] %v1186
      %1219 = vst [vmem:[#allocation2 + $0xe0] sm:$0xff] %v1187
      %1220 = vst [vmem:[#allocation2 + $0xe8] sm:$0xff] %v1188
      %1221 = vst [vmem:[#allocation2 + $0xf0] sm:$0xff] %v1189
      %1222 = vst [vmem:[#allocation2 + $0xf8] sm:$0xff] %v1190
      %v1223 = vld [vmem:[%s192] sm:$0xc]
      %v1224 = vld [vmem:[%s192 + $0x4] sm:$0xf]
      %v1225 = vld [vmem:[%s192 + $0x8] sm:$0x3]
      %v1226 = vld [vmem:[%s192 + $0xc] sm:$0xc]
      %v1227 = vld [vmem:[%s192 + $0x10] sm:$0xf]
      %v1228 = vld [vmem:[%s192 + $0x14] sm:$0x3]
      %v1229 = vld [vmem:[%s192 + $0x18] sm:$0xc]
      %v1230 = vld [vmem:[%s192 + $0x1c] sm:$0xf]
      %v1231 = vld [vmem:[%s192 + $0x20] sm:$0x3]
      %v1232 = vld [vmem:[%s192 + $0x24] sm:$0xc]
      %v1233 = vld [vmem:[%s192 + $0x28] sm:$0xf]
      %v1234 = vld [vmem:[%s192 + $0x2c] sm:$0x3]
      %v1235 = vld [vmem:[%s192 + $0x30] sm:$0xc]
      %v1236 = vld [vmem:[%s192 + $0x34] sm:$0xf]
      %v1237 = vld [vmem:[%s192 + $0x38] sm:$0x3]
      %v1238 = vld [vmem:[%s192 + $0x3c] sm:$0xc]
      %v1239 = vld [vmem:[%s192 + $0x40] sm:$0xf]
      %v1240 = vld [vmem:[%s192 + $0x44] sm:$0x3]
      %v1241 = vld [vmem:[%s192 + $0x48] sm:$0xc]
      %v1242 = vld [vmem:[%s192 + $0x4c] sm:$0xf]
      %v1243 = vld [vmem:[%s192 + $0x50] sm:$0x3]
      %v1244 = vld [vmem:[%s192 + $0x54] sm:$0xc]
      %v1245 = vld [vmem:[%s192 + $0x58] sm:$0xf]
      %v1246 = vld [vmem:[%s192 + $0x5c] sm:$0x3]
      %v1247 = vld [vmem:[%s192 + $0x60] sm:$0xc]
      %v1248 = vld [vmem:[%s192 + $0x64] sm:$0xf]
      %v1249 = vld [vmem:[%s192 + $0x68] sm:$0x3]
      %v1250 = vld [vmem:[%s192 + $0x6c] sm:$0xc]
      %v1251 = vld [vmem:[%s192 + $0x70] sm:$0xf]
      %v1252 = vld [vmem:[%s192 + $0x74] sm:$0x3]
      %v1253 = vld [vmem:[%s192 + $0x78] sm:$0xc]
      %v1254 = vld [vmem:[%s192 + $0x7c] sm:$0xf]
      %v1255 = vld [vmem:[%s192 + $0x80] sm:$0x3]
      %v1256 = vld [vmem:[%s192 + $0x84] sm:$0xc]
      %v1257 = vld [vmem:[%s192 + $0x88] sm:$0xf]
      %v1258 = vld [vmem:[%s192 + $0x8c] sm:$0x3]
      %v1259 = vld [vmem:[%s192 + $0x90] sm:$0xc]
      %v1260 = vld [vmem:[%s192 + $0x94] sm:$0xf]
      %v1261 = vld [vmem:[%s192 + $0x98] sm:$0x3]
      %v1262 = vld [vmem:[%s192 + $0x9c] sm:$0xc]
      %v1263 = vld [vmem:[%s192 + $0xa0] sm:$0xf]
      %v1264 = vld [vmem:[%s192 + $0xa4] sm:$0x3]
      %v1265 = vld [vmem:[%s192 + $0xa8] sm:$0xc]
      %v1266 = vld [vmem:[%s192 + $0xac] sm:$0xf]
      %v1267 = vld [vmem:[%s192 + $0xb0] sm:$0x3]
      %v1268 = vld [vmem:[%s192 + $0xb4] sm:$0xc]
      %v1269 = vld [vmem:[%s192 + $0xb8] sm:$0xf]
      %v1270 = vld [vmem:[%s192 + $0xbc] sm:$0x3]
      %vm1319 = vcmask 1041408
      %vm1320 = vcmask 1045508
      %vm1321 = vmor %vm1319, %vm1320
      %v1322 = vrot.slane %v1223, 6
      %v1323 = vrot.slane %v1322, 4
      %v1324 = vrot.slane %v1224, 6
      %v1325 = vsel %vm1321, %v1323, %v1324
      %v1326 = vrot.slane %v1324, 4
      %v1327 = vrot.slane %v1225, 6
      %v1328 = vsel %vm1321, %v1326, %v1327
      %v1329 = vrot.slane %v1226, 6
      %v1330 = vrot.slane %v1329, 4
      %v1331 = vrot.slane %v1227, 6
      %v1332 = vsel %vm1321, %v1330, %v1331
      %v1333 = vrot.slane %v1331, 4
      %v1334 = vrot.slane %v1228, 6
      %v1335 = vsel %vm1321, %v1333, %v1334
      %v1336 = vrot.slane %v1229, 6
      %v1337 = vrot.slane %v1336, 4
      %v1338 = vrot.slane %v1230, 6
      %v1339 = vsel %vm1321, %v1337, %v1338
      %v1340 = vrot.slane %v1338, 4
      %v1341 = vrot.slane %v1231, 6
      %v1342 = vsel %vm1321, %v1340, %v1341
      %v1343 = vrot.slane %v1232, 6
      %v1344 = vrot.slane %v1343, 4
      %v1345 = vrot.slane %v1233, 6
      %v1346 = vsel %vm1321, %v1344, %v1345
      %v1347 = vrot.slane %v1345, 4
      %v1348 = vrot.slane %v1234, 6
      %v1349 = vsel %vm1321, %v1347, %v1348
      %v1350 = vrot.slane %v1235, 6
      %v1351 = vrot.slane %v1350, 4
      %v1352 = vrot.slane %v1236, 6
      %v1353 = vsel %vm1321, %v1351, %v1352
      %v1354 = vrot.slane %v1352, 4
      %v1355 = vrot.slane %v1237, 6
      %v1356 = vsel %vm1321, %v1354, %v1355
      %v1357 = vrot.slane %v1238, 6
      %v1358 = vrot.slane %v1357, 4
      %v1359 = vrot.slane %v1239, 6
      %v1360 = vsel %vm1321, %v1358, %v1359
      %v1361 = vrot.slane %v1359, 4
      %v1362 = vrot.slane %v1240, 6
      %v1363 = vsel %vm1321, %v1361, %v1362
      %v1364 = vrot.slane %v1241, 6
      %v1365 = vrot.slane %v1364, 4
      %v1366 = vrot.slane %v1242, 6
      %v1367 = vsel %vm1321, %v1365, %v1366
      %v1368 = vrot.slane %v1366, 4
      %v1369 = vrot.slane %v1243, 6
      %v1370 = vsel %vm1321, %v1368, %v1369
      %v1371 = vrot.slane %v1244, 6
      %v1372 = vrot.slane %v1371, 4
      %v1373 = vrot.slane %v1245, 6
      %v1374 = vsel %vm1321, %v1372, %v1373
      %v1375 = vrot.slane %v1373, 4
      %v1376 = vrot.slane %v1246, 6
      %v1377 = vsel %vm1321, %v1375, %v1376
      %v1378 = vrot.slane %v1247, 6
      %v1379 = vrot.slane %v1378, 4
      %v1380 = vrot.slane %v1248, 6
      %v1381 = vsel %vm1321, %v1379, %v1380
      %v1382 = vrot.slane %v1380, 4
      %v1383 = vrot.slane %v1249, 6
      %v1384 = vsel %vm1321, %v1382, %v1383
      %v1385 = vrot.slane %v1250, 6
      %v1386 = vrot.slane %v1385, 4
      %v1387 = vrot.slane %v1251, 6
      %v1388 = vsel %vm1321, %v1386, %v1387
      %v1389 = vrot.slane %v1387, 4
      %v1390 = vrot.slane %v1252, 6
      %v1391 = vsel %vm1321, %v1389, %v1390
      %v1392 = vrot.slane %v1253, 6
      %v1393 = vrot.slane %v1392, 4
      %v1394 = vrot.slane %v1254, 6
      %v1395 = vsel %vm1321, %v1393, %v1394
      %v1396 = vrot.slane %v1394, 4
      %v1397 = vrot.slane %v1255, 6
      %v1398 = vsel %vm1321, %v1396, %v1397
      %v1399 = vrot.slane %v1256, 6
      %v1400 = vrot.slane %v1399, 4
      %v1401 = vrot.slane %v1257, 6
      %v1402 = vsel %vm1321, %v1400, %v1401
      %v1403 = vrot.slane %v1401, 4
      %v1404 = vrot.slane %v1258, 6
      %v1405 = vsel %vm1321, %v1403, %v1404
      %v1406 = vrot.slane %v1259, 6
      %v1407 = vrot.slane %v1406, 4
      %v1408 = vrot.slane %v1260, 6
      %v1409 = vsel %vm1321, %v1407, %v1408
      %v1410 = vrot.slane %v1408, 4
      %v1411 = vrot.slane %v1261, 6
      %v1412 = vsel %vm1321, %v1410, %v1411
      %v1413 = vrot.slane %v1262, 6
      %v1414 = vrot.slane %v1413, 4
      %v1415 = vrot.slane %v1263, 6
      %v1416 = vsel %vm1321, %v1414, %v1415
      %v1417 = vrot.slane %v1415, 4
      %v1418 = vrot.slane %v1264, 6
      %v1419 = vsel %vm1321, %v1417, %v1418
      %v1420 = vrot.slane %v1265, 6
      %v1421 = vrot.slane %v1420, 4
      %v1422 = vrot.slane %v1266, 6
      %v1423 = vsel %vm1321, %v1421, %v1422
      %v1424 = vrot.slane %v1422, 4
      %v1425 = vrot.slane %v1267, 6
      %v1426 = vsel %vm1321, %v1424, %v1425
      %v1427 = vrot.slane %v1268, 6
      %v1428 = vrot.slane %v1427, 4
      %v1429 = vrot.slane %v1269, 6
      %v1430 = vsel %vm1321, %v1428, %v1429
      %v1431 = vrot.slane %v1429, 4
      %v1432 = vrot.slane %v1270, 6
      %v1433 = vsel %vm1321, %v1431, %v1432
      %v1434 = vld [vmem:[#allocation2] sm:$0xff]
      %v1435 = vld [vmem:[#allocation2 + $0x8] sm:$0xff]
      %v1436 = vld [vmem:[#allocation2 + $0x10] sm:$0xff]
      %v1437 = vld [vmem:[#allocation2 + $0x18] sm:$0xff]
      %v1438 = vld [vmem:[#allocation2 + $0x20] sm:$0xff]
      %v1439 = vld [vmem:[#allocation2 + $0x28] sm:$0xff]
      %v1440 = vld [vmem:[#allocation2 + $0x30] sm:$0xff]
      %v1441 = vld [vmem:[#allocation2 + $0x38] sm:$0xff]
      %v1442 = vld [vmem:[#allocation2 + $0x40] sm:$0xff]
      %v1443 = vld [vmem:[#allocation2 + $0x48] sm:$0xff]
      %v1444 = vld [vmem:[#allocation2 + $0x50] sm:$0xff]
      %v1445 = vld [vmem:[#allocation2 + $0x58] sm:$0xff]
      %v1446 = vld [vmem:[#allocation2 + $0x60] sm:$0xff]
      %v1447 = vld [vmem:[#allocation2 + $0x68] sm:$0xff]
      %v1448 = vld [vmem:[#allocation2 + $0x70] sm:$0xff]
      %v1449 = vld [vmem:[#allocation2 + $0x78] sm:$0xff]
      %v1450 = vld [vmem:[#allocation2 + $0x80] sm:$0xff]
      %v1451 = vld [vmem:[#allocation2 + $0x88] sm:$0xff]
      %v1452 = vld [vmem:[#allocation2 + $0x90] sm:$0xff]
      %v1453 = vld [vmem:[#allocation2 + $0x98] sm:$0xff]
      %v1454 = vld [vmem:[#allocation2 + $0xa0] sm:$0xff]
      %v1455 = vld [vmem:[#allocation2 + $0xa8] sm:$0xff]
      %v1456 = vld [vmem:[#allocation2 + $0xb0] sm:$0xff]
      %v1457 = vld [vmem:[#allocation2 + $0xb8] sm:$0xff]
      %v1458 = vld [vmem:[#allocation2 + $0xc0] sm:$0xff]
      %v1459 = vld [vmem:[#allocation2 + $0xc8] sm:$0xff]
      %v1460 = vld [vmem:[#allocation2 + $0xd0] sm:$0xff]
      %v1461 = vld [vmem:[#allocation2 + $0xd8] sm:$0xff]
      %v1462 = vld [vmem:[#allocation2 + $0xe0] sm:$0xff]
      %v1463 = vld [vmem:[#allocation2 + $0xe8] sm:$0xff]
      %v1464 = vld [vmem:[#allocation2 + $0xf0] sm:$0xff]
      %v1465 = vld [vmem:[#allocation2 + $0xf8] sm:$0xff]
      %s1466 = scalar_lea.vmem %s1, 4
      %v1467 = vld [vmem:[%s1466] sm:$0x3]
      %v1468 = vunpack.c.l.b16 %v1325
      %v1469 = vunpack.c.l.b16 %v1328
      %v1470 = vunpack.c.l.b16 %v1332
      %v1471 = vunpack.c.l.b16 %v1335
      %v1472 = vunpack.c.l.b16 %v1339
      %v1473 = vunpack.c.l.b16 %v1342
      %v1474 = vunpack.c.l.b16 %v1346
      %v1475 = vunpack.c.l.b16 %v1349
      %v1476 = vunpack.c.l.b16 %v1353
      %v1477 = vunpack.c.l.b16 %v1356
      %v1478 = vunpack.c.l.b16 %v1360
      %v1479 = vunpack.c.l.b16 %v1363
      %v1480 = vunpack.c.l.b16 %v1367
      %v1481 = vunpack.c.l.b16 %v1370
      %v1482 = vunpack.c.l.b16 %v1374
      %v1483 = vunpack.c.l.b16 %v1377
      %v1484 = vunpack.c.l.b16 %v1381
      %v1485 = vunpack.c.l.b16 %v1384
      %v1486 = vunpack.c.l.b16 %v1388
      %v1487 = vunpack.c.l.b16 %v1391
      %v1488 = vunpack.c.l.b16 %v1395
      %v1489 = vunpack.c.l.b16 %v1398
      %v1490 = vunpack.c.l.b16 %v1402
      %v1491 = vunpack.c.l.b16 %v1405
      %v1492 = vunpack.c.l.b16 %v1409
      %v1493 = vunpack.c.l.b16 %v1412
      %v1494 = vunpack.c.l.b16 %v1416
      %v1495 = vunpack.c.l.b16 %v1419
      %v1496 = vunpack.c.l.b16 %v1423
      %v1497 = vunpack.c.l.b16 %v1426
      %v1498 = vunpack.c.l.b16 %v1430
      %v1499 = vunpack.c.l.b16 %v1433
      %v1500 = vpack.c.b16 %v1469, %v1468
      %v1501 = vpack.c.b16 %v1471, %v1470
      %v1502 = vpack.c.b16 %v1473, %v1472
      %v1503 = vpack.c.b16 %v1475, %v1474
      %v1504 = vpack.c.b16 %v1477, %v1476
      %v1505 = vpack.c.b16 %v1479, %v1478
      %v1506 = vpack.c.b16 %v1481, %v1480
      %v1507 = vpack.c.b16 %v1483, %v1482
      %v1508 = vpack.c.b16 %v1485, %v1484
      %v1509 = vpack.c.b16 %v1487, %v1486
      %v1510 = vpack.c.b16 %v1489, %v1488
      %v1511 = vpack.c.b16 %v1491, %v1490
      %v1512 = vpack.c.b16 %v1493, %v1492
      %v1513 = vpack.c.b16 %v1495, %v1494
      %v1514 = vpack.c.b16 %v1497, %v1496
      %v1515 = vpack.c.b16 %v1499, %v1498
      %v1517 = vsel %vm376, %v1500, 0
      %v1520 = vsel %vm376, %v1501, 0
      %v1523 = vsel %vm376, %v1502, 0
      %v1526 = vsel %vm376, %v1503, 0
      %v1529 = vsel %vm376, %v1504, 0
      %v1532 = vsel %vm376, %v1505, 0
      %v1535 = vsel %vm376, %v1506, 0
      %v1538 = vsel %vm376, %v1507, 0
      %v1541 = vsel %vm376, %v1508, 0
      %v1544 = vsel %vm376, %v1509, 0
      %v1547 = vsel %vm376, %v1510, 0
      %v1550 = vsel %vm376, %v1511, 0
      %v1553 = vsel %vm376, %v1512, 0
      %v1556 = vsel %vm376, %v1513, 0
      %v1559 = vsel %vm376, %v1514, 0
      %v1562 = vsel %vm376, %v1515, 0
      %v1565 = vsel %vm425, %v1467, 0
      %1567 = vmatprep.subr.bf16.mxu0 0
      %1568 = vmatpush1.bf16.msra.mxu0 %v1565
      %1569 = vmatprep.subr.bf16.mxu0 0
      %1570 = vmatpush1.bf16.msra.mxu0 0
      %1571 = vmatprep.subr.bf16.mxu0 0
      %1572 = vmatpush1.bf16.msra.mxu0 0
      %1573 = vmatprep.subr.bf16.mxu0 0
      %1574 = vmatpush1.bf16.msra.mxu0 0
      %1575 = vmatprep.subr.bf16.mxu0 0
      %1576 = vmatpush1.bf16.msra.mxu0 0
      %1577 = vmatprep.subr.bf16.mxu0 0
      %1578 = vmatpush1.bf16.msra.mxu0 0
      %1579 = vmatprep.subr.bf16.mxu0 0
      %1580 = vmatpush1.bf16.msra.mxu0 0
      %1581 = vmatprep.subr.bf16.mxu0 0
      %1582 = vmatpush1.bf16.msra.mxu0 0
      %1583 = vmatprep.subr.bf16.mxu0 0
      %1584 = vmatpush1.bf16.msra.mxu0 0
      %1585 = vmatprep.subr.bf16.mxu0 0
      %1586 = vmatpush1.bf16.msra.mxu0 0
      %1587 = vmatprep.subr.bf16.mxu0 0
      %1588 = vmatpush1.bf16.msra.mxu0 0
      %1589 = vmatprep.subr.bf16.mxu0 0
      %1590 = vmatpush1.bf16.msra.mxu0 0
      %1591 = vmatprep.subr.bf16.mxu0 0
      %1592 = vmatpush1.bf16.msra.mxu0 0
      %1593 = vmatprep.subr.bf16.mxu0 0
      %1594 = vmatpush1.bf16.msra.mxu0 0
      %1595 = vmatprep.subr.bf16.mxu0 0
      %1596 = vmatpush1.bf16.msra.mxu0 0
      %1597 = vmatprep.subr.bf16.mxu0 0
      %1598 = vmatpush1.bf16.msra.mxu0 0
      %1599 = vmatprep.mubr.bf16.mxu0 0
      %1600 = vmatmul.mubr.bf16.gmra.mrb[0].mxu0 %v1517
      %v1601 = vpop.f32.mrb[0].mxu0
      %v1602 = vadd.f32 0.0, %v1601
      %v1603 = vpop.f32.mrb[0].mxu0
      %v1604 = vpop.f32.mrb[0].mxu0
      %v1605 = vadd.f32 0.0, %v1604
      %v1606 = vpop.f32.mrb[0].mxu0
      %1607 = vmatprep.mubr.bf16.mxu0 0
      %1608 = vmatmul.mubr.bf16.gmra.mrb[0].mxu0 %v1520
      %v1609 = vpop.f32.mrb[0].mxu0
      %v1610 = vadd.f32 0.0, %v1609
      %v1611 = vpop.f32.mrb[0].mxu0
      %v1612 = vpop.f32.mrb[0].mxu0
      %v1613 = vadd.f32 0.0, %v1612
      %v1614 = vpop.f32.mrb[0].mxu0
      %1615 = vmatprep.mubr.bf16.mxu0 0
      %1616 = vmatmul.mubr.bf16.gmra.mrb[0].mxu0 %v1523
      %v1617 = vpop.f32.mrb[0].mxu0
      %v1618 = vadd.f32 0.0, %v1617
      %v1619 = vpop.f32.mrb[0].mxu0
      %v1620 = vpop.f32.mrb[0].mxu0
      %v1621 = vadd.f32 0.0, %v1620
      %v1622 = vpop.f32.mrb[0].mxu0
      %1623 = vmatprep.mubr.bf16.mxu0 0
      %1624 = vmatmul.mubr.bf16.gmra.mrb[0].mxu0 %v1526
      %v1625 = vpop.f32.mrb[0].mxu0
      %v1626 = vadd.f32 0.0, %v1625
      %v1627 = vpop.f32.mrb[0].mxu0
      %v1628 = vpop.f32.mrb[0].mxu0
      %v1629 = vadd.f32 0.0, %v1628
      %v1630 = vpop.f32.mrb[0].mxu0
      %1631 = vmatprep.mubr.bf16.mxu0 0
      %1632 = vmatmul.mubr.bf16.gmra.mrb[0].mxu0 %v1529
      %v1633 = vpop.f32.mrb[0].mxu0
      %v1634 = vadd.f32 0.0, %v1633
      %v1635 = vpop.f32.mrb[0].mxu0
      %v1636 = vpop.f32.mrb[0].mxu0
      %v1637 = vadd.f32 0.0, %v1636
      %v1638 = vpop.f32.mrb[0].mxu0
      %1639 = vmatprep.mubr.bf16.mxu0 0
      %1640 = vmatmul.mubr.bf16.gmra.mrb[0].mxu0 %v1532
      %v1641 = vpop.f32.mrb[0].mxu0
      %v1642 = vadd.f32 0.0, %v1641
      %v1643 = vpop.f32.mrb[0].mxu0
      %v1644 = vpop.f32.mrb[0].mxu0
      %v1645 = vadd.f32 0.0, %v1644
      %v1646 = vpop.f32.mrb[0].mxu0
      %1647 = vmatprep.mubr.bf16.mxu0 0
      %1648 = vmatmul.mubr.bf16.gmra.mrb[0].mxu0 %v1535
      %v1649 = vpop.f32.mrb[0].mxu0
      %v1650 = vadd.f32 0.0, %v1649
      %v1651 = vpop.f32.mrb[0].mxu0
      %v1652 = vpop.f32.mrb[0].mxu0
      %v1653 = vadd.f32 0.0, %v1652
      %v1654 = vpop.f32.mrb[0].mxu0
      %1655 = vmatprep.mubr.bf16.mxu0 0
      %1656 = vmatmul.mubr.bf16.gmra.mrb[0].mxu0 %v1538
      %v1657 = vpop.f32.mrb[0].mxu0
      %v1658 = vadd.f32 0.0, %v1657
      %v1659 = vpop.f32.mrb[0].mxu0
      %v1660 = vpop.f32.mrb[0].mxu0
      %v1661 = vadd.f32 0.0, %v1660
      %v1662 = vpop.f32.mrb[0].mxu0
      %1663 = vmatprep.mubr.bf16.mxu0 0
      %1664 = vmatmul.mubr.bf16.gmra.mrb[0].mxu0 %v1541
      %v1665 = vpop.f32.mrb[0].mxu0
      %v1666 = vadd.f32 0.0, %v1665
      %v1667 = vpop.f32.mrb[0].mxu0
      %v1668 = vpop.f32.mrb[0].mxu0
      %v1669 = vadd.f32 0.0, %v1668
      %v1670 = vpop.f32.mrb[0].mxu0
      %1671 = vmatprep.mubr.bf16.mxu0 0
      %1672 = vmatmul.mubr.bf16.gmra.mrb[0].mxu0 %v1544
      %v1673 = vpop.f32.mrb[0].mxu0
      %v1674 = vadd.f32 0.0, %v1673
      %v1675 = vpop.f32.mrb[0].mxu0
      %v1676 = vpop.f32.mrb[0].mxu0
      %v1677 = vadd.f32 0.0, %v1676
      %v1678 = vpop.f32.mrb[0].mxu0
      %1679 = vmatprep.mubr.bf16.mxu0 0
      %1680 = vmatmul.mubr.bf16.gmra.mrb[0].mxu0 %v1547
      %v1681 = vpop.f32.mrb[0].mxu0
      %v1682 = vadd.f32 0.0, %v1681
      %v1683 = vpop.f32.mrb[0].mxu0
      %v1684 = vpop.f32.mrb[0].mxu0
      %v1685 = vadd.f32 0.0, %v1684
      %v1686 = vpop.f32.mrb[0].mxu0
      %1687 = vmatprep.mubr.bf16.mxu0 0
      %1688 = vmatmul.mubr.bf16.gmra.mrb[0].mxu0 %v1550
      %v1689 = vpop.f32.mrb[0].mxu0
      %v1690 = vadd.f32 0.0, %v1689
      %v1691 = vpop.f32.mrb[0].mxu0
      %v1692 = vpop.f32.mrb[0].mxu0
      %v1693 = vadd.f32 0.0, %v1692
      %v1694 = vpop.f32.mrb[0].mxu0
      %1695 = vmatprep.mubr.bf16.mxu0 0
      %1696 = vmatmul.mubr.bf16.gmra.mrb[0].mxu0 %v1553
      %v1697 = vpop.f32.mrb[0].mxu0
      %v1698 = vadd.f32 0.0, %v1697
      %v1699 = vpop.f32.mrb[0].mxu0
      %v1700 = vpop.f32.mrb[0].mxu0
      %v1701 = vadd.f32 0.0, %v1700
      %v1702 = vpop.f32.mrb[0].mxu0
      %1703 = vmatprep.mubr.bf16.mxu0 0
      %1704 = vmatmul.mubr.bf16.gmra.mrb[0].mxu0 %v1556
      %v1705 = vpop.f32.mrb[0].mxu0
      %v1706 = vadd.f32 0.0, %v1705
      %v1707 = vpop.f32.mrb[0].mxu0
      %v1708 = vpop.f32.mrb[0].mxu0
      %v1709 = vadd.f32 0.0, %v1708
      %v1710 = vpop.f32.mrb[0].mxu0
      %1711 = vmatprep.mubr.bf16.mxu0 0
      %1712 = vmatmul.mubr.bf16.gmra.mrb[0].mxu0 %v1559
      %v1713 = vpop.f32.mrb[0].mxu0
      %v1714 = vadd.f32 0.0, %v1713
      %v1715 = vpop.f32.mrb[0].mxu0
      %v1716 = vpop.f32.mrb[0].mxu0
      %v1717 = vadd.f32 0.0, %v1716
      %v1718 = vpop.f32.mrb[0].mxu0
      %1719 = vmatprep.mubr.bf16.mxu0 0
      %1720 = vmatmul.mubr.bf16.gmra.mrb[0].mxu0 %v1562
      %v1721 = vpop.f32.mrb[0].mxu0
      %v1722 = vadd.f32 0.0, %v1721
      %v1723 = vpop.f32.mrb[0].mxu0
      %v1724 = vpop.f32.mrb[0].mxu0
      %v1725 = vadd.f32 0.0, %v1724
      %v1726 = vpop.f32.mrb[0].mxu0
      %1727 = vdwg.mxu0
      %v1728 = vadd.f32 %v1434, %v1602
      %v1729 = vadd.f32 %v1435, %v1605
      %v1730 = vadd.f32 %v1436, %v1610
      %v1731 = vadd.f32 %v1437, %v1613
      %v1732 = vadd.f32 %v1438, %v1618
      %v1733 = vadd.f32 %v1439, %v1621
      %v1734 = vadd.f32 %v1440, %v1626
      %v1735 = vadd.f32 %v1441, %v1629
      %v1736 = vadd.f32 %v1442, %v1634
      %v1737 = vadd.f32 %v1443, %v1637
      %v1738 = vadd.f32 %v1444, %v1642
      %v1739 = vadd.f32 %v1445, %v1645
      %v1740 = vadd.f32 %v1446, %v1650
      %v1741 = vadd.f32 %v1447, %v1653
      %v1742 = vadd.f32 %v1448, %v1658
      %v1743 = vadd.f32 %v1449, %v1661
      %v1744 = vadd.f32 %v1450, %v1666
      %v1745 = vadd.f32 %v1451, %v1669
      %v1746 = vadd.f32 %v1452, %v1674
      %v1747 = vadd.f32 %v1453, %v1677
      %v1748 = vadd.f32 %v1454, %v1682
      %v1749 = vadd.f32 %v1455, %v1685
      %v1750 = vadd.f32 %v1456, %v1690
      %v1751 = vadd.f32 %v1457, %v1693
      %v1752 = vadd.f32 %v1458, %v1698
      %v1753 = vadd.f32 %v1459, %v1701
      %v1754 = vadd.f32 %v1460, %v1706
      %v1755 = vadd.f32 %v1461, %v1709
      %v1756 = vadd.f32 %v1462, %v1714
      %v1757 = vadd.f32 %v1463, %v1717
      %v1758 = vadd.f32 %v1464, %v1722
      %v1759 = vadd.f32 %v1465, %v1725
      %1760 = vst [vmem:[#allocation2] sm:$0xff] %v1728
      %1761 = vst [vmem:[#allocation2 + $0x8] sm:$0xff] %v1729
      %1762 = vst [vmem:[#allocation2 + $0x10] sm:$0xff] %v1730
      %1763 = vst [vmem:[#allocation2 + $0x18] sm:$0xff] %v1731
      %1764 = vst [vmem:[#allocation2 + $0x20] sm:$0xff] %v1732
      %1765 = vst [vmem:[#allocation2 + $0x28] sm:$0xff] %v1733
      %1766 = vst [vmem:[#allocation2 + $0x30] sm:$0xff] %v1734
      %1767 = vst [vmem:[#allocation2 + $0x38] sm:$0xff] %v1735
      %1768 = vst [vmem:[#allocation2 + $0x40] sm:$0xff] %v1736
      %1769 = vst [vmem:[#allocation2 + $0x48] sm:$0xff] %v1737
      %1770 = vst [vmem:[#allocation2 + $0x50] sm:$0xff] %v1738
      %1771 = vst [vmem:[#allocation2 + $0x58] sm:$0xff] %v1739
      %1772 = vst [vmem:[#allocation2 + $0x60] sm:$0xff] %v1740
      %1773 = vst [vmem:[#allocation2 + $0x68] sm:$0xff] %v1741
      %1774 = vst [vmem:[#allocation2 + $0x70] sm:$0xff] %v1742
      %1775 = vst [vmem:[#allocation2 + $0x78] sm:$0xff] %v1743
      %1776 = vst [vmem:[#allocation2 + $0x80] sm:$0xff] %v1744
      %1777 = vst [vmem:[#allocation2 + $0x88] sm:$0xff] %v1745
      %1778 = vst [vmem:[#allocation2 + $0x90] sm:$0xff] %v1746
      %1779 = vst [vmem:[#allocation2 + $0x98] sm:$0xff] %v1747
      %1780 = vst [vmem:[#allocation2 + $0xa0] sm:$0xff] %v1748
      %1781 = vst [vmem:[#allocation2 + $0xa8] sm:$0xff] %v1749
      %1782 = vst [vmem:[#allocation2 + $0xb0] sm:$0xff] %v1750
      %1783 = vst [vmem:[#allocation2 + $0xb8] sm:$0xff] %v1751
      %1784 = vst [vmem:[#allocation2 + $0xc0] sm:$0xff] %v1752
      %1785 = vst [vmem:[#allocation2 + $0xc8] sm:$0xff] %v1753
      %1786 = vst [vmem:[#allocation2 + $0xd0] sm:$0xff] %v1754
      %1787 = vst [vmem:[#allocation2 + $0xd8] sm:$0xff] %v1755
      %1788 = vst [vmem:[#allocation2 + $0xe0] sm:$0xff] %v1756
      %1789 = vst [vmem:[#allocation2 + $0xe8] sm:$0xff] %v1757
      %1790 = vst [vmem:[#allocation2 + $0xf0] sm:$0xff] %v1758
      %1791 = vst [vmem:[#allocation2 + $0xf8] sm:$0xff] %v1759
      %s1792 = scalar_lea.vmem %s192, 24
      %v1793 = vld [vmem:[%s1792] sm:$0xf]
      %v1794 = vld [vmem:[%s1792 + $0x4] sm:$0xf]
      %v1795 = vld [vmem:[%s1792 + $0xc] sm:$0xf]
      %v1796 = vld [vmem:[%s1792 + $0x10] sm:$0xf]
      %v1797 = vld [vmem:[%s1792 + $0x18] sm:$0xf]
      %v1798 = vld [vmem:[%s1792 + $0x1c] sm:$0xf]
      %v1799 = vld [vmem:[%s1792 + $0x24] sm:$0xf]
      %v1800 = vld [vmem:[%s1792 + $0x28] sm:$0xf]
      %v1801 = vld [vmem:[%s1792 + $0x30] sm:$0xf]
      %v1802 = vld [vmem:[%s1792 + $0x34] sm:$0xf]
      %v1803 = vld [vmem:[%s1792 + $0x3c] sm:$0xf]
      %v1804 = vld [vmem:[%s1792 + $0x40] sm:$0xf]
      %v1805 = vld [vmem:[%s1792 + $0x48] sm:$0xf]
      %v1806 = vld [vmem:[%s1792 + $0x4c] sm:$0xf]
      %v1807 = vld [vmem:[%s1792 + $0x54] sm:$0xf]
      %v1808 = vld [vmem:[%s1792 + $0x58] sm:$0xf]
      %v1809 = vld [vmem:[%s1792 + $0x60] sm:$0xf]
      %v1810 = vld [vmem:[%s1792 + $0x64] sm:$0xf]
      %v1811 = vld [vmem:[%s1792 + $0x6c] sm:$0xf]
      %v1812 = vld [vmem:[%s1792 + $0x70] sm:$0xf]
      %v1813 = vld [vmem:[%s1792 + $0x78] sm:$0xf]
      %v1814 = vld [vmem:[%s1792 + $0x7c] sm:$0xf]
      %v1815 = vld [vmem:[%s1792 + $0x84] sm:$0xf]
      %v1816 = vld [vmem:[%s1792 + $0x88] sm:$0xf]
      %v1817 = vld [vmem:[%s1792 + $0x90] sm:$0xf]
      %v1818 = vld [vmem:[%s1792 + $0x94] sm:$0xf]
      %v1819 = vld [vmem:[%s1792 + $0x9c] sm:$0xf]
      %v1820 = vld [vmem:[%s1792 + $0xa0] sm:$0xf]
      %v1821 = vld [vmem:[%s1792 + $0xa8] sm:$0xf]
      %v1822 = vld [vmem:[%s1792 + $0xac] sm:$0xf]
      %v1823 = vld [vmem:[%s1792 + $0xb4] sm:$0xf]
      %v1824 = vld [vmem:[%s1792 + $0xb8] sm:$0xf]
      %v1825 = vld [vmem:[#allocation2] sm:$0xff]
      %v1826 = vld [vmem:[#allocation2 + $0x8] sm:$0xff]
      %v1827 = vld [vmem:[#allocation2 + $0x10] sm:$0xff]
      %v1828 = vld [vmem:[#allocation2 + $0x18] sm:$0xff]
      %v1829 = vld [vmem:[#allocation2 + $0x20] sm:$0xff]
      %v1830 = vld [vmem:[#allocation2 + $0x28] sm:$0xff]
      %v1831 = vld [vmem:[#allocation2 + $0x30] sm:$0xff]
      %v1832 = vld [vmem:[#allocation2 + $0x38] sm:$0xff]
      %v1833 = vld [vmem:[#allocation2 + $0x40] sm:$0xff]
      %v1834 = vld [vmem:[#allocation2 + $0x48] sm:$0xff]
      %v1835 = vld [vmem:[#allocation2 + $0x50] sm:$0xff]
      %v1836 = vld [vmem:[#allocation2 + $0x58] sm:$0xff]
      %v1837 = vld [vmem:[#allocation2 + $0x60] sm:$0xff]
      %v1838 = vld [vmem:[#allocation2 + $0x68] sm:$0xff]
      %v1839 = vld [vmem:[#allocation2 + $0x70] sm:$0xff]
      %v1840 = vld [vmem:[#allocation2 + $0x78] sm:$0xff]
      %v1841 = vld [vmem:[#allocation2 + $0x80] sm:$0xff]
      %v1842 = vld [vmem:[#allocation2 + $0x88] sm:$0xff]
      %v1843 = vld [vmem:[#allocation2 + $0x90] sm:$0xff]
      %v1844 = vld [vmem:[#allocation2 + $0x98] sm:$0xff]
      %v1845 = vld [vmem:[#allocation2 + $0xa0] sm:$0xff]
      %v1846 = vld [vmem:[#allocation2 + $0xa8] sm:$0xff]
      %v1847 = vld [vmem:[#allocation2 + $0xb0] sm:$0xff]
      %v1848 = vld [vmem:[#allocation2 + $0xb8] sm:$0xff]
      %v1849 = vld [vmem:[#allocation2 + $0xc0] sm:$0xff]
      %v1850 = vld [vmem:[#allocation2 + $0xc8] sm:$0xff]
      %v1851 = vld [vmem:[#allocation2 + $0xd0] sm:$0xff]
      %v1852 = vld [vmem:[#allocation2 + $0xd8] sm:$0xff]
      %v1853 = vld [vmem:[#allocation2 + $0xe0] sm:$0xff]
      %v1854 = vld [vmem:[#allocation2 + $0xe8] sm:$0xff]
      %v1855 = vld [vmem:[#allocation2 + $0xf0] sm:$0xff]
      %v1856 = vld [vmem:[#allocation2 + $0xf8] sm:$0xff]
      %s1857 = scalar_lea.vmem %s1, 6
      %v1858 = vld [vmem:[%s1857] sm:$0x3]
      %v1891 = vunpack.c.l.b16 %v1793
      %v1892 = vunpack.c.l.b16 %v1794
      %v1893 = vunpack.c.l.b16 %v1795
      %v1894 = vunpack.c.l.b16 %v1796
      %v1895 = vunpack.c.l.b16 %v1797
      %v1896 = vunpack.c.l.b16 %v1798
      %v1897 = vunpack.c.l.b16 %v1799
      %v1898 = vunpack.c.l.b16 %v1800
      %v1899 = vunpack.c.l.b16 %v1801
      %v1900 = vunpack.c.l.b16 %v1802
      %v1901 = vunpack.c.l.b16 %v1803
      %v1902 = vunpack.c.l.b16 %v1804
      %v1903 = vunpack.c.l.b16 %v1805
      %v1904 = vunpack.c.l.b16 %v1806
      %v1905 = vunpack.c.l.b16 %v1807
      %v1906 = vunpack.c.l.b16 %v1808
      %v1907 = vunpack.c.l.b16 %v1809
      %v1908 = vunpack.c.l.b16 %v1810
      %v1909 = vunpack.c.l.b16 %v1811
      %v1910 = vunpack.c.l.b16 %v1812
      %v1911 = vunpack.c.l.b16 %v1813
      %v1912 = vunpack.c.l.b16 %v1814
      %v1913 = vunpack.c.l.b16 %v1815
      %v1914 = vunpack.c.l.b16 %v1816
      %v1915 = vunpack.c.l.b16 %v1817
      %v1916 = vunpack.c.l.b16 %v1818
      %v1917 = vunpack.c.l.b16 %v1819
      %v1918 = vunpack.c.l.b16 %v1820
      %v1919 = vunpack.c.l.b16 %v1821
      %v1920 = vunpack.c.l.b16 %v1822
      %v1921 = vunpack.c.l.b16 %v1823
      %v1922 = vunpack.c.l.b16 %v1824
      %v1923 = vpack.c.b16 %v1892, %v1891
      %v1924 = vpack.c.b16 %v1894, %v1893
      %v1925 = vpack.c.b16 %v1896, %v1895
      %v1926 = vpack.c.b16 %v1898, %v1897
      %v1927 = vpack.c.b16 %v1900, %v1899
      %v1928 = vpack.c.b16 %v1902, %v1901
      %v1929 = vpack.c.b16 %v1904, %v1903
      %v1930 = vpack.c.b16 %v1906, %v1905
      %v1931 = vpack.c.b16 %v1908, %v1907
      %v1932 = vpack.c.b16 %v1910, %v1909
      %v1933 = vpack.c.b16 %v1912, %v1911
      %v1934 = vpack.c.b16 %v1914, %v1913
      %v1935 = vpack.c.b16 %v1916, %v1915
      %v1936 = vpack.c.b16 %v1918, %v1917
      %v1937 = vpack.c.b16 %v1920, %v1919
      %v1938 = vpack.c.b16 %v1922, %v1921
      %v1940 = vsel %vm376, %v1923, 0
      %v1943 = vsel %vm376, %v1924, 0
      %v1946 = vsel %vm376, %v1925, 0
      %v1949 = vsel %vm376, %v1926, 0
      %v1952 = vsel %vm376, %v1927, 0
      %v1955 = vsel %vm376, %v1928, 0
      %v1958 = vsel %vm376, %v1929, 0
      %v1961 = vsel %vm376, %v1930, 0
      %v1964 = vsel %vm376, %v1931, 0
      %v1967 = vsel %vm376, %v1932, 0
      %v1970 = vsel %vm376, %v1933, 0
      %v1973 = vsel %vm376, %v1934, 0
      %v1976 = vsel %vm376, %v1935, 0
      %v1979 = vsel %vm376, %v1936, 0
      %v1982 = vsel %vm376, %v1937, 0
      %v1985 = vsel %vm376, %v1938, 0
      %v1988 = vsel %vm425, %v1858, 0
      %1990 = vmatprep.subr.bf16.mxu0 0
      %1991 = vmatpush1.bf16.msra.mxu0 %v1988
      %1992 = vmatprep.subr.bf16.mxu0 0
      %1993 = vmatpush1.bf16.msra.mxu0 0
      %1994 = vmatprep.subr.bf16.mxu0 0
      %1995 = vmatpush1.bf16.msra.mxu0 0
      %1996 = vmatprep.subr.bf16.mxu0 0
      %1997 = vmatpush1.bf16.msra.mxu0 0
      %1998 = vmatprep.subr.bf16.mxu0 0
      %1999 = vmatpush1.bf16.msra.mxu0 0
      %2000 = vmatprep.subr.bf16.mxu0 0
      %2001 = vmatpush1.bf16.msra.mxu0 0
      %2002 = vmatprep.subr.bf16.mxu0 0
      %2003 = vmatpush1.bf16.msra.mxu0 0
      %2004 = vmatprep.subr.bf16.mxu0 0
      %2005 = vmatpush1.bf16.msra.mxu0 0
      %2006 = vmatprep.subr.bf16.mxu0 0
      %2007 = vmatpush1.bf16.msra.mxu0 0
      %2008 = vmatprep.subr.bf16.mxu0 0
      %2009 = vmatpush1.bf16.msra.mxu0 0
      %2010 = vmatprep.subr.bf16.mxu0 0
      %2011 = vmatpush1.bf16.msra.mxu0 0
      %2012 = vmatprep.subr.bf16.mxu0 0
      %2013 = vmatpush1.bf16.msra.mxu0 0
      %2014 = vmatprep.subr.bf16.mxu0 0
      %2015 = vmatpush1.bf16.msra.mxu0 0
      %2016 = vmatprep.subr.bf16.mxu0 0
      %2017 = vmatpush1.bf16.msra.mxu0 0
      %2018 = vmatprep.subr.bf16.mxu0 0
      %2019 = vmatpush1.bf16.msra.mxu0 0
      %2020 = vmatprep.subr.bf16.mxu0 0
      %2021 = vmatpush1.bf16.msra.mxu0 0
      %2022 = vmatprep.mubr.bf16.mxu0 0
      %2023 = vmatmul.mubr.bf16.gmra.mrb[0].mxu0 %v1940
      %v2024 = vpop.f32.mrb[0].mxu0
      %v2025 = vadd.f32 0.0, %v2024
      %v2026 = vpop.f32.mrb[0].mxu0
      %v2027 = vpop.f32.mrb[0].mxu0
      %v2028 = vadd.f32 0.0, %v2027
      %v2029 = vpop.f32.mrb[0].mxu0
      %2030 = vmatprep.mubr.bf16.mxu0 0
      %2031 = vmatmul.mubr.bf16.gmra.mrb[0].mxu0 %v1943
      %v2032 = vpop.f32.mrb[0].mxu0
      %v2033 = vadd.f32 0.0, %v2032
      %v2034 = vpop.f32.mrb[0].mxu0
      %v2035 = vpop.f32.mrb[0].mxu0
      %v2036 = vadd.f32 0.0, %v2035
      %v2037 = vpop.f32.mrb[0].mxu0
      %2038 = vmatprep.mubr.bf16.mxu0 0
      %2039 = vmatmul.mubr.bf16.gmra.mrb[0].mxu0 %v1946
      %v2040 = vpop.f32.mrb[0].mxu0
      %v2041 = vadd.f32 0.0, %v2040
      %v2042 = vpop.f32.mrb[0].mxu0
      %v2043 = vpop.f32.mrb[0].mxu0
      %v2044 = vadd.f32 0.0, %v2043
      %v2045 = vpop.f32.mrb[0].mxu0
      %2046 = vmatprep.mubr.bf16.mxu0 0
      %2047 = vmatmul.mubr.bf16.gmra.mrb[0].mxu0 %v1949
      %v2048 = vpop.f32.mrb[0].mxu0
      %v2049 = vadd.f32 0.0, %v2048
      %v2050 = vpop.f32.mrb[0].mxu0
      %v2051 = vpop.f32.mrb[0].mxu0
      %v2052 = vadd.f32 0.0, %v2051
      %v2053 = vpop.f32.mrb[0].mxu0
      %2054 = vmatprep.mubr.bf16.mxu0 0
      %2055 = vmatmul.mubr.bf16.gmra.mrb[0].mxu0 %v1952
      %v2056 = vpop.f32.mrb[0].mxu0
      %v2057 = vadd.f32 0.0, %v2056
      %v2058 = vpop.f32.mrb[0].mxu0
      %v2059 = vpop.f32.mrb[0].mxu0
      %v2060 = vadd.f32 0.0, %v2059
      %v2061 = vpop.f32.mrb[0].mxu0
      %2062 = vmatprep.mubr.bf16.mxu0 0
      %2063 = vmatmul.mubr.bf16.gmra.mrb[0].mxu0 %v1955
      %v2064 = vpop.f32.mrb[0].mxu0
      %v2065 = vadd.f32 0.0, %v2064
      %v2066 = vpop.f32.mrb[0].mxu0
      %v2067 = vpop.f32.mrb[0].mxu0
      %v2068 = vadd.f32 0.0, %v2067
      %v2069 = vpop.f32.mrb[0].mxu0
      %2070 = vmatprep.mubr.bf16.mxu0 0
      %2071 = vmatmul.mubr.bf16.gmra.mrb[0].mxu0 %v1958
      %v2072 = vpop.f32.mrb[0].mxu0
      %v2073 = vadd.f32 0.0, %v2072
      %v2074 = vpop.f32.mrb[0].mxu0
      %v2075 = vpop.f32.mrb[0].mxu0
      %v2076 = vadd.f32 0.0, %v2075
      %v2077 = vpop.f32.mrb[0].mxu0
      %2078 = vmatprep.mubr.bf16.mxu0 0
      %2079 = vmatmul.mubr.bf16.gmra.mrb[0].mxu0 %v1961
      %v2080 = vpop.f32.mrb[0].mxu0
      %v2081 = vadd.f32 0.0, %v2080
      %v2082 = vpop.f32.mrb[0].mxu0
      %v2083 = vpop.f32.mrb[0].mxu0
      %v2084 = vadd.f32 0.0, %v2083
      %v2085 = vpop.f32.mrb[0].mxu0
      %2086 = vmatprep.mubr.bf16.mxu0 0
      %2087 = vmatmul.mubr.bf16.gmra.mrb[0].mxu0 %v1964
      %v2088 = vpop.f32.mrb[0].mxu0
      %v2089 = vadd.f32 0.0, %v2088
      %v2090 = vpop.f32.mrb[0].mxu0
      %v2091 = vpop.f32.mrb[0].mxu0
      %v2092 = vadd.f32 0.0, %v2091
      %v2093 = vpop.f32.mrb[0].mxu0
      %2094 = vmatprep.mubr.bf16.mxu0 0
      %2095 = vmatmul.mubr.bf16.gmra.mrb[0].mxu0 %v1967
      %v2096 = vpop.f32.mrb[0].mxu0
      %v2097 = vadd.f32 0.0, %v2096
      %v2098 = vpop.f32.mrb[0].mxu0
      %v2099 = vpop.f32.mrb[0].mxu0
      %v2100 = vadd.f32 0.0, %v2099
      %v2101 = vpop.f32.mrb[0].mxu0
      %2102 = vmatprep.mubr.bf16.mxu0 0
      %2103 = vmatmul.mubr.bf16.gmra.mrb[0].mxu0 %v1970
      %v2104 = vpop.f32.mrb[0].mxu0
      %v2105 = vadd.f32 0.0, %v2104
      %v2106 = vpop.f32.mrb[0].mxu0
      %v2107 = vpop.f32.mrb[0].mxu0
      %v2108 = vadd.f32 0.0, %v2107
      %v2109 = vpop.f32.mrb[0].mxu0
      %2110 = vmatprep.mubr.bf16.mxu0 0
      %2111 = vmatmul.mubr.bf16.gmra.mrb[0].mxu0 %v1973
      %v2112 = vpop.f32.mrb[0].mxu0
      %v2113 = vadd.f32 0.0, %v2112
      %v2114 = vpop.f32.mrb[0].mxu0
      %v2115 = vpop.f32.mrb[0].mxu0
      %v2116 = vadd.f32 0.0, %v2115
      %v2117 = vpop.f32.mrb[0].mxu0
      %2118 = vmatprep.mubr.bf16.mxu0 0
      %2119 = vmatmul.mubr.bf16.gmra.mrb[0].mxu0 %v1976
      %v2120 = vpop.f32.mrb[0].mxu0
      %v2121 = vadd.f32 0.0, %v2120
      %v2122 = vpop.f32.mrb[0].mxu0
      %v2123 = vpop.f32.mrb[0].mxu0
      %v2124 = vadd.f32 0.0, %v2123
      %v2125 = vpop.f32.mrb[0].mxu0
      %2126 = vmatprep.mubr.bf16.mxu0 0
      %2127 = vmatmul.mubr.bf16.gmra.mrb[0].mxu0 %v1979
      %v2128 = vpop.f32.mrb[0].mxu0
      %v2129 = vadd.f32 0.0, %v2128
      %v2130 = vpop.f32.mrb[0].mxu0
      %v2131 = vpop.f32.mrb[0].mxu0
      %v2132 = vadd.f32 0.0, %v2131
      %v2133 = vpop.f32.mrb[0].mxu0
      %2134 = vmatprep.mubr.bf16.mxu0 0
      %2135 = vmatmul.mubr.bf16.gmra.mrb[0].mxu0 %v1982
      %v2136 = vpop.f32.mrb[0].mxu0
      %v2137 = vadd.f32 0.0, %v2136
      %v2138 = vpop.f32.mrb[0].mxu0
      %v2139 = vpop.f32.mrb[0].mxu0
      %v2140 = vadd.f32 0.0, %v2139
      %v2141 = vpop.f32.mrb[0].mxu0
      %2142 = vmatprep.mubr.bf16.mxu0 0
      %2143 = vmatmul.mubr.bf16.gmra.mrb[0].mxu0 %v1985
      %v2144 = vpop.f32.mrb[0].mxu0
      %v2145 = vadd.f32 0.0, %v2144
      %v2146 = vpop.f32.mrb[0].mxu0
      %v2147 = vpop.f32.mrb[0].mxu0
      %v2148 = vadd.f32 0.0, %v2147
      %v2149 = vpop.f32.mrb[0].mxu0
      %2150 = vdwg.mxu0
      %v2151 = vadd.f32 %v1825, %v2025
      %v2152 = vadd.f32 %v1826, %v2028
      %v2153 = vadd.f32 %v1827, %v2033
      %v2154 = vadd.f32 %v1828, %v2036
      %v2155 = vadd.f32 %v1829, %v2041
      %v2156 = vadd.f32 %v1830, %v2044
      %v2157 = vadd.f32 %v1831, %v2049
      %v2158 = vadd.f32 %v1832, %v2052
      %v2159 = vadd.f32 %v1833, %v2057
      %v2160 = vadd.f32 %v1834, %v2060
      %v2161 = vadd.f32 %v1835, %v2065
      %v2162 = vadd.f32 %v1836, %v2068
      %v2163 = vadd.f32 %v1837, %v2073
      %v2164 = vadd.f32 %v1838, %v2076
      %v2165 = vadd.f32 %v1839, %v2081
      %v2166 = vadd.f32 %v1840, %v2084
      %v2167 = vadd.f32 %v1841, %v2089
      %v2168 = vadd.f32 %v1842, %v2092
      %v2169 = vadd.f32 %v1843, %v2097
      %v2170 = vadd.f32 %v1844, %v2100
      %v2171 = vadd.f32 %v1845, %v2105
      %v2172 = vadd.f32 %v1846, %v2108
      %v2173 = vadd.f32 %v1847, %v2113
      %v2174 = vadd.f32 %v1848, %v2116
      %v2175 = vadd.f32 %v1849, %v2121
      %v2176 = vadd.f32 %v1850, %v2124
      %v2177 = vadd.f32 %v1851, %v2129
      %v2178 = vadd.f32 %v1852, %v2132
      %v2179 = vadd.f32 %v1853, %v2137
      %v2180 = vadd.f32 %v1854, %v2140
      %v2181 = vadd.f32 %v1855, %v2145
      %v2182 = vadd.f32 %v1856, %v2148
      %2183 = vst [vmem:[#allocation2] sm:$0xff] %v2151
      %2184 = vst [vmem:[#allocation2 + $0x8] sm:$0xff] %v2152
      %2185 = vst [vmem:[#allocation2 + $0x10] sm:$0xff] %v2153
      %2186 = vst [vmem:[#allocation2 + $0x18] sm:$0xff] %v2154
      %2187 = vst [vmem:[#allocation2 + $0x20] sm:$0xff] %v2155
      %2188 = vst [vmem:[#allocation2 + $0x28] sm:$0xff] %v2156
      %2189 = vst [vmem:[#allocation2 + $0x30] sm:$0xff] %v2157
      %2190 = vst [vmem:[#allocation2 + $0x38] sm:$0xff] %v2158
      %2191 = vst [vmem:[#allocation2 + $0x40] sm:$0xff] %v2159
      %2192 = vst [vmem:[#allocation2 + $0x48] sm:$0xff] %v2160
      %2193 = vst [vmem:[#allocation2 + $0x50] sm:$0xff] %v2161
      %2194 = vst [vmem:[#allocation2 + $0x58] sm:$0xff] %v2162
      %2195 = vst [vmem:[#allocation2 + $0x60] sm:$0xff] %v2163
      %2196 = vst [vmem:[#allocation2 + $0x68] sm:$0xff] %v2164
      %2197 = vst [vmem:[#allocation2 + $0x70] sm:$0xff] %v2165
      %2198 = vst [vmem:[#allocation2 + $0x78] sm:$0xff] %v2166
      %2199 = vst [vmem:[#allocation2 + $0x80] sm:$0xff] %v2167
      %2200 = vst [vmem:[#allocation2 + $0x88] sm:$0xff] %v2168
      %2201 = vst [vmem:[#allocation2 + $0x90] sm:$0xff] %v2169
      %2202 = vst [vmem:[#allocation2 + $0x98] sm:$0xff] %v2170
      %2203 = vst [vmem:[#allocation2 + $0xa0] sm:$0xff] %v2171
      %2204 = vst [vmem:[#allocation2 + $0xa8] sm:$0xff] %v2172
      %2205 = vst [vmem:[#allocation2 + $0xb0] sm:$0xff] %v2173
      %2206 = vst [vmem:[#allocation2 + $0xb8] sm:$0xff] %v2174
      %2207 = vst [vmem:[#allocation2 + $0xc0] sm:$0xff] %v2175
      %2208 = vst [vmem:[#allocation2 + $0xc8] sm:$0xff] %v2176
      %2209 = vst [vmem:[#allocation2 + $0xd0] sm:$0xff] %v2177
      %2210 = vst [vmem:[#allocation2 + $0xd8] sm:$0xff] %v2178
      %2211 = vst [vmem:[#allocation2 + $0xe0] sm:$0xff] %v2179
      %2212 = vst [vmem:[#allocation2 + $0xe8] sm:$0xff] %v2180
      %2213 = vst [vmem:[#allocation2 + $0xf0] sm:$0xff] %v2181
      %2214 = vst [vmem:[#allocation2 + $0xf8] sm:$0xff] %v2182
      %v2215 = vld [vmem:[%s1792] sm:$0xe]
      %v2216 = vld [vmem:[%s1792 + $0x4] sm:$0xf]
      %v2217 = vld [vmem:[%s1792 + $0x8] sm:$0x1]
      %v2218 = vld [vmem:[%s1792 + $0xc] sm:$0xe]
      %v2219 = vld [vmem:[%s1792 + $0x10] sm:$0xf]
      %v2220 = vld [vmem:[%s1792 + $0x14] sm:$0x1]
      %v2221 = vld [vmem:[%s1792 + $0x18] sm:$0xe]
      %v2222 = vld [vmem:[%s1792 + $0x1c] sm:$0xf]
      %v2223 = vld [vmem:[%s1792 + $0x20] sm:$0x1]
      %v2224 = vld [vmem:[%s1792 + $0x24] sm:$0xe]
      %v2225 = vld [vmem:[%s1792 + $0x28] sm:$0xf]
      %v2226 = vld [vmem:[%s1792 + $0x2c] sm:$0x1]
      %v2227 = vld [vmem:[%s1792 + $0x30] sm:$0xe]
      %v2228 = vld [vmem:[%s1792 + $0x34] sm:$0xf]
      %v2229 = vld [vmem:[%s1792 + $0x38] sm:$0x1]
      %v2230 = vld [vmem:[%s1792 + $0x3c] sm:$0xe]
      %v2231 = vld [vmem:[%s1792 + $0x40] sm:$0xf]
      %v2232 = vld [vmem:[%s1792 + $0x44] sm:$0x1]
      %v2233 = vld [vmem:[%s1792 + $0x48] sm:$0xe]
      %v2234 = vld [vmem:[%s1792 + $0x4c] sm:$0xf]
      %v2235 = vld [vmem:[%s1792 + $0x50] sm:$0x1]
      %v2236 = vld [vmem:[%s1792 + $0x54] sm:$0xe]
      %v2237 = vld [vmem:[%s1792 + $0x58] sm:$0xf]
      %v2238 = vld [vmem:[%s1792 + $0x5c] sm:$0x1]
      %v2239 = vld [vmem:[%s1792 + $0x60] sm:$0xe]
      %v2240 = vld [vmem:[%s1792 + $0x64] sm:$0xf]
      %v2241 = vld [vmem:[%s1792 + $0x68] sm:$0x1]
      %v2242 = vld [vmem:[%s1792 + $0x6c] sm:$0xe]
      %v2243 = vld [vmem:[%s1792 + $0x70] sm:$0xf]
      %v2244 = vld [vmem:[%s1792 + $0x74] sm:$0x1]
      %v2245 = vld [vmem:[%s1792 + $0x78] sm:$0xe]
      %v2246 = vld [vmem:[%s1792 + $0x7c] sm:$0xf]
      %v2247 = vld [vmem:[%s1792 + $0x80] sm:$0x1]
      %v2248 = vld [vmem:[%s1792 + $0x84] sm:$0xe]
      %v2249 = vld [vmem:[%s1792 + $0x88] sm:$0xf]
      %v2250 = vld [vmem:[%s1792 + $0x8c] sm:$0x1]
      %v2251 = vld [vmem:[%s1792 + $0x90] sm:$0xe]
      %v2252 = vld [vmem:[%s1792 + $0x94] sm:$0xf]
      %v2253 = vld [vmem:[%s1792 + $0x98] sm:$0x1]
      %v2254 = vld [vmem:[%s1792 + $0x9c] sm:$0xe]
      %v2255 = vld [vmem:[%s1792 + $0xa0] sm:$0xf]
      %v2256 = vld [vmem:[%s1792 + $0xa4] sm:$0x1]
      %v2257 = vld [vmem:[%s1792 + $0xa8] sm:$0xe]
      %v2258 = vld [vmem:[%s1792 + $0xac] sm:$0xf]
      %v2259 = vld [vmem:[%s1792 + $0xb0] sm:$0x1]
      %v2260 = vld [vmem:[%s1792 + $0xb4] sm:$0xe]
      %v2261 = vld [vmem:[%s1792 + $0xb8] sm:$0xf]
      %v2262 = vld [vmem:[%s1792 + $0xbc] sm:$0x1]
      %v2311 = vrot.slane %v2215, 5
      %v2312 = vrot.slane %v2311, 4
      %v2313 = vrot.slane %v2216, 5
      %v2314 = vsel %vm752, %v2312, %v2313
      %v2315 = vrot.slane %v2313, 4
      %v2316 = vrot.slane %v2217, 5
      %v2317 = vsel %vm752, %v2315, %v2316
      %v2318 = vrot.slane %v2218, 5
      %v2319 = vrot.slane %v2318, 4
      %v2320 = vrot.slane %v2219, 5
      %v2321 = vsel %vm752, %v2319, %v2320
      %v2322 = vrot.slane %v2320, 4
      %v2323 = vrot.slane %v2220, 5
      %v2324 = vsel %vm752, %v2322, %v2323
      %v2325 = vrot.slane %v2221, 5
      %v2326 = vrot.slane %v2325, 4
      %v2327 = vrot.slane %v2222, 5
      %v2328 = vsel %vm752, %v2326, %v2327
      %v2329 = vrot.slane %v2327, 4
      %v2330 = vrot.slane %v2223, 5
      %v2331 = vsel %vm752, %v2329, %v2330
      %v2332 = vrot.slane %v2224, 5
      %v2333 = vrot.slane %v2332, 4
      %v2334 = vrot.slane %v2225, 5
      %v2335 = vsel %vm752, %v2333, %v2334
      %v2336 = vrot.slane %v2334, 4
      %v2337 = vrot.slane %v2226, 5
      %v2338 = vsel %vm752, %v2336, %v2337
      %v2339 = vrot.slane %v2227, 5
      %v2340 = vrot.slane %v2339, 4
      %v2341 = vrot.slane %v2228, 5
      %v2342 = vsel %vm752, %v2340, %v2341
      %v2343 = vrot.slane %v2341, 4
      %v2344 = vrot.slane %v2229, 5
      %v2345 = vsel %vm752, %v2343, %v2344
      %v2346 = vrot.slane %v2230, 5
      %v2347 = vrot.slane %v2346, 4
      %v2348 = vrot.slane %v2231, 5
      %v2349 = vsel %vm752, %v2347, %v2348
      %v2350 = vrot.slane %v2348, 4
      %v2351 = vrot.slane %v2232, 5
      %v2352 = vsel %vm752, %v2350, %v2351
      %v2353 = vrot.slane %v2233, 5
      %v2354 = vrot.slane %v2353, 4
      %v2355 = vrot.slane %v2234, 5
      %v2356 = vsel %vm752, %v2354, %v2355
      %v2357 = vrot.slane %v2355, 4
      %v2358 = vrot.slane %v2235, 5
      %v2359 = vsel %vm752, %v2357, %v2358
      %v2360 = vrot.slane %v2236, 5
      %v2361 = vrot.slane %v2360, 4
      %v2362 = vrot.slane %v2237, 5
      %v2363 = vsel %vm752, %v2361, %v2362
      %v2364 = vrot.slane %v2362, 4
      %v2365 = vrot.slane %v2238, 5
      %v2366 = vsel %vm752, %v2364, %v2365
      %v2367 = vrot.slane %v2239, 5
      %v2368 = vrot.slane %v2367, 4
      %v2369 = vrot.slane %v2240, 5
      %v2370 = vsel %vm752, %v2368, %v2369
      %v2371 = vrot.slane %v2369, 4
      %v2372 = vrot.slane %v2241, 5
      %v2373 = vsel %vm752, %v2371, %v2372
      %v2374 = vrot.slane %v2242, 5
      %v2375 = vrot.slane %v2374, 4
      %v2376 = vrot.slane %v2243, 5
      %v2377 = vsel %vm752, %v2375, %v2376
      %v2378 = vrot.slane %v2376, 4
      %v2379 = vrot.slane %v2244, 5
      %v2380 = vsel %vm752, %v2378, %v2379
      %v2381 = vrot.slane %v2245, 5
      %v2382 = vrot.slane %v2381, 4
      %v2383 = vrot.slane %v2246, 5
      %v2384 = vsel %vm752, %v2382, %v2383
      %v2385 = vrot.slane %v2383, 4
      %v2386 = vrot.slane %v2247, 5
      %v2387 = vsel %vm752, %v2385, %v2386
      %v2388 = vrot.slane %v2248, 5
      %v2389 = vrot.slane %v2388, 4
      %v2390 = vrot.slane %v2249, 5
      %v2391 = vsel %vm752, %v2389, %v2390
      %v2392 = vrot.slane %v2390, 4
      %v2393 = vrot.slane %v2250, 5
      %v2394 = vsel %vm752, %v2392, %v2393
      %v2395 = vrot.slane %v2251, 5
      %v2396 = vrot.slane %v2395, 4
      %v2397 = vrot.slane %v2252, 5
      %v2398 = vsel %vm752, %v2396, %v2397
      %v2399 = vrot.slane %v2397, 4
      %v2400 = vrot.slane %v2253, 5
      %v2401 = vsel %vm752, %v2399, %v2400
      %v2402 = vrot.slane %v2254, 5
      %v2403 = vrot.slane %v2402, 4
      %v2404 = vrot.slane %v2255, 5
      %v2405 = vsel %vm752, %v2403, %v2404
      %v2406 = vrot.slane %v2404, 4
      %v2407 = vrot.slane %v2256, 5
      %v2408 = vsel %vm752, %v2406, %v2407
      %v2409 = vrot.slane %v2257, 5
      %v2410 = vrot.slane %v2409, 4
      %v2411 = vrot.slane %v2258, 5
      %v2412 = vsel %vm752, %v2410, %v2411
      %v2413 = vrot.slane %v2411, 4
      %v2414 = vrot.slane %v2259, 5
      %v2415 = vsel %vm752, %v2413, %v2414
      %v2416 = vrot.slane %v2260, 5
      %v2417 = vrot.slane %v2416, 4
      %v2418 = vrot.slane %v2261, 5
      %v2419 = vsel %vm752, %v2417, %v2418
      %v2420 = vrot.slane %v2418, 4
      %v2421 = vrot.slane %v2262, 5
      %v2422 = vsel %vm752, %v2420, %v2421
      %v2423 = vld [vmem:[#allocation2] sm:$0xff]
      %v2424 = vld [vmem:[#allocation2 + $0x8] sm:$0xff]
      %v2425 = vld [vmem:[#allocation2 + $0x10] sm:$0xff]
      %v2426 = vld [vmem:[#allocation2 + $0x18] sm:$0xff]
      %v2427 = vld [vmem:[#allocation2 + $0x20] sm:$0xff]
      %v2428 = vld [vmem:[#allocation2 + $0x28] sm:$0xff]
      %v2429 = vld [vmem:[#allocation2 + $0x30] sm:$0xff]
      %v2430 = vld [vmem:[#allocation2 + $0x38] sm:$0xff]
      %v2431 = vld [vmem:[#allocation2 + $0x40] sm:$0xff]
      %v2432 = vld [vmem:[#allocation2 + $0x48] sm:$0xff]
      %v2433 = vld [vmem:[#allocation2 + $0x50] sm:$0xff]
      %v2434 = vld [vmem:[#allocation2 + $0x58] sm:$0xff]
      %v2435 = vld [vmem:[#allocation2 + $0x60] sm:$0xff]
      %v2436 = vld [vmem:[#allocation2 + $0x68] sm:$0xff]
      %v2437 = vld [vmem:[#allocation2 + $0x70] sm:$0xff]
      %v2438 = vld [vmem:[#allocation2 + $0x78] sm:$0xff]
      %v2439 = vld [vmem:[#allocation2 + $0x80] sm:$0xff]
      %v2440 = vld [vmem:[#allocation2 + $0x88] sm:$0xff]
      %v2441 = vld [vmem:[#allocation2 + $0x90] sm:$0xff]
      %v2442 = vld [vmem:[#allocation2 + $0x98] sm:$0xff]
      %v2443 = vld [vmem:[#allocation2 + $0xa0] sm:$0xff]
      %v2444 = vld [vmem:[#allocation2 + $0xa8] sm:$0xff]
      %v2445 = vld [vmem:[#allocation2 + $0xb0] sm:$0xff]
      %v2446 = vld [vmem:[#allocation2 + $0xb8] sm:$0xff]
      %v2447 = vld [vmem:[#allocation2 + $0xc0] sm:$0xff]
      %v2448 = vld [vmem:[#allocation2 + $0xc8] sm:$0xff]
      %v2449 = vld [vmem:[#allocation2 + $0xd0] sm:$0xff]
      %v2450 = vld [vmem:[#allocation2 + $0xd8] sm:$0xff]
      %v2451 = vld [vmem:[#allocation2 + $0xe0] sm:$0xff]
      %v2452 = vld [vmem:[#allocation2 + $0xe8] sm:$0xff]
      %v2453 = vld [vmem:[#allocation2 + $0xf0] sm:$0xff]
      %v2454 = vld [vmem:[#allocation2 + $0xf8] sm:$0xff]
      %s2455 = scalar_lea.vmem %s1, 8
      %v2456 = vld [vmem:[%s2455] sm:$0x3]
      %v2457 = vunpack.c.l.b16 %v2314
      %v2458 = vunpack.c.l.b16 %v2317
      %v2459 = vunpack.c.l.b16 %v2321
      %v2460 = vunpack.c.l.b16 %v2324
      %v2461 = vunpack.c.l.b16 %v2328
      %v2462 = vunpack.c.l.b16 %v2331
      %v2463 = vunpack.c.l.b16 %v2335
      %v2464 = vunpack.c.l.b16 %v2338
      %v2465 = vunpack.c.l.b16 %v2342
      %v2466 = vunpack.c.l.b16 %v2345
      %v2467 = vunpack.c.l.b16 %v2349
      %v2468 = vunpack.c.l.b16 %v2352
      %v2469 = vunpack.c.l.b16 %v2356
      %v2470 = vunpack.c.l.b16 %v2359
      %v2471 = vunpack.c.l.b16 %v2363
      %v2472 = vunpack.c.l.b16 %v2366
      %v2473 = vunpack.c.l.b16 %v2370
      %v2474 = vunpack.c.l.b16 %v2373
      %v2475 = vunpack.c.l.b16 %v2377
      %v2476 = vunpack.c.l.b16 %v2380
      %v2477 = vunpack.c.l.b16 %v2384
      %v2478 = vunpack.c.l.b16 %v2387
      %v2479 = vunpack.c.l.b16 %v2391
      %v2480 = vunpack.c.l.b16 %v2394
      %v2481 = vunpack.c.l.b16 %v2398
      %v2482 = vunpack.c.l.b16 %v2401
      %v2483 = vunpack.c.l.b16 %v2405
      %v2484 = vunpack.c.l.b16 %v2408
      %v2485 = vunpack.c.l.b16 %v2412
      %v2486 = vunpack.c.l.b16 %v2415
      %v2487 = vunpack.c.l.b16 %v2419
      %v2488 = vunpack.c.l.b16 %v2422
      %v2489 = vpack.c.b16 %v2458, %v2457
      %v2490 = vpack.c.b16 %v2460, %v2459
      %v2491 = vpack.c.b16 %v2462, %v2461
      %v2492 = vpack.c.b16 %v2464, %v2463
      %v2493 = vpack.c.b16 %v2466, %v2465
      %v2494 = vpack.c.b16 %v2468, %v2467
      %v2495 = vpack.c.b16 %v2470, %v2469
      %v2496 = vpack.c.b16 %v2472, %v2471
      %v2497 = vpack.c.b16 %v2474, %v2473
      %v2498 = vpack.c.b16 %v2476, %v2475
      %v2499 = vpack.c.b16 %v2478, %v2477
      %v2500 = vpack.c.b16 %v2480, %v2479
      %v2501 = vpack.c.b16 %v2482, %v2481
      %v2502 = vpack.c.b16 %v2484, %v2483
      %v2503 = vpack.c.b16 %v2486, %v2485
      %v2504 = vpack.c.b16 %v2488, %v2487
      %v2506 = vsel %vm376, %v2489, 0
      %v2509 = vsel %vm376, %v2490, 0
      %v2512 = vsel %vm376, %v2491, 0
      %v2515 = vsel %vm376, %v2492, 0
      %v2518 = vsel %vm376, %v2493, 0
      %v2521 = vsel %vm376, %v2494, 0
      %v2524 = vsel %vm376, %v2495, 0
      %v2527 = vsel %vm376, %v2496, 0
      %v2530 = vsel %vm376, %v2497, 0
      %v2533 = vsel %vm376, %v2498, 0
      %v2536 = vsel %vm376, %v2499, 0
      %v2539 = vsel %vm376, %v2500, 0
      %v2542 = vsel %vm376, %v2501, 0
      %v2545 = vsel %vm376, %v2502, 0
      %v2548 = vsel %vm376, %v2503, 0
      %v2551 = vsel %vm376, %v2504, 0
      %v2554 = vsel %vm425, %v2456, 0
      %2556 = vmatprep.subr.bf16.mxu0 0
      %2557 = vmatpush1.bf16.msra.mxu0 %v2554
      %2558 = vmatprep.subr.bf16.mxu0 0
      %2559 = vmatpush1.bf16.msra.mxu0 0
      %2560 = vmatprep.subr.bf16.mxu0 0
      %2561 = vmatpush1.bf16.msra.mxu0 0
      %2562 = vmatprep.subr.bf16.mxu0 0
      %2563 = vmatpush1.bf16.msra.mxu0 0
      %2564 = vmatprep.subr.bf16.mxu0 0
      %2565 = vmatpush1.bf16.msra.mxu0 0
      %2566 = vmatprep.subr.bf16.mxu0 0
      %2567 = vmatpush1.bf16.msra.mxu0 0
      %2568 = vmatprep.subr.bf16.mxu0 0
      %2569 = vmatpush1.bf16.msra.mxu0 0
      %2570 = vmatprep.subr.bf16.mxu0 0
      %2571 = vmatpush1.bf16.msra.mxu0 0
      %2572 = vmatprep.subr.bf16.mxu0 0
      %2573 = vmatpush1.bf16.msra.mxu0 0
      %2574 = vmatprep.subr.bf16.mxu0 0
      %2575 = vmatpush1.bf16.msra.mxu0 0
      %2576 = vmatprep.subr.bf16.mxu0 0
      %2577 = vmatpush1.bf16.msra.mxu0 0
      %2578 = vmatprep.subr.bf16.mxu0 0
      %2579 = vmatpush1.bf16.msra.mxu0 0
      %2580 = vmatprep.subr.bf16.mxu0 0
      %2581 = vmatpush1.bf16.msra.mxu0 0
      %2582 = vmatprep.subr.bf16.mxu0 0
      %2583 = vmatpush1.bf16.msra.mxu0 0
      %2584 = vmatprep.subr.bf16.mxu0 0
      %2585 = vmatpush1.bf16.msra.mxu0 0
      %2586 = vmatprep.subr.bf16.mxu0 0
      %2587 = vmatpush1.bf16.msra.mxu0 0
      %2588 = vmatprep.mubr.bf16.mxu0 0
      %2589 = vmatmul.mubr.bf16.gmra.mrb[0].mxu0 %v2506
      %v2590 = vpop.f32.mrb[0].mxu0
      %v2591 = vadd.f32 0.0, %v2590
      %v2592 = vpop.f32.mrb[0].mxu0
      %v2593 = vpop.f32.mrb[0].mxu0
      %v2594 = vadd.f32 0.0, %v2593
      %v2595 = vpop.f32.mrb[0].mxu0
      %2596 = vmatprep.mubr.bf16.mxu0 0
      %2597 = vmatmul.mubr.bf16.gmra.mrb[0].mxu0 %v2509
      %v2598 = vpop.f32.mrb[0].mxu0
      %v2599 = vadd.f32 0.0, %v2598
      %v2600 = vpop.f32.mrb[0].mxu0
      %v2601 = vpop.f32.mrb[0].mxu0
      %v2602 = vadd.f32 0.0, %v2601
      %v2603 = vpop.f32.mrb[0].mxu0
      %2604 = vmatprep.mubr.bf16.mxu0 0
      %2605 = vmatmul.mubr.bf16.gmra.mrb[0].mxu0 %v2512
      %v2606 = vpop.f32.mrb[0].mxu0
      %v2607 = vadd.f32 0.0, %v2606
      %v2608 = vpop.f32.mrb[0].mxu0
      %v2609 = vpop.f32.mrb[0].mxu0
      %v2610 = vadd.f32 0.0, %v2609
      %v2611 = vpop.f32.mrb[0].mxu0
      %2612 = vmatprep.mubr.bf16.mxu0 0
      %2613 = vmatmul.mubr.bf16.gmra.mrb[0].mxu0 %v2515
      %v2614 = vpop.f32.mrb[0].mxu0
      %v2615 = vadd.f32 0.0, %v2614
      %v2616 = vpop.f32.mrb[0].mxu0
      %v2617 = vpop.f32.mrb[0].mxu0
      %v2618 = vadd.f32 0.0, %v2617
      %v2619 = vpop.f32.mrb[0].mxu0
      %2620 = vmatprep.mubr.bf16.mxu0 0
      %2621 = vmatmul.mubr.bf16.gmra.mrb[0].mxu0 %v2518
      %v2622 = vpop.f32.mrb[0].mxu0
      %v2623 = vadd.f32 0.0, %v2622
      %v2624 = vpop.f32.mrb[0].mxu0
      %v2625 = vpop.f32.mrb[0].mxu0
      %v2626 = vadd.f32 0.0, %v2625
      %v2627 = vpop.f32.mrb[0].mxu0
      %2628 = vmatprep.mubr.bf16.mxu0 0
      %2629 = vmatmul.mubr.bf16.gmra.mrb[0].mxu0 %v2521
      %v2630 = vpop.f32.mrb[0].mxu0
      %v2631 = vadd.f32 0.0, %v2630
      %v2632 = vpop.f32.mrb[0].mxu0
      %v2633 = vpop.f32.mrb[0].mxu0
      %v2634 = vadd.f32 0.0, %v2633
      %v2635 = vpop.f32.mrb[0].mxu0
      %2636 = vmatprep.mubr.bf16.mxu0 0
      %2637 = vmatmul.mubr.bf16.gmra.mrb[0].mxu0 %v2524
      %v2638 = vpop.f32.mrb[0].mxu0
      %v2639 = vadd.f32 0.0, %v2638
      %v2640 = vpop.f32.mrb[0].mxu0
      %v2641 = vpop.f32.mrb[0].mxu0
      %v2642 = vadd.f32 0.0, %v2641
      %v2643 = vpop.f32.mrb[0].mxu0
      %2644 = vmatprep.mubr.bf16.mxu0 0
      %2645 = vmatmul.mubr.bf16.gmra.mrb[0].mxu0 %v2527
      %v2646 = vpop.f32.mrb[0].mxu0
      %v2647 = vadd.f32 0.0, %v2646
      %v2648 = vpop.f32.mrb[0].mxu0
      %v2649 = vpop.f32.mrb[0].mxu0
      %v2650 = vadd.f32 0.0, %v2649
      %v2651 = vpop.f32.mrb[0].mxu0
      %2652 = vmatprep.mubr.bf16.mxu0 0
      %2653 = vmatmul.mubr.bf16.gmra.mrb[0].mxu0 %v2530
      %v2654 = vpop.f32.mrb[0].mxu0
      %v2655 = vadd.f32 0.0, %v2654
      %v2656 = vpop.f32.mrb[0].mxu0
      %v2657 = vpop.f32.mrb[0].mxu0
      %v2658 = vadd.f32 0.0, %v2657
      %v2659 = vpop.f32.mrb[0].mxu0
      %2660 = vmatprep.mubr.bf16.mxu0 0
      %2661 = vmatmul.mubr.bf16.gmra.mrb[0].mxu0 %v2533
      %v2662 = vpop.f32.mrb[0].mxu0
      %v2663 = vadd.f32 0.0, %v2662
      %v2664 = vpop.f32.mrb[0].mxu0
      %v2665 = vpop.f32.mrb[0].mxu0
      %v2666 = vadd.f32 0.0, %v2665
      %v2667 = vpop.f32.mrb[0].mxu0
      %2668 = vmatprep.mubr.bf16.mxu0 0
      %2669 = vmatmul.mubr.bf16.gmra.mrb[0].mxu0 %v2536
      %v2670 = vpop.f32.mrb[0].mxu0
      %v2671 = vadd.f32 0.0, %v2670
      %v2672 = vpop.f32.mrb[0].mxu0
      %v2673 = vpop.f32.mrb[0].mxu0
      %v2674 = vadd.f32 0.0, %v2673
      %v2675 = vpop.f32.mrb[0].mxu0
      %2676 = vmatprep.mubr.bf16.mxu0 0
      %2677 = vmatmul.mubr.bf16.gmra.mrb[0].mxu0 %v2539
      %v2678 = vpop.f32.mrb[0].mxu0
      %v2679 = vadd.f32 0.0, %v2678
      %v2680 = vpop.f32.mrb[0].mxu0
      %v2681 = vpop.f32.mrb[0].mxu0
      %v2682 = vadd.f32 0.0, %v2681
      %v2683 = vpop.f32.mrb[0].mxu0
      %2684 = vmatprep.mubr.bf16.mxu0 0
      %2685 = vmatmul.mubr.bf16.gmra.mrb[0].mxu0 %v2542
      %v2686 = vpop.f32.mrb[0].mxu0
      %v2687 = vadd.f32 0.0, %v2686
      %v2688 = vpop.f32.mrb[0].mxu0
      %v2689 = vpop.f32.mrb[0].mxu0
      %v2690 = vadd.f32 0.0, %v2689
      %v2691 = vpop.f32.mrb[0].mxu0
      %2692 = vmatprep.mubr.bf16.mxu0 0
      %2693 = vmatmul.mubr.bf16.gmra.mrb[0].mxu0 %v2545
      %v2694 = vpop.f32.mrb[0].mxu0
      %v2695 = vadd.f32 0.0, %v2694
      %v2696 = vpop.f32.mrb[0].mxu0
      %v2697 = vpop.f32.mrb[0].mxu0
      %v2698 = vadd.f32 0.0, %v2697
      %v2699 = vpop.f32.mrb[0].mxu0
      %2700 = vmatprep.mubr.bf16.mxu0 0
      %2701 = vmatmul.mubr.bf16.gmra.mrb[0].mxu0 %v2548
      %v2702 = vpop.f32.mrb[0].mxu0
      %v2703 = vadd.f32 0.0, %v2702
      %v2704 = vpop.f32.mrb[0].mxu0
      %v2705 = vpop.f32.mrb[0].mxu0
      %v2706 = vadd.f32 0.0, %v2705
      %v2707 = vpop.f32.mrb[0].mxu0
      %2708 = vmatprep.mubr.bf16.mxu0 0
      %2709 = vmatmul.mubr.bf16.gmra.mrb[0].mxu0 %v2551
      %v2710 = vpop.f32.mrb[0].mxu0
      %v2711 = vadd.f32 0.0, %v2710
      %v2712 = vpop.f32.mrb[0].mxu0
      %v2713 = vpop.f32.mrb[0].mxu0
      %v2714 = vadd.f32 0.0, %v2713
      %v2715 = vpop.f32.mrb[0].mxu0
      %2716 = vdwg.mxu0
      %v2717 = vadd.f32 %v2423, %v2591
      %v2718 = vadd.f32 %v2424, %v2594
      %v2719 = vadd.f32 %v2425, %v2599
      %v2720 = vadd.f32 %v2426, %v2602
      %v2721 = vadd.f32 %v2427, %v2607
      %v2722 = vadd.f32 %v2428, %v2610
      %v2723 = vadd.f32 %v2429, %v2615
      %v2724 = vadd.f32 %v2430, %v2618
      %v2725 = vadd.f32 %v2431, %v2623
      %v2726 = vadd.f32 %v2432, %v2626
      %v2727 = vadd.f32 %v2433, %v2631
      %v2728 = vadd.f32 %v2434, %v2634
      %v2729 = vadd.f32 %v2435, %v2639
      %v2730 = vadd.f32 %v2436, %v2642
      %v2731 = vadd.f32 %v2437, %v2647
      %v2732 = vadd.f32 %v2438, %v2650
      %v2733 = vadd.f32 %v2439, %v2655
      %v2734 = vadd.f32 %v2440, %v2658
      %v2735 = vadd.f32 %v2441, %v2663
      %v2736 = vadd.f32 %v2442, %v2666
      %v2737 = vadd.f32 %v2443, %v2671
      %v2738 = vadd.f32 %v2444, %v2674
      %v2739 = vadd.f32 %v2445, %v2679
      %v2740 = vadd.f32 %v2446, %v2682
      %v2741 = vadd.f32 %v2447, %v2687
      %v2742 = vadd.f32 %v2448, %v2690
      %v2743 = vadd.f32 %v2449, %v2695
      %v2744 = vadd.f32 %v2450, %v2698
      %v2745 = vadd.f32 %v2451, %v2703
      %v2746 = vadd.f32 %v2452, %v2706
      %v2747 = vadd.f32 %v2453, %v2711
      %v2748 = vadd.f32 %v2454, %v2714
      %2749 = vst [vmem:[#allocation2] sm:$0xff] %v2717
      %2750 = vst [vmem:[#allocation2 + $0x8] sm:$0xff] %v2718
      %2751 = vst [vmem:[#allocation2 + $0x10] sm:$0xff] %v2719
      %2752 = vst [vmem:[#allocation2 + $0x18] sm:$0xff] %v2720
      %2753 = vst [vmem:[#allocation2 + $0x20] sm:$0xff] %v2721
      %2754 = vst [vmem:[#allocation2 + $0x28] sm:$0xff] %v2722
      %2755 = vst [vmem:[#allocation2 + $0x30] sm:$0xff] %v2723
      %2756 = vst [vmem:[#allocation2 + $0x38] sm:$0xff] %v2724
      %2757 = vst [vmem:[#allocation2 + $0x40] sm:$0xff] %v2725
      %2758 = vst [vmem:[#allocation2 + $0x48] sm:$0xff] %v2726
      %2759 = vst [vmem:[#allocation2 + $0x50] sm:$0xff] %v2727
      %2760 = vst [vmem:[#allocation2 + $0x58] sm:$0xff] %v2728
      %2761 = vst [vmem:[#allocation2 + $0x60] sm:$0xff] %v2729
      %2762 = vst [vmem:[#allocation2 + $0x68] sm:$0xff] %v2730
      %2763 = vst [vmem:[#allocation2 + $0x70] sm:$0xff] %v2731
      %2764 = vst [vmem:[#allocation2 + $0x78] sm:$0xff] %v2732
      %2765 = vst [vmem:[#allocation2 + $0x80] sm:$0xff] %v2733
      %2766 = vst [vmem:[#allocation2 + $0x88] sm:$0xff] %v2734
      %2767 = vst [vmem:[#allocation2 + $0x90] sm:$0xff] %v2735
      %2768 = vst [vmem:[#allocation2 + $0x98] sm:$0xff] %v2736
      %2769 = vst [vmem:[#allocation2 + $0xa0] sm:$0xff] %v2737
      %2770 = vst [vmem:[#allocation2 + $0xa8] sm:$0xff] %v2738
      %2771 = vst [vmem:[#allocation2 + $0xb0] sm:$0xff] %v2739
      %2772 = vst [vmem:[#allocation2 + $0xb8] sm:$0xff] %v2740
      %2773 = vst [vmem:[#allocation2 + $0xc0] sm:$0xff] %v2741
      %2774 = vst [vmem:[#allocation2 + $0xc8] sm:$0xff] %v2742
      %2775 = vst [vmem:[#allocation2 + $0xd0] sm:$0xff] %v2743
      %2776 = vst [vmem:[#allocation2 + $0xd8] sm:$0xff] %v2744
      %2777 = vst [vmem:[#allocation2 + $0xe0] sm:$0xff] %v2745
      %2778 = vst [vmem:[#allocation2 + $0xe8] sm:$0xff] %v2746
      %2779 = vst [vmem:[#allocation2 + $0xf0] sm:$0xff] %v2747
      %2780 = vst [vmem:[#allocation2 + $0xf8] sm:$0xff] %v2748
      %v2781 = vld [vmem:[%s1792] sm:$0xc]
      %v2782 = vld [vmem:[%s1792 + $0x4] sm:$0xf]
      %v2783 = vld [vmem:[%s1792 + $0x8] sm:$0x3]
      %v2784 = vld [vmem:[%s1792 + $0xc] sm:$0xc]
      %v2785 = vld [vmem:[%s1792 + $0x10] sm:$0xf]
      %v2786 = vld [vmem:[%s1792 + $0x14] sm:$0x3]
      %v2787 = vld [vmem:[%s1792 + $0x18] sm:$0xc]
      %v2788 = vld [vmem:[%s1792 + $0x1c] sm:$0xf]
      %v2789 = vld [vmem:[%s1792 + $0x20] sm:$0x3]
      %v2790 = vld [vmem:[%s1792 + $0x24] sm:$0xc]
      %v2791 = vld [vmem:[%s1792 + $0x28] sm:$0xf]
      %v2792 = vld [vmem:[%s1792 + $0x2c] sm:$0x3]
      %v2793 = vld [vmem:[%s1792 + $0x30] sm:$0xc]
      %v2794 = vld [vmem:[%s1792 + $0x34] sm:$0xf]
      %v2795 = vld [vmem:[%s1792 + $0x38] sm:$0x3]
      %v2796 = vld [vmem:[%s1792 + $0x3c] sm:$0xc]
      %v2797 = vld [vmem:[%s1792 + $0x40] sm:$0xf]
      %v2798 = vld [vmem:[%s1792 + $0x44] sm:$0x3]
      %v2799 = vld [vmem:[%s1792 + $0x48] sm:$0xc]
      %v2800 = vld [vmem:[%s1792 + $0x4c] sm:$0xf]
      %v2801 = vld [vmem:[%s1792 + $0x50] sm:$0x3]
      %v2802 = vld [vmem:[%s1792 + $0x54] sm:$0xc]
      %v2803 = vld [vmem:[%s1792 + $0x58] sm:$0xf]
      %v2804 = vld [vmem:[%s1792 + $0x5c] sm:$0x3]
      %v2805 = vld [vmem:[%s1792 + $0x60] sm:$0xc]
      %v2806 = vld [vmem:[%s1792 + $0x64] sm:$0xf]
      %v2807 = vld [vmem:[%s1792 + $0x68] sm:$0x3]
      %v2808 = vld [vmem:[%s1792 + $0x6c] sm:$0xc]
      %v2809 = vld [vmem:[%s1792 + $0x70] sm:$0xf]
      %v2810 = vld [vmem:[%s1792 + $0x74] sm:$0x3]
      %v2811 = vld [vmem:[%s1792 + $0x78] sm:$0xc]
      %v2812 = vld [vmem:[%s1792 + $0x7c] sm:$0xf]
      %v2813 = vld [vmem:[%s1792 + $0x80] sm:$0x3]
      %v2814 = vld [vmem:[%s1792 + $0x84] sm:$0xc]
      %v2815 = vld [vmem:[%s1792 + $0x88] sm:$0xf]
      %v2816 = vld [vmem:[%s1792 + $0x8c] sm:$0x3]
      %v2817 = vld [vmem:[%s1792 + $0x90] sm:$0xc]
      %v2818 = vld [vmem:[%s1792 + $0x94] sm:$0xf]
      %v2819 = vld [vmem:[%s1792 + $0x98] sm:$0x3]
      %v2820 = vld [vmem:[%s1792 + $0x9c] sm:$0xc]
      %v2821 = vld [vmem:[%s1792 + $0xa0] sm:$0xf]
      %v2822 = vld [vmem:[%s1792 + $0xa4] sm:$0x3]
      %v2823 = vld [vmem:[%s1792 + $0xa8] sm:$0xc]
      %v2824 = vld [vmem:[%s1792 + $0xac] sm:$0xf]
      %v2825 = vld [vmem:[%s1792 + $0xb0] sm:$0x3]
      %v2826 = vld [vmem:[%s1792 + $0xb4] sm:$0xc]
      %v2827 = vld [vmem:[%s1792 + $0xb8] sm:$0xf]
      %v2828 = vld [vmem:[%s1792 + $0xbc] sm:$0x3]
      %v2877 = vrot.slane %v2781, 6
      %v2878 = vrot.slane %v2877, 4
      %v2879 = vrot.slane %v2782, 6
      %v2880 = vsel %vm1321, %v2878, %v2879
      %v2881 = vrot.slane %v2879, 4
      %v2882 = vrot.slane %v2783, 6
      %v2883 = vsel %vm1321, %v2881, %v2882
      %v2884 = vrot.slane %v2784, 6
      %v2885 = vrot.slane %v2884, 4
      %v2886 = vrot.slane %v2785, 6
      %v2887 = vsel %vm1321, %v2885, %v2886
      %v2888 = vrot.slane %v2886, 4
      %v2889 = vrot.slane %v2786, 6
      %v2890 = vsel %vm1321, %v2888, %v2889
      %v2891 = vrot.slane %v2787, 6
      %v2892 = vrot.slane %v2891, 4
      %v2893 = vrot.slane %v2788, 6
      %v2894 = vsel %vm1321, %v2892, %v2893
      %v2895 = vrot.slane %v2893, 4
      %v2896 = vrot.slane %v2789, 6
      %v2897 = vsel %vm1321, %v2895, %v2896
      %v2898 = vrot.slane %v2790, 6
      %v2899 = vrot.slane %v2898, 4
      %v2900 = vrot.slane %v2791, 6
      %v2901 = vsel %vm1321, %v2899, %v2900
      %v2902 = vrot.slane %v2900, 4
      %v2903 = vrot.slane %v2792, 6
      %v2904 = vsel %vm1321, %v2902, %v2903
      %v2905 = vrot.slane %v2793, 6
      %v2906 = vrot.slane %v2905, 4
      %v2907 = vrot.slane %v2794, 6
      %v2908 = vsel %vm1321, %v2906, %v2907
      %v2909 = vrot.slane %v2907, 4
      %v2910 = vrot.slane %v2795, 6
      %v2911 = vsel %vm1321, %v2909, %v2910
      %v2912 = vrot.slane %v2796, 6
      %v2913 = vrot.slane %v2912, 4
      %v2914 = vrot.slane %v2797, 6
      %v2915 = vsel %vm1321, %v2913, %v2914
      %v2916 = vrot.slane %v2914, 4
      %v2917 = vrot.slane %v2798, 6
      %v2918 = vsel %vm1321, %v2916, %v2917
      %v2919 = vrot.slane %v2799, 6
      %v2920 = vrot.slane %v2919, 4
      %v2921 = vrot.slane %v2800, 6
      %v2922 = vsel %vm1321, %v2920, %v2921
      %v2923 = vrot.slane %v2921, 4
      %v2924 = vrot.slane %v2801, 6
      %v2925 = vsel %vm1321, %v2923, %v2924
      %v2926 = vrot.slane %v2802, 6
      %v2927 = vrot.slane %v2926, 4
      %v2928 = vrot.slane %v2803, 6
      %v2929 = vsel %vm1321, %v2927, %v2928
      %v2930 = vrot.slane %v2928, 4
      %v2931 = vrot.slane %v2804, 6
      %v2932 = vsel %vm1321, %v2930, %v2931
      %v2933 = vrot.slane %v2805, 6
      %v2934 = vrot.slane %v2933, 4
      %v2935 = vrot.slane %v2806, 6
      %v2936 = vsel %vm1321, %v2934, %v2935
      %v2937 = vrot.slane %v2935, 4
      %v2938 = vrot.slane %v2807, 6
      %v2939 = vsel %vm1321, %v2937, %v2938
      %v2940 = vrot.slane %v2808, 6
      %v2941 = vrot.slane %v2940, 4
      %v2942 = vrot.slane %v2809, 6
      %v2943 = vsel %vm1321, %v2941, %v2942
      %v2944 = vrot.slane %v2942, 4
      %v2945 = vrot.slane %v2810, 6
      %v2946 = vsel %vm1321, %v2944, %v2945
      %v2947 = vrot.slane %v2811, 6
      %v2948 = vrot.slane %v2947, 4
      %v2949 = vrot.slane %v2812, 6
      %v2950 = vsel %vm1321, %v2948, %v2949
      %v2951 = vrot.slane %v2949, 4
      %v2952 = vrot.slane %v2813, 6
      %v2953 = vsel %vm1321, %v2951, %v2952
      %v2954 = vrot.slane %v2814, 6
      %v2955 = vrot.slane %v2954, 4
      %v2956 = vrot.slane %v2815, 6
      %v2957 = vsel %vm1321, %v2955, %v2956
      %v2958 = vrot.slane %v2956, 4
      %v2959 = vrot.slane %v2816, 6
      %v2960 = vsel %vm1321, %v2958, %v2959
      %v2961 = vrot.slane %v2817, 6
      %v2962 = vrot.slane %v2961, 4
      %v2963 = vrot.slane %v2818, 6
      %v2964 = vsel %vm1321, %v2962, %v2963
      %v2965 = vrot.slane %v2963, 4
      %v2966 = vrot.slane %v2819, 6
      %v2967 = vsel %vm1321, %v2965, %v2966
      %v2968 = vrot.slane %v2820, 6
      %v2969 = vrot.slane %v2968, 4
      %v2970 = vrot.slane %v2821, 6
      %v2971 = vsel %vm1321, %v2969, %v2970
      %v2972 = vrot.slane %v2970, 4
      %v2973 = vrot.slane %v2822, 6
      %v2974 = vsel %vm1321, %v2972, %v2973
      %v2975 = vrot.slane %v2823, 6
      %v2976 = vrot.slane %v2975, 4
      %v2977 = vrot.slane %v2824, 6
      %v2978 = vsel %vm1321, %v2976, %v2977
      %v2979 = vrot.slane %v2977, 4
      %v2980 = vrot.slane %v2825, 6
      %v2981 = vsel %vm1321, %v2979, %v2980
      %v2982 = vrot.slane %v2826, 6
      %v2983 = vrot.slane %v2982, 4
      %v2984 = vrot.slane %v2827, 6
      %v2985 = vsel %vm1321, %v2983, %v2984
      %v2986 = vrot.slane %v2984, 4
      %v2987 = vrot.slane %v2828, 6
      %v2988 = vsel %vm1321, %v2986, %v2987
      %v2989 = vld [vmem:[#allocation2] sm:$0xff]
      %v2990 = vld [vmem:[#allocation2 + $0x8] sm:$0xff]
      %v2991 = vld [vmem:[#allocation2 + $0x10] sm:$0xff]
      %v2992 = vld [vmem:[#allocation2 + $0x18] sm:$0xff]
      %v2993 = vld [vmem:[#allocation2 + $0x20] sm:$0xff]
      %v2994 = vld [vmem:[#allocation2 + $0x28] sm:$0xff]
      %v2995 = vld [vmem:[#allocation2 + $0x30] sm:$0xff]
      %v2996 = vld [vmem:[#allocation2 + $0x38] sm:$0xff]
      %v2997 = vld [vmem:[#allocation2 + $0x40] sm:$0xff]
      %v2998 = vld [vmem:[#allocation2 + $0x48] sm:$0xff]
      %v2999 = vld [vmem:[#allocation2 + $0x50] sm:$0xff]
      %v3000 = vld [vmem:[#allocation2 + $0x58] sm:$0xff]
      %v3001 = vld [vmem:[#allocation2 + $0x60] sm:$0xff]
      %v3002 = vld [vmem:[#allocation2 + $0x68] sm:$0xff]
      %v3003 = vld [vmem:[#allocation2 + $0x70] sm:$0xff]
      %v3004 = vld [vmem:[#allocation2 + $0x78] sm:$0xff]
      %v3005 = vld [vmem:[#allocation2 + $0x80] sm:$0xff]
      %v3006 = vld [vmem:[#allocation2 + $0x88] sm:$0xff]
      %v3007 = vld [vmem:[#allocation2 + $0x90] sm:$0xff]
      %v3008 = vld [vmem:[#allocation2 + $0x98] sm:$0xff]
      %v3009 = vld [vmem:[#allocation2 + $0xa0] sm:$0xff]
      %v3010 = vld [vmem:[#allocation2 + $0xa8] sm:$0xff]
      %v3011 = vld [vmem:[#allocation2 + $0xb0] sm:$0xff]
      %v3012 = vld [vmem:[#allocation2 + $0xb8] sm:$0xff]
      %v3013 = vld [vmem:[#allocation2 + $0xc0] sm:$0xff]
      %v3014 = vld [vmem:[#allocation2 + $0xc8] sm:$0xff]
      %v3015 = vld [vmem:[#allocation2 + $0xd0] sm:$0xff]
      %v3016 = vld [vmem:[#allocation2 + $0xd8] sm:$0xff]
      %v3017 = vld [vmem:[#allocation2 + $0xe0] sm:$0xff]
      %v3018 = vld [vmem:[#allocation2 + $0xe8] sm:$0xff]
      %v3019 = vld [vmem:[#allocation2 + $0xf0] sm:$0xff]
      %v3020 = vld [vmem:[#allocation2 + $0xf8] sm:$0xff]
      %s3021 = scalar_lea.vmem %s1, 10
      %v3022 = vld [vmem:[%s3021] sm:$0x3]
      %v3023 = vunpack.c.l.b16 %v2880
      %v3024 = vunpack.c.l.b16 %v2883
      %v3025 = vunpack.c.l.b16 %v2887
      %v3026 = vunpack.c.l.b16 %v2890
      %v3027 = vunpack.c.l.b16 %v2894
      %v3028 = vunpack.c.l.b16 %v2897
      %v3029 = vunpack.c.l.b16 %v2901
      %v3030 = vunpack.c.l.b16 %v2904
      %v3031 = vunpack.c.l.b16 %v2908
      %v3032 = vunpack.c.l.b16 %v2911
      %v3033 = vunpack.c.l.b16 %v2915
      %v3034 = vunpack.c.l.b16 %v2918
      %v3035 = vunpack.c.l.b16 %v2922
      %v3036 = vunpack.c.l.b16 %v2925
      %v3037 = vunpack.c.l.b16 %v2929
      %v3038 = vunpack.c.l.b16 %v2932
      %v3039 = vunpack.c.l.b16 %v2936
      %v3040 = vunpack.c.l.b16 %v2939
      %v3041 = vunpack.c.l.b16 %v2943
      %v3042 = vunpack.c.l.b16 %v2946
      %v3043 = vunpack.c.l.b16 %v2950
      %v3044 = vunpack.c.l.b16 %v2953
      %v3045 = vunpack.c.l.b16 %v2957
      %v3046 = vunpack.c.l.b16 %v2960
      %v3047 = vunpack.c.l.b16 %v2964
      %v3048 = vunpack.c.l.b16 %v2967
      %v3049 = vunpack.c.l.b16 %v2971
      %v3050 = vunpack.c.l.b16 %v2974
      %v3051 = vunpack.c.l.b16 %v2978
      %v3052 = vunpack.c.l.b16 %v2981
      %v3053 = vunpack.c.l.b16 %v2985
      %v3054 = vunpack.c.l.b16 %v2988
      %v3055 = vpack.c.b16 %v3024, %v3023
      %v3056 = vpack.c.b16 %v3026, %v3025
      %v3057 = vpack.c.b16 %v3028, %v3027
      %v3058 = vpack.c.b16 %v3030, %v3029
      %v3059 = vpack.c.b16 %v3032, %v3031
      %v3060 = vpack.c.b16 %v3034, %v3033
      %v3061 = vpack.c.b16 %v3036, %v3035
      %v3062 = vpack.c.b16 %v3038, %v3037
      %v3063 = vpack.c.b16 %v3040, %v3039
      %v3064 = vpack.c.b16 %v3042, %v3041
      %v3065 = vpack.c.b16 %v3044, %v3043
      %v3066 = vpack.c.b16 %v3046, %v3045
      %v3067 = vpack.c.b16 %v3048, %v3047
      %v3068 = vpack.c.b16 %v3050, %v3049
      %v3069 = vpack.c.b16 %v3052, %v3051
      %v3070 = vpack.c.b16 %v3054, %v3053
      %v3072 = vsel %vm376, %v3055, 0
      %v3075 = vsel %vm376, %v3056, 0
      %v3078 = vsel %vm376, %v3057, 0
      %v3081 = vsel %vm376, %v3058, 0
      %v3084 = vsel %vm376, %v3059, 0
      %v3087 = vsel %vm376, %v3060, 0
      %v3090 = vsel %vm376, %v3061, 0
      %v3093 = vsel %vm376, %v3062, 0
      %v3096 = vsel %vm376, %v3063, 0
      %v3099 = vsel %vm376, %v3064, 0
      %v3102 = vsel %vm376, %v3065, 0
      %v3105 = vsel %vm376, %v3066, 0
      %v3108 = vsel %vm376, %v3067, 0
      %v3111 = vsel %vm376, %v3068, 0
      %v3114 = vsel %vm376, %v3069, 0
      %v3117 = vsel %vm376, %v3070, 0
      %v3120 = vsel %vm425, %v3022, 0
      %3122 = vmatprep.subr.bf16.mxu0 0
      %3123 = vmatpush1.bf16.msra.mxu0 %v3120
      %3124 = vmatprep.subr.bf16.mxu0 0
      %3125 = vmatpush1.bf16.msra.mxu0 0
      %3126 = vmatprep.subr.bf16.mxu0 0
      %3127 = vmatpush1.bf16.msra.mxu0 0
      %3128 = vmatprep.subr.bf16.mxu0 0
      %3129 = vmatpush1.bf16.msra.mxu0 0
      %3130 = vmatprep.subr.bf16.mxu0 0
      %3131 = vmatpush1.bf16.msra.mxu0 0
      %3132 = vmatprep.subr.bf16.mxu0 0
      %3133 = vmatpush1.bf16.msra.mxu0 0
      %3134 = vmatprep.subr.bf16.mxu0 0
      %3135 = vmatpush1.bf16.msra.mxu0 0
      %3136 = vmatprep.subr.bf16.mxu0 0
      %3137 = vmatpush1.bf16.msra.mxu0 0
      %3138 = vmatprep.subr.bf16.mxu0 0
      %3139 = vmatpush1.bf16.msra.mxu0 0
      %3140 = vmatprep.subr.bf16.mxu0 0
      %3141 = vmatpush1.bf16.msra.mxu0 0
      %3142 = vmatprep.subr.bf16.mxu0 0
      %3143 = vmatpush1.bf16.msra.mxu0 0
      %3144 = vmatprep.subr.bf16.mxu0 0
      %3145 = vmatpush1.bf16.msra.mxu0 0
      %3146 = vmatprep.subr.bf16.mxu0 0
      %3147 = vmatpush1.bf16.msra.mxu0 0
      %3148 = vmatprep.subr.bf16.mxu0 0
      %3149 = vmatpush1.bf16.msra.mxu0 0
      %3150 = vmatprep.subr.bf16.mxu0 0
      %3151 = vmatpush1.bf16.msra.mxu0 0
      %3152 = vmatprep.subr.bf16.mxu0 0
      %3153 = vmatpush1.bf16.msra.mxu0 0
      %3154 = vmatprep.mubr.bf16.mxu0 0
      %3155 = vmatmul.mubr.bf16.gmra.mrb[0].mxu0 %v3072
      %v3156 = vpop.f32.mrb[0].mxu0
      %v3157 = vadd.f32 0.0, %v3156
      %v3158 = vpop.f32.mrb[0].mxu0
      %v3159 = vpop.f32.mrb[0].mxu0
      %v3160 = vadd.f32 0.0, %v3159
      %v3161 = vpop.f32.mrb[0].mxu0
      %3162 = vmatprep.mubr.bf16.mxu0 0
      %3163 = vmatmul.mubr.bf16.gmra.mrb[0].mxu0 %v3075
      %v3164 = vpop.f32.mrb[0].mxu0
      %v3165 = vadd.f32 0.0, %v3164
      %v3166 = vpop.f32.mrb[0].mxu0
      %v3167 = vpop.f32.mrb[0].mxu0
      %v3168 = vadd.f32 0.0, %v3167
      %v3169 = vpop.f32.mrb[0].mxu0
      %3170 = vmatprep.mubr.bf16.mxu0 0
      %3171 = vmatmul.mubr.bf16.gmra.mrb[0].mxu0 %v3078
      %v3172 = vpop.f32.mrb[0].mxu0
      %v3173 = vadd.f32 0.0, %v3172
      %v3174 = vpop.f32.mrb[0].mxu0
      %v3175 = vpop.f32.mrb[0].mxu0
      %v3176 = vadd.f32 0.0, %v3175
      %v3177 = vpop.f32.mrb[0].mxu0
      %3178 = vmatprep.mubr.bf16.mxu0 0
      %3179 = vmatmul.mubr.bf16.gmra.mrb[0].mxu0 %v3081
      %v3180 = vpop.f32.mrb[0].mxu0
      %v3181 = vadd.f32 0.0, %v3180
      %v3182 = vpop.f32.mrb[0].mxu0
      %v3183 = vpop.f32.mrb[0].mxu0
      %v3184 = vadd.f32 0.0, %v3183
      %v3185 = vpop.f32.mrb[0].mxu0
      %3186 = vmatprep.mubr.bf16.mxu0 0
      %3187 = vmatmul.mubr.bf16.gmra.mrb[0].mxu0 %v3084
      %v3188 = vpop.f32.mrb[0].mxu0
      %v3189 = vadd.f32 0.0, %v3188
      %v3190 = vpop.f32.mrb[0].mxu0
      %v3191 = vpop.f32.mrb[0].mxu0
      %v3192 = vadd.f32 0.0, %v3191
      %v3193 = vpop.f32.mrb[0].mxu0
      %3194 = vmatprep.mubr.bf16.mxu0 0
      %3195 = vmatmul.mubr.bf16.gmra.mrb[0].mxu0 %v3087
      %v3196 = vpop.f32.mrb[0].mxu0
      %v3197 = vadd.f32 0.0, %v3196
      %v3198 = vpop.f32.mrb[0].mxu0
      %v3199 = vpop.f32.mrb[0].mxu0
      %v3200 = vadd.f32 0.0, %v3199
      %v3201 = vpop.f32.mrb[0].mxu0
      %3202 = vmatprep.mubr.bf16.mxu0 0
      %3203 = vmatmul.mubr.bf16.gmra.mrb[0].mxu0 %v3090
      %v3204 = vpop.f32.mrb[0].mxu0
      %v3205 = vadd.f32 0.0, %v3204
      %v3206 = vpop.f32.mrb[0].mxu0
      %v3207 = vpop.f32.mrb[0].mxu0
      %v3208 = vadd.f32 0.0, %v3207
      %v3209 = vpop.f32.mrb[0].mxu0
      %3210 = vmatprep.mubr.bf16.mxu0 0
      %3211 = vmatmul.mubr.bf16.gmra.mrb[0].mxu0 %v3093
      %v3212 = vpop.f32.mrb[0].mxu0
      %v3213 = vadd.f32 0.0, %v3212
      %v3214 = vpop.f32.mrb[0].mxu0
      %v3215 = vpop.f32.mrb[0].mxu0
      %v3216 = vadd.f32 0.0, %v3215
      %v3217 = vpop.f32.mrb[0].mxu0
      %3218 = vmatprep.mubr.bf16.mxu0 0
      %3219 = vmatmul.mubr.bf16.gmra.mrb[0].mxu0 %v3096
      %v3220 = vpop.f32.mrb[0].mxu0
      %v3221 = vadd.f32 0.0, %v3220
      %v3222 = vpop.f32.mrb[0].mxu0
      %v3223 = vpop.f32.mrb[0].mxu0
      %v3224 = vadd.f32 0.0, %v3223
      %v3225 = vpop.f32.mrb[0].mxu0
      %3226 = vmatprep.mubr.bf16.mxu0 0
      %3227 = vmatmul.mubr.bf16.gmra.mrb[0].mxu0 %v3099
      %v3228 = vpop.f32.mrb[0].mxu0
      %v3229 = vadd.f32 0.0, %v3228
      %v3230 = vpop.f32.mrb[0].mxu0
      %v3231 = vpop.f32.mrb[0].mxu0
      %v3232 = vadd.f32 0.0, %v3231
      %v3233 = vpop.f32.mrb[0].mxu0
      %3234 = vmatprep.mubr.bf16.mxu0 0
      %3235 = vmatmul.mubr.bf16.gmra.mrb[0].mxu0 %v3102
      %v3236 = vpop.f32.mrb[0].mxu0
      %v3237 = vadd.f32 0.0, %v3236
      %v3238 = vpop.f32.mrb[0].mxu0
      %v3239 = vpop.f32.mrb[0].mxu0
      %v3240 = vadd.f32 0.0, %v3239
      %v3241 = vpop.f32.mrb[0].mxu0
      %3242 = vmatprep.mubr.bf16.mxu0 0
      %3243 = vmatmul.mubr.bf16.gmra.mrb[0].mxu0 %v3105
      %v3244 = vpop.f32.mrb[0].mxu0
      %v3245 = vadd.f32 0.0, %v3244
      %v3246 = vpop.f32.mrb[0].mxu0
      %v3247 = vpop.f32.mrb[0].mxu0
      %v3248 = vadd.f32 0.0, %v3247
      %v3249 = vpop.f32.mrb[0].mxu0
      %3250 = vmatprep.mubr.bf16.mxu0 0
      %3251 = vmatmul.mubr.bf16.gmra.mrb[0].mxu0 %v3108
      %v3252 = vpop.f32.mrb[0].mxu0
      %v3253 = vadd.f32 0.0, %v3252
      %v3254 = vpop.f32.mrb[0].mxu0
      %v3255 = vpop.f32.mrb[0].mxu0
      %v3256 = vadd.f32 0.0, %v3255
      %v3257 = vpop.f32.mrb[0].mxu0
      %3258 = vmatprep.mubr.bf16.mxu0 0
      %3259 = vmatmul.mubr.bf16.gmra.mrb[0].mxu0 %v3111
      %v3260 = vpop.f32.mrb[0].mxu0
      %v3261 = vadd.f32 0.0, %v3260
      %v3262 = vpop.f32.mrb[0].mxu0
      %v3263 = vpop.f32.mrb[0].mxu0
      %v3264 = vadd.f32 0.0, %v3263
      %v3265 = vpop.f32.mrb[0].mxu0
      %3266 = vmatprep.mubr.bf16.mxu0 0
      %3267 = vmatmul.mubr.bf16.gmra.mrb[0].mxu0 %v3114
      %v3268 = vpop.f32.mrb[0].mxu0
      %v3269 = vadd.f32 0.0, %v3268
      %v3270 = vpop.f32.mrb[0].mxu0
      %v3271 = vpop.f32.mrb[0].mxu0
      %v3272 = vadd.f32 0.0, %v3271
      %v3273 = vpop.f32.mrb[0].mxu0
      %3274 = vmatprep.mubr.bf16.mxu0 0
      %3275 = vmatmul.mubr.bf16.gmra.mrb[0].mxu0 %v3117
      %v3276 = vpop.f32.mrb[0].mxu0
      %v3277 = vadd.f32 0.0, %v3276
      %v3278 = vpop.f32.mrb[0].mxu0
      %v3279 = vpop.f32.mrb[0].mxu0
      %v3280 = vadd.f32 0.0, %v3279
      %v3281 = vpop.f32.mrb[0].mxu0
      %3282 = vdwg.mxu0
      %v3283 = vadd.f32 %v2989, %v3157
      %v3284 = vadd.f32 %v2990, %v3160
      %v3285 = vadd.f32 %v2991, %v3165
      %v3286 = vadd.f32 %v2992, %v3168
      %v3287 = vadd.f32 %v2993, %v3173
      %v3288 = vadd.f32 %v2994, %v3176
      %v3289 = vadd.f32 %v2995, %v3181
      %v3290 = vadd.f32 %v2996, %v3184
      %v3291 = vadd.f32 %v2997, %v3189
      %v3292 = vadd.f32 %v2998, %v3192
      %v3293 = vadd.f32 %v2999, %v3197
      %v3294 = vadd.f32 %v3000, %v3200
      %v3295 = vadd.f32 %v3001, %v3205
      %v3296 = vadd.f32 %v3002, %v3208
      %v3297 = vadd.f32 %v3003, %v3213
      %v3298 = vadd.f32 %v3004, %v3216
      %v3299 = vadd.f32 %v3005, %v3221
      %v3300 = vadd.f32 %v3006, %v3224
      %v3301 = vadd.f32 %v3007, %v3229
      %v3302 = vadd.f32 %v3008, %v3232
      %v3303 = vadd.f32 %v3009, %v3237
      %v3304 = vadd.f32 %v3010, %v3240
      %v3305 = vadd.f32 %v3011, %v3245
      %v3306 = vadd.f32 %v3012, %v3248
      %v3307 = vadd.f32 %v3013, %v3253
      %v3308 = vadd.f32 %v3014, %v3256
      %v3309 = vadd.f32 %v3015, %v3261
      %v3310 = vadd.f32 %v3016, %v3264
      %v3311 = vadd.f32 %v3017, %v3269
      %v3312 = vadd.f32 %v3018, %v3272
      %v3313 = vadd.f32 %v3019, %v3277
      %v3314 = vadd.f32 %v3020, %v3280
      %3315 = vst [vmem:[#allocation2] sm:$0xff] %v3283
      %3316 = vst [vmem:[#allocation2 + $0x8] sm:$0xff] %v3284
      %3317 = vst [vmem:[#allocation2 + $0x10] sm:$0xff] %v3285
      %3318 = vst [vmem:[#allocation2 + $0x18] sm:$0xff] %v3286
      %3319 = vst [vmem:[#allocation2 + $0x20] sm:$0xff] %v3287
      %3320 = vst [vmem:[#allocation2 + $0x28] sm:$0xff] %v3288
      %3321 = vst [vmem:[#allocation2 + $0x30] sm:$0xff] %v3289
      %3322 = vst [vmem:[#allocation2 + $0x38] sm:$0xff] %v3290
      %3323 = vst [vmem:[#allocation2 + $0x40] sm:$0xff] %v3291
      %3324 = vst [vmem:[#allocation2 + $0x48] sm:$0xff] %v3292
      %3325 = vst [vmem:[#allocation2 + $0x50] sm:$0xff] %v3293
      %3326 = vst [vmem:[#allocation2 + $0x58] sm:$0xff] %v3294
      %3327 = vst [vmem:[#allocation2 + $0x60] sm:$0xff] %v3295
      %3328 = vst [vmem:[#allocation2 + $0x68] sm:$0xff] %v3296
      %3329 = vst [vmem:[#allocation2 + $0x70] sm:$0xff] %v3297
      %3330 = vst [vmem:[#allocation2 + $0x78] sm:$0xff] %v3298
      %3331 = vst [vmem:[#allocation2 + $0x80] sm:$0xff] %v3299
      %3332 = vst [vmem:[#allocation2 + $0x88] sm:$0xff] %v3300
      %3333 = vst [vmem:[#allocation2 + $0x90] sm:$0xff] %v3301
      %3334 = vst [vmem:[#allocation2 + $0x98] sm:$0xff] %v3302
      %3335 = vst [vmem:[#allocation2 + $0xa0] sm:$0xff] %v3303
      %3336 = vst [vmem:[#allocation2 + $0xa8] sm:$0xff] %v3304
      %3337 = vst [vmem:[#allocation2 + $0xb0] sm:$0xff] %v3305
      %3338 = vst [vmem:[#allocation2 + $0xb8] sm:$0xff] %v3306
      %3339 = vst [vmem:[#allocation2 + $0xc0] sm:$0xff] %v3307
      %3340 = vst [vmem:[#allocation2 + $0xc8] sm:$0xff] %v3308
      %3341 = vst [vmem:[#allocation2 + $0xd0] sm:$0xff] %v3309
      %3342 = vst [vmem:[#allocation2 + $0xd8] sm:$0xff] %v3310
      %3343 = vst [vmem:[#allocation2 + $0xe0] sm:$0xff] %v3311
      %3344 = vst [vmem:[#allocation2 + $0xe8] sm:$0xff] %v3312
      %3345 = vst [vmem:[#allocation2 + $0xf0] sm:$0xff] %v3313
      %3346 = vst [vmem:[#allocation2 + $0xf8] sm:$0xff] %v3314
      %s3347 = scalar_lea.vmem %s192, 48
      %v3348 = vld [vmem:[%s3347] sm:$0xf]
      %v3349 = vld [vmem:[%s3347 + $0x4] sm:$0xf]
      %v3350 = vld [vmem:[%s3347 + $0xc] sm:$0xf]
      %v3351 = vld [vmem:[%s3347 + $0x10] sm:$0xf]
      %v3352 = vld [vmem:[%s3347 + $0x18] sm:$0xf]
      %v3353 = vld [vmem:[%s3347 + $0x1c] sm:$0xf]
      %v3354 = vld [vmem:[%s3347 + $0x24] sm:$0xf]
      %v3355 = vld [vmem:[%s3347 + $0x28] sm:$0xf]
      %v3356 = vld [vmem:[%s3347 + $0x30] sm:$0xf]
      %v3357 = vld [vmem:[%s3347 + $0x34] sm:$0xf]
      %v3358 = vld [vmem:[%s3347 + $0x3c] sm:$0xf]
      %v3359 = vld [vmem:[%s3347 + $0x40] sm:$0xf]
      %v3360 = vld [vmem:[%s3347 + $0x48] sm:$0xf]
      %v3361 = vld [vmem:[%s3347 + $0x4c] sm:$0xf]
      %v3362 = vld [vmem:[%s3347 + $0x54] sm:$0xf]
      %v3363 = vld [vmem:[%s3347 + $0x58] sm:$0xf]
      %v3364 = vld [vmem:[%s3347 + $0x60] sm:$0xf]
      %v3365 = vld [vmem:[%s3347 + $0x64] sm:$0xf]
      %v3366 = vld [vmem:[%s3347 + $0x6c] sm:$0xf]
      %v3367 = vld [vmem:[%s3347 + $0x70] sm:$0xf]
      %v3368 = vld [vmem:[%s3347 + $0x78] sm:$0xf]
      %v3369 = vld [vmem:[%s3347 + $0x7c] sm:$0xf]
      %v3370 = vld [vmem:[%s3347 + $0x84] sm:$0xf]
      %v3371 = vld [vmem:[%s3347 + $0x88] sm:$0xf]
      %v3372 = vld [vmem:[%s3347 + $0x90] sm:$0xf]
      %v3373 = vld [vmem:[%s3347 + $0x94] sm:$0xf]
      %v3374 = vld [vmem:[%s3347 + $0x9c] sm:$0xf]
      %v3375 = vld [vmem:[%s3347 + $0xa0] sm:$0xf]
      %v3376 = vld [vmem:[%s3347 + $0xa8] sm:$0xf]
      %v3377 = vld [vmem:[%s3347 + $0xac] sm:$0xf]
      %v3378 = vld [vmem:[%s3347 + $0xb4] sm:$0xf]
      %v3379 = vld [vmem:[%s3347 + $0xb8] sm:$0xf]
      %v3380 = vld [vmem:[#allocation2] sm:$0xff]
      %v3381 = vld [vmem:[#allocation2 + $0x8] sm:$0xff]
      %v3382 = vld [vmem:[#allocation2 + $0x10] sm:$0xff]
      %v3383 = vld [vmem:[#allocation2 + $0x18] sm:$0xff]
      %v3384 = vld [vmem:[#allocation2 + $0x20] sm:$0xff]
      %v3385 = vld [vmem:[#allocation2 + $0x28] sm:$0xff]
      %v3386 = vld [vmem:[#allocation2 + $0x30] sm:$0xff]
      %v3387 = vld [vmem:[#allocation2 + $0x38] sm:$0xff]
      %v3388 = vld [vmem:[#allocation2 + $0x40] sm:$0xff]
      %v3389 = vld [vmem:[#allocation2 + $0x48] sm:$0xff]
      %v3390 = vld [vmem:[#allocation2 + $0x50] sm:$0xff]
      %v3391 = vld [vmem:[#allocation2 + $0x58] sm:$0xff]
      %v3392 = vld [vmem:[#allocation2 + $0x60] sm:$0xff]
      %v3393 = vld [vmem:[#allocation2 + $0x68] sm:$0xff]
      %v3394 = vld [vmem:[#allocation2 + $0x70] sm:$0xff]
      %v3395 = vld [vmem:[#allocation2 + $0x78] sm:$0xff]
      %v3396 = vld [vmem:[#allocation2 + $0x80] sm:$0xff]
      %v3397 = vld [vmem:[#allocation2 + $0x88] sm:$0xff]
      %v3398 = vld [vmem:[#allocation2 + $0x90] sm:$0xff]
      %v3399 = vld [vmem:[#allocation2 + $0x98] sm:$0xff]
      %v3400 = vld [vmem:[#allocation2 + $0xa0] sm:$0xff]
      %v3401 = vld [vmem:[#allocation2 + $0xa8] sm:$0xff]
      %v3402 = vld [vmem:[#allocation2 + $0xb0] sm:$0xff]
      %v3403 = vld [vmem:[#allocation2 + $0xb8] sm:$0xff]
      %v3404 = vld [vmem:[#allocation2 + $0xc0] sm:$0xff]
      %v3405 = vld [vmem:[#allocation2 + $0xc8] sm:$0xff]
      %v3406 = vld [vmem:[#allocation2 + $0xd0] sm:$0xff]
      %v3407 = vld [vmem:[#allocation2 + $0xd8] sm:$0xff]
      %v3408 = vld [vmem:[#allocation2 + $0xe0] sm:$0xff]
      %v3409 = vld [vmem:[#allocation2 + $0xe8] sm:$0xff]
      %v3410 = vld [vmem:[#allocation2 + $0xf0] sm:$0xff]
      %v3411 = vld [vmem:[#allocation2 + $0xf8] sm:$0xff]
      %s3412 = scalar_lea.vmem %s1, 12
      %v3413 = vld [vmem:[%s3412] sm:$0x3]
      %v3446 = vunpack.c.l.b16 %v3348
      %v3447 = vunpack.c.l.b16 %v3349
      %v3448 = vunpack.c.l.b16 %v3350
      %v3449 = vunpack.c.l.b16 %v3351
      %v3450 = vunpack.c.l.b16 %v3352
      %v3451 = vunpack.c.l.b16 %v3353
      %v3452 = vunpack.c.l.b16 %v3354
      %v3453 = vunpack.c.l.b16 %v3355
      %v3454 = vunpack.c.l.b16 %v3356
      %v3455 = vunpack.c.l.b16 %v3357
      %v3456 = vunpack.c.l.b16 %v3358
      %v3457 = vunpack.c.l.b16 %v3359
      %v3458 = vunpack.c.l.b16 %v3360
      %v3459 = vunpack.c.l.b16 %v3361
      %v3460 = vunpack.c.l.b16 %v3362
      %v3461 = vunpack.c.l.b16 %v3363
      %v3462 = vunpack.c.l.b16 %v3364
      %v3463 = vunpack.c.l.b16 %v3365
      %v3464 = vunpack.c.l.b16 %v3366
      %v3465 = vunpack.c.l.b16 %v3367
      %v3466 = vunpack.c.l.b16 %v3368
      %v3467 = vunpack.c.l.b16 %v3369
      %v3468 = vunpack.c.l.b16 %v3370
      %v3469 = vunpack.c.l.b16 %v3371
      %v3470 = vunpack.c.l.b16 %v3372
      %v3471 = vunpack.c.l.b16 %v3373
      %v3472 = vunpack.c.l.b16 %v3374
      %v3473 = vunpack.c.l.b16 %v3375
      %v3474 = vunpack.c.l.b16 %v3376
      %v3475 = vunpack.c.l.b16 %v3377
      %v3476 = vunpack.c.l.b16 %v3378
      %v3477 = vunpack.c.l.b16 %v3379
      %v3478 = vpack.c.b16 %v3447, %v3446
      %v3479 = vpack.c.b16 %v3449, %v3448
      %v3480 = vpack.c.b16 %v3451, %v3450
      %v3481 = vpack.c.b16 %v3453, %v3452
      %v3482 = vpack.c.b16 %v3455, %v3454
      %v3483 = vpack.c.b16 %v3457, %v3456
      %v3484 = vpack.c.b16 %v3459, %v3458
      %v3485 = vpack.c.b16 %v3461, %v3460
      %v3486 = vpack.c.b16 %v3463, %v3462
      %v3487 = vpack.c.b16 %v3465, %v3464
      %v3488 = vpack.c.b16 %v3467, %v3466
      %v3489 = vpack.c.b16 %v3469, %v3468
      %v3490 = vpack.c.b16 %v3471, %v3470
      %v3491 = vpack.c.b16 %v3473, %v3472
      %v3492 = vpack.c.b16 %v3475, %v3474
      %v3493 = vpack.c.b16 %v3477, %v3476
      %v3495 = vsel %vm376, %v3478, 0
      %v3498 = vsel %vm376, %v3479, 0
      %v3501 = vsel %vm376, %v3480, 0
      %v3504 = vsel %vm376, %v3481, 0
      %v3507 = vsel %vm376, %v3482, 0
      %v3510 = vsel %vm376, %v3483, 0
      %v3513 = vsel %vm376, %v3484, 0
      %v3516 = vsel %vm376, %v3485, 0
      %v3519 = vsel %vm376, %v3486, 0
      %v3522 = vsel %vm376, %v3487, 0
      %v3525 = vsel %vm376, %v3488, 0
      %v3528 = vsel %vm376, %v3489, 0
      %v3531 = vsel %vm376, %v3490, 0
      %v3534 = vsel %vm376, %v3491, 0
      %v3537 = vsel %vm376, %v3492, 0
      %v3540 = vsel %vm376, %v3493, 0
      %v3543 = vsel %vm425, %v3413, 0
      %3545 = vmatprep.subr.bf16.mxu0 0
      %3546 = vmatpush1.bf16.msra.mxu0 %v3543
      %3547 = vmatprep.subr.bf16.mxu0 0
      %3548 = vmatpush1.bf16.msra.mxu0 0
      %3549 = vmatprep.subr.bf16.mxu0 0
      %3550 = vmatpush1.bf16.msra.mxu0 0
      %3551 = vmatprep.subr.bf16.mxu0 0
      %3552 = vmatpush1.bf16.msra.mxu0 0
      %3553 = vmatprep.subr.bf16.mxu0 0
      %3554 = vmatpush1.bf16.msra.mxu0 0
      %3555 = vmatprep.subr.bf16.mxu0 0
      %3556 = vmatpush1.bf16.msra.mxu0 0
      %3557 = vmatprep.subr.bf16.mxu0 0
      %3558 = vmatpush1.bf16.msra.mxu0 0
      %3559 = vmatprep.subr.bf16.mxu0 0
      %3560 = vmatpush1.bf16.msra.mxu0 0
      %3561 = vmatprep.subr.bf16.mxu0 0
      %3562 = vmatpush1.bf16.msra.mxu0 0
      %3563 = vmatprep.subr.bf16.mxu0 0
      %3564 = vmatpush1.bf16.msra.mxu0 0
      %3565 = vmatprep.subr.bf16.mxu0 0
      %3566 = vmatpush1.bf16.msra.mxu0 0
      %3567 = vmatprep.subr.bf16.mxu0 0
      %3568 = vmatpush1.bf16.msra.mxu0 0
      %3569 = vmatprep.subr.bf16.mxu0 0
      %3570 = vmatpush1.bf16.msra.mxu0 0
      %3571 = vmatprep.subr.bf16.mxu0 0
      %3572 = vmatpush1.bf16.msra.mxu0 0
      %3573 = vmatprep.subr.bf16.mxu0 0
      %3574 = vmatpush1.bf16.msra.mxu0 0
      %3575 = vmatprep.subr.bf16.mxu0 0
      %3576 = vmatpush1.bf16.msra.mxu0 0
      %3577 = vmatprep.mubr.bf16.mxu0 0
      %3578 = vmatmul.mubr.bf16.gmra.mrb[0].mxu0 %v3495
      %v3579 = vpop.f32.mrb[0].mxu0
      %v3580 = vadd.f32 0.0, %v3579
      %v3581 = vpop.f32.mrb[0].mxu0
      %v3582 = vpop.f32.mrb[0].mxu0
      %v3583 = vadd.f32 0.0, %v3582
      %v3584 = vpop.f32.mrb[0].mxu0
      %3585 = vmatprep.mubr.bf16.mxu0 0
      %3586 = vmatmul.mubr.bf16.gmra.mrb[0].mxu0 %v3498
      %v3587 = vpop.f32.mrb[0].mxu0
      %v3588 = vadd.f32 0.0, %v3587
      %v3589 = vpop.f32.mrb[0].mxu0
      %v3590 = vpop.f32.mrb[0].mxu0
      %v3591 = vadd.f32 0.0, %v3590
      %v3592 = vpop.f32.mrb[0].mxu0
      %3593 = vmatprep.mubr.bf16.mxu0 0
      %3594 = vmatmul.mubr.bf16.gmra.mrb[0].mxu0 %v3501
      %v3595 = vpop.f32.mrb[0].mxu0
      %v3596 = vadd.f32 0.0, %v3595
      %v3597 = vpop.f32.mrb[0].mxu0
      %v3598 = vpop.f32.mrb[0].mxu0
      %v3599 = vadd.f32 0.0, %v3598
      %v3600 = vpop.f32.mrb[0].mxu0
      %3601 = vmatprep.mubr.bf16.mxu0 0
      %3602 = vmatmul.mubr.bf16.gmra.mrb[0].mxu0 %v3504
      %v3603 = vpop.f32.mrb[0].mxu0
      %v3604 = vadd.f32 0.0, %v3603
      %v3605 = vpop.f32.mrb[0].mxu0
      %v3606 = vpop.f32.mrb[0].mxu0
      %v3607 = vadd.f32 0.0, %v3606
      %v3608 = vpop.f32.mrb[0].mxu0
      %3609 = vmatprep.mubr.bf16.mxu0 0
      %3610 = vmatmul.mubr.bf16.gmra.mrb[0].mxu0 %v3507
      %v3611 = vpop.f32.mrb[0].mxu0
      %v3612 = vadd.f32 0.0, %v3611
      %v3613 = vpop.f32.mrb[0].mxu0
      %v3614 = vpop.f32.mrb[0].mxu0
      %v3615 = vadd.f32 0.0, %v3614
      %v3616 = vpop.f32.mrb[0].mxu0
      %3617 = vmatprep.mubr.bf16.mxu0 0
      %3618 = vmatmul.mubr.bf16.gmra.mrb[0].mxu0 %v3510
      %v3619 = vpop.f32.mrb[0].mxu0
      %v3620 = vadd.f32 0.0, %v3619
      %v3621 = vpop.f32.mrb[0].mxu0
      %v3622 = vpop.f32.mrb[0].mxu0
      %v3623 = vadd.f32 0.0, %v3622
      %v3624 = vpop.f32.mrb[0].mxu0
      %3625 = vmatprep.mubr.bf16.mxu0 0
      %3626 = vmatmul.mubr.bf16.gmra.mrb[0].mxu0 %v3513
      %v3627 = vpop.f32.mrb[0].mxu0
      %v3628 = vadd.f32 0.0, %v3627
      %v3629 = vpop.f32.mrb[0].mxu0
      %v3630 = vpop.f32.mrb[0].mxu0
      %v3631 = vadd.f32 0.0, %v3630
      %v3632 = vpop.f32.mrb[0].mxu0
      %3633 = vmatprep.mubr.bf16.mxu0 0
      %3634 = vmatmul.mubr.bf16.gmra.mrb[0].mxu0 %v3516
      %v3635 = vpop.f32.mrb[0].mxu0
      %v3636 = vadd.f32 0.0, %v3635
      %v3637 = vpop.f32.mrb[0].mxu0
      %v3638 = vpop.f32.mrb[0].mxu0
      %v3639 = vadd.f32 0.0, %v3638
      %v3640 = vpop.f32.mrb[0].mxu0
      %3641 = vmatprep.mubr.bf16.mxu0 0
      %3642 = vmatmul.mubr.bf16.gmra.mrb[0].mxu0 %v3519
      %v3643 = vpop.f32.mrb[0].mxu0
      %v3644 = vadd.f32 0.0, %v3643
      %v3645 = vpop.f32.mrb[0].mxu0
      %v3646 = vpop.f32.mrb[0].mxu0
      %v3647 = vadd.f32 0.0, %v3646
      %v3648 = vpop.f32.mrb[0].mxu0
      %3649 = vmatprep.mubr.bf16.mxu0 0
      %3650 = vmatmul.mubr.bf16.gmra.mrb[0].mxu0 %v3522
      %v3651 = vpop.f32.mrb[0].mxu0
      %v3652 = vadd.f32 0.0, %v3651
      %v3653 = vpop.f32.mrb[0].mxu0
      %v3654 = vpop.f32.mrb[0].mxu0
      %v3655 = vadd.f32 0.0, %v3654
      %v3656 = vpop.f32.mrb[0].mxu0
      %3657 = vmatprep.mubr.bf16.mxu0 0
      %3658 = vmatmul.mubr.bf16.gmra.mrb[0].mxu0 %v3525
      %v3659 = vpop.f32.mrb[0].mxu0
      %v3660 = vadd.f32 0.0, %v3659
      %v3661 = vpop.f32.mrb[0].mxu0
      %v3662 = vpop.f32.mrb[0].mxu0
      %v3663 = vadd.f32 0.0, %v3662
      %v3664 = vpop.f32.mrb[0].mxu0
      %3665 = vmatprep.mubr.bf16.mxu0 0
      %3666 = vmatmul.mubr.bf16.gmra.mrb[0].mxu0 %v3528
      %v3667 = vpop.f32.mrb[0].mxu0
      %v3668 = vadd.f32 0.0, %v3667
      %v3669 = vpop.f32.mrb[0].mxu0
      %v3670 = vpop.f32.mrb[0].mxu0
      %v3671 = vadd.f32 0.0, %v3670
      %v3672 = vpop.f32.mrb[0].mxu0
      %3673 = vmatprep.mubr.bf16.mxu0 0
      %3674 = vmatmul.mubr.bf16.gmra.mrb[0].mxu0 %v3531
      %v3675 = vpop.f32.mrb[0].mxu0
      %v3676 = vadd.f32 0.0, %v3675
      %v3677 = vpop.f32.mrb[0].mxu0
      %v3678 = vpop.f32.mrb[0].mxu0
      %v3679 = vadd.f32 0.0, %v3678
      %v3680 = vpop.f32.mrb[0].mxu0
      %3681 = vmatprep.mubr.bf16.mxu0 0
      %3682 = vmatmul.mubr.bf16.gmra.mrb[0].mxu0 %v3534
      %v3683 = vpop.f32.mrb[0].mxu0
      %v3684 = vadd.f32 0.0, %v3683
      %v3685 = vpop.f32.mrb[0].mxu0
      %v3686 = vpop.f32.mrb[0].mxu0
      %v3687 = vadd.f32 0.0, %v3686
      %v3688 = vpop.f32.mrb[0].mxu0
      %3689 = vmatprep.mubr.bf16.mxu0 0
      %3690 = vmatmul.mubr.bf16.gmra.mrb[0].mxu0 %v3537
      %v3691 = vpop.f32.mrb[0].mxu0
      %v3692 = vadd.f32 0.0, %v3691
      %v3693 = vpop.f32.mrb[0].mxu0
      %v3694 = vpop.f32.mrb[0].mxu0
      %v3695 = vadd.f32 0.0, %v3694
      %v3696 = vpop.f32.mrb[0].mxu0
      %3697 = vmatprep.mubr.bf16.mxu0 0
      %3698 = vmatmul.mubr.bf16.gmra.mrb[0].mxu0 %v3540
      %v3699 = vpop.f32.mrb[0].mxu0
      %v3700 = vadd.f32 0.0, %v3699
      %v3701 = vpop.f32.mrb[0].mxu0
      %v3702 = vpop.f32.mrb[0].mxu0
      %v3703 = vadd.f32 0.0, %v3702
      %v3704 = vpop.f32.mrb[0].mxu0
      %3705 = vdwg.mxu0
      %v3706 = vadd.f32 %v3380, %v3580
      %v3707 = vadd.f32 %v3381, %v3583
      %v3708 = vadd.f32 %v3382, %v3588
      %v3709 = vadd.f32 %v3383, %v3591
      %v3710 = vadd.f32 %v3384, %v3596
      %v3711 = vadd.f32 %v3385, %v3599
      %v3712 = vadd.f32 %v3386, %v3604
      %v3713 = vadd.f32 %v3387, %v3607
      %v3714 = vadd.f32 %v3388, %v3612
      %v3715 = vadd.f32 %v3389, %v3615
      %v3716 = vadd.f32 %v3390, %v3620
      %v3717 = vadd.f32 %v3391, %v3623
      %v3718 = vadd.f32 %v3392, %v3628
      %v3719 = vadd.f32 %v3393, %v3631
      %v3720 = vadd.f32 %v3394, %v3636
      %v3721 = vadd.f32 %v3395, %v3639
      %v3722 = vadd.f32 %v3396, %v3644
      %v3723 = vadd.f32 %v3397, %v3647
      %v3724 = vadd.f32 %v3398, %v3652
      %v3725 = vadd.f32 %v3399, %v3655
      %v3726 = vadd.f32 %v3400, %v3660
      %v3727 = vadd.f32 %v3401, %v3663
      %v3728 = vadd.f32 %v3402, %v3668
      %v3729 = vadd.f32 %v3403, %v3671
      %v3730 = vadd.f32 %v3404, %v3676
      %v3731 = vadd.f32 %v3405, %v3679
      %v3732 = vadd.f32 %v3406, %v3684
      %v3733 = vadd.f32 %v3407, %v3687
      %v3734 = vadd.f32 %v3408, %v3692
      %v3735 = vadd.f32 %v3409, %v3695
      %v3736 = vadd.f32 %v3410, %v3700
      %v3737 = vadd.f32 %v3411, %v3703
      %3738 = vst [vmem:[#allocation2] sm:$0xff] %v3706
      %3739 = vst [vmem:[#allocation2 + $0x8] sm:$0xff] %v3707
      %3740 = vst [vmem:[#allocation2 + $0x10] sm:$0xff] %v3708
      %3741 = vst [vmem:[#allocation2 + $0x18] sm:$0xff] %v3709
      %3742 = vst [vmem:[#allocation2 + $0x20] sm:$0xff] %v3710
      %3743 = vst [vmem:[#allocation2 + $0x28] sm:$0xff] %v3711
      %3744 = vst [vmem:[#allocation2 + $0x30] sm:$0xff] %v3712
      %3745 = vst [vmem:[#allocation2 + $0x38] sm:$0xff] %v3713
      %3746 = vst [vmem:[#allocation2 + $0x40] sm:$0xff] %v3714
      %3747 = vst [vmem:[#allocation2 + $0x48] sm:$0xff] %v3715
      %3748 = vst [vmem:[#allocation2 + $0x50] sm:$0xff] %v3716
      %3749 = vst [vmem:[#allocation2 + $0x58] sm:$0xff] %v3717
      %3750 = vst [vmem:[#allocation2 + $0x60] sm:$0xff] %v3718
      %3751 = vst [vmem:[#allocation2 + $0x68] sm:$0xff] %v3719
      %3752 = vst [vmem:[#allocation2 + $0x70] sm:$0xff] %v3720
      %3753 = vst [vmem:[#allocation2 + $0x78] sm:$0xff] %v3721
      %3754 = vst [vmem:[#allocation2 + $0x80] sm:$0xff] %v3722
      %3755 = vst [vmem:[#allocation2 + $0x88] sm:$0xff] %v3723
      %3756 = vst [vmem:[#allocation2 + $0x90] sm:$0xff] %v3724
      %3757 = vst [vmem:[#allocation2 + $0x98] sm:$0xff] %v3725
      %3758 = vst [vmem:[#allocation2 + $0xa0] sm:$0xff] %v3726
      %3759 = vst [vmem:[#allocation2 + $0xa8] sm:$0xff] %v3727
      %3760 = vst [vmem:[#allocation2 + $0xb0] sm:$0xff] %v3728
      %3761 = vst [vmem:[#allocation2 + $0xb8] sm:$0xff] %v3729
      %3762 = vst [vmem:[#allocation2 + $0xc0] sm:$0xff] %v3730
      %3763 = vst [vmem:[#allocation2 + $0xc8] sm:$0xff] %v3731
      %3764 = vst [vmem:[#allocation2 + $0xd0] sm:$0xff] %v3732
      %3765 = vst [vmem:[#allocation2 + $0xd8] sm:$0xff] %v3733
      %3766 = vst [vmem:[#allocation2 + $0xe0] sm:$0xff] %v3734
      %3767 = vst [vmem:[#allocation2 + $0xe8] sm:$0xff] %v3735
      %3768 = vst [vmem:[#allocation2 + $0xf0] sm:$0xff] %v3736
      %3769 = vst [vmem:[#allocation2 + $0xf8] sm:$0xff] %v3737
      %v3770 = vld [vmem:[%s3347] sm:$0xe]
      %v3771 = vld [vmem:[%s3347 + $0x4] sm:$0xf]
      %v3772 = vld [vmem:[%s3347 + $0x8] sm:$0x1]
      %v3773 = vld [vmem:[%s3347 + $0xc] sm:$0xe]
      %v3774 = vld [vmem:[%s3347 + $0x10] sm:$0xf]
      %v3775 = vld [vmem:[%s3347 + $0x14] sm:$0x1]
      %v3776 = vld [vmem:[%s3347 + $0x18] sm:$0xe]
      %v3777 = vld [vmem:[%s3347 + $0x1c] sm:$0xf]
      %v3778 = vld [vmem:[%s3347 + $0x20] sm:$0x1]
      %v3779 = vld [vmem:[%s3347 + $0x24] sm:$0xe]
      %v3780 = vld [vmem:[%s3347 + $0x28] sm:$0xf]
      %v3781 = vld [vmem:[%s3347 + $0x2c] sm:$0x1]
      %v3782 = vld [vmem:[%s3347 + $0x30] sm:$0xe]
      %v3783 = vld [vmem:[%s3347 + $0x34] sm:$0xf]
      %v3784 = vld [vmem:[%s3347 + $0x38] sm:$0x1]
      %v3785 = vld [vmem:[%s3347 + $0x3c] sm:$0xe]
      %v3786 = vld [vmem:[%s3347 + $0x40] sm:$0xf]
      %v3787 = vld [vmem:[%s3347 + $0x44] sm:$0x1]
      %v3788 = vld [vmem:[%s3347 + $0x48] sm:$0xe]
      %v3789 = vld [vmem:[%s3347 + $0x4c] sm:$0xf]
      %v3790 = vld [vmem:[%s3347 + $0x50] sm:$0x1]
      %v3791 = vld [vmem:[%s3347 + $0x54] sm:$0xe]
      %v3792 = vld [vmem:[%s3347 + $0x58] sm:$0xf]
      %v3793 = vld [vmem:[%s3347 + $0x5c] sm:$0x1]
      %v3794 = vld [vmem:[%s3347 + $0x60] sm:$0xe]
      %v3795 = vld [vmem:[%s3347 + $0x64] sm:$0xf]
      %v3796 = vld [vmem:[%s3347 + $0x68] sm:$0x1]
      %v3797 = vld [vmem:[%s3347 + $0x6c] sm:$0xe]
      %v3798 = vld [vmem:[%s3347 + $0x70] sm:$0xf]
      %v3799 = vld [vmem:[%s3347 + $0x74] sm:$0x1]
      %v3800 = vld [vmem:[%s3347 + $0x78] sm:$0xe]
      %v3801 = vld [vmem:[%s3347 + $0x7c] sm:$0xf]
      %v3802 = vld [vmem:[%s3347 + $0x80] sm:$0x1]
      %v3803 = vld [vmem:[%s3347 + $0x84] sm:$0xe]
      %v3804 = vld [vmem:[%s3347 + $0x88] sm:$0xf]
      %v3805 = vld [vmem:[%s3347 + $0x8c] sm:$0x1]
      %v3806 = vld [vmem:[%s3347 + $0x90] sm:$0xe]
      %v3807 = vld [vmem:[%s3347 + $0x94] sm:$0xf]
      %v3808 = vld [vmem:[%s3347 + $0x98] sm:$0x1]
      %v3809 = vld [vmem:[%s3347 + $0x9c] sm:$0xe]
      %v3810 = vld [vmem:[%s3347 + $0xa0] sm:$0xf]
      %v3811 = vld [vmem:[%s3347 + $0xa4] sm:$0x1]
      %v3812 = vld [vmem:[%s3347 + $0xa8] sm:$0xe]
      %v3813 = vld [vmem:[%s3347 + $0xac] sm:$0xf]
      %v3814 = vld [vmem:[%s3347 + $0xb0] sm:$0x1]
      %v3815 = vld [vmem:[%s3347 + $0xb4] sm:$0xe]
      %v3816 = vld [vmem:[%s3347 + $0xb8] sm:$0xf]
      %v3817 = vld [vmem:[%s3347 + $0xbc] sm:$0x1]
      %v3866 = vrot.slane %v3770, 5
      %v3867 = vrot.slane %v3866, 4
      %v3868 = vrot.slane %v3771, 5
      %v3869 = vsel %vm752, %v3867, %v3868
      %v3870 = vrot.slane %v3868, 4
      %v3871 = vrot.slane %v3772, 5
      %v3872 = vsel %vm752, %v3870, %v3871
      %v3873 = vrot.slane %v3773, 5
      %v3874 = vrot.slane %v3873, 4
      %v3875 = vrot.slane %v3774, 5
      %v3876 = vsel %vm752, %v3874, %v3875
      %v3877 = vrot.slane %v3875, 4
      %v3878 = vrot.slane %v3775, 5
      %v3879 = vsel %vm752, %v3877, %v3878
      %v3880 = vrot.slane %v3776, 5
      %v3881 = vrot.slane %v3880, 4
      %v3882 = vrot.slane %v3777, 5
      %v3883 = vsel %vm752, %v3881, %v3882
      %v3884 = vrot.slane %v3882, 4
      %v3885 = vrot.slane %v3778, 5
      %v3886 = vsel %vm752, %v3884, %v3885
      %v3887 = vrot.slane %v3779, 5
      %v3888 = vrot.slane %v3887, 4
      %v3889 = vrot.slane %v3780, 5
      %v3890 = vsel %vm752, %v3888, %v3889
      %v3891 = vrot.slane %v3889, 4
      %v3892 = vrot.slane %v3781, 5
      %v3893 = vsel %vm752, %v3891, %v3892
      %v3894 = vrot.slane %v3782, 5
      %v3895 = vrot.slane %v3894, 4
      %v3896 = vrot.slane %v3783, 5
      %v3897 = vsel %vm752, %v3895, %v3896
      %v3898 = vrot.slane %v3896, 4
      %v3899 = vrot.slane %v3784, 5
      %v3900 = vsel %vm752, %v3898, %v3899
      %v3901 = vrot.slane %v3785, 5
      %v3902 = vrot.slane %v3901, 4
      %v3903 = vrot.slane %v3786, 5
      %v3904 = vsel %vm752, %v3902, %v3903
      %v3905 = vrot.slane %v3903, 4
      %v3906 = vrot.slane %v3787, 5
      %v3907 = vsel %vm752, %v3905, %v3906
      %v3908 = vrot.slane %v3788, 5
      %v3909 = vrot.slane %v3908, 4
      %v3910 = vrot.slane %v3789, 5
      %v3911 = vsel %vm752, %v3909, %v3910
      %v3912 = vrot.slane %v3910, 4
      %v3913 = vrot.slane %v3790, 5
      %v3914 = vsel %vm752, %v3912, %v3913
      %v3915 = vrot.slane %v3791, 5
      %v3916 = vrot.slane %v3915, 4
      %v3917 = vrot.slane %v3792, 5
      %v3918 = vsel %vm752, %v3916, %v3917
      %v3919 = vrot.slane %v3917, 4
      %v3920 = vrot.slane %v3793, 5
      %v3921 = vsel %vm752, %v3919, %v3920
      %v3922 = vrot.slane %v3794, 5
      %v3923 = vrot.slane %v3922, 4
      %v3924 = vrot.slane %v3795, 5
      %v3925 = vsel %vm752, %v3923, %v3924
      %v3926 = vrot.slane %v3924, 4
      %v3927 = vrot.slane %v3796, 5
      %v3928 = vsel %vm752, %v3926, %v3927
      %v3929 = vrot.slane %v3797, 5
      %v3930 = vrot.slane %v3929, 4
      %v3931 = vrot.slane %v3798, 5
      %v3932 = vsel %vm752, %v3930, %v3931
      %v3933 = vrot.slane %v3931, 4
      %v3934 = vrot.slane %v3799, 5
      %v3935 = vsel %vm752, %v3933, %v3934
      %v3936 = vrot.slane %v3800, 5
      %v3937 = vrot.slane %v3936, 4
      %v3938 = vrot.slane %v3801, 5
      %v3939 = vsel %vm752, %v3937, %v3938
      %v3940 = vrot.slane %v3938, 4
      %v3941 = vrot.slane %v3802, 5
      %v3942 = vsel %vm752, %v3940, %v3941
      %v3943 = vrot.slane %v3803, 5
      %v3944 = vrot.slane %v3943, 4
      %v3945 = vrot.slane %v3804, 5
      %v3946 = vsel %vm752, %v3944, %v3945
      %v3947 = vrot.slane %v3945, 4
      %v3948 = vrot.slane %v3805, 5
      %v3949 = vsel %vm752, %v3947, %v3948
      %v3950 = vrot.slane %v3806, 5
      %v3951 = vrot.slane %v3950, 4
      %v3952 = vrot.slane %v3807, 5
      %v3953 = vsel %vm752, %v3951, %v3952
      %v3954 = vrot.slane %v3952, 4
      %v3955 = vrot.slane %v3808, 5
      %v3956 = vsel %vm752, %v3954, %v3955
      %v3957 = vrot.slane %v3809, 5
      %v3958 = vrot.slane %v3957, 4
      %v3959 = vrot.slane %v3810, 5
      %v3960 = vsel %vm752, %v3958, %v3959
      %v3961 = vrot.slane %v3959, 4
      %v3962 = vrot.slane %v3811, 5
      %v3963 = vsel %vm752, %v3961, %v3962
      %v3964 = vrot.slane %v3812, 5
      %v3965 = vrot.slane %v3964, 4
      %v3966 = vrot.slane %v3813, 5
      %v3967 = vsel %vm752, %v3965, %v3966
      %v3968 = vrot.slane %v3966, 4
      %v3969 = vrot.slane %v3814, 5
      %v3970 = vsel %vm752, %v3968, %v3969
      %v3971 = vrot.slane %v3815, 5
      %v3972 = vrot.slane %v3971, 4
      %v3973 = vrot.slane %v3816, 5
      %v3974 = vsel %vm752, %v3972, %v3973
      %v3975 = vrot.slane %v3973, 4
      %v3976 = vrot.slane %v3817, 5
      %v3977 = vsel %vm752, %v3975, %v3976
      %v3978 = vld [vmem:[#allocation2] sm:$0xff]
      %v3979 = vld [vmem:[#allocation2 + $0x8] sm:$0xff]
      %v3980 = vld [vmem:[#allocation2 + $0x10] sm:$0xff]
      %v3981 = vld [vmem:[#allocation2 + $0x18] sm:$0xff]
      %v3982 = vld [vmem:[#allocation2 + $0x20] sm:$0xff]
      %v3983 = vld [vmem:[#allocation2 + $0x28] sm:$0xff]
      %v3984 = vld [vmem:[#allocation2 + $0x30] sm:$0xff]
      %v3985 = vld [vmem:[#allocation2 + $0x38] sm:$0xff]
      %v3986 = vld [vmem:[#allocation2 + $0x40] sm:$0xff]
      %v3987 = vld [vmem:[#allocation2 + $0x48] sm:$0xff]
      %v3988 = vld [vmem:[#allocation2 + $0x50] sm:$0xff]
      %v3989 = vld [vmem:[#allocation2 + $0x58] sm:$0xff]
      %v3990 = vld [vmem:[#allocation2 + $0x60] sm:$0xff]
      %v3991 = vld [vmem:[#allocation2 + $0x68] sm:$0xff]
      %v3992 = vld [vmem:[#allocation2 + $0x70] sm:$0xff]
      %v3993 = vld [vmem:[#allocation2 + $0x78] sm:$0xff]
      %v3994 = vld [vmem:[#allocation2 + $0x80] sm:$0xff]
      %v3995 = vld [vmem:[#allocation2 + $0x88] sm:$0xff]
      %v3996 = vld [vmem:[#allocation2 + $0x90] sm:$0xff]
      %v3997 = vld [vmem:[#allocation2 + $0x98] sm:$0xff]
      %v3998 = vld [vmem:[#allocation2 + $0xa0] sm:$0xff]
      %v3999 = vld [vmem:[#allocation2 + $0xa8] sm:$0xff]
      %v4000 = vld [vmem:[#allocation2 + $0xb0] sm:$0xff]
      %v4001 = vld [vmem:[#allocation2 + $0xb8] sm:$0xff]
      %v4002 = vld [vmem:[#allocation2 + $0xc0] sm:$0xff]
      %v4003 = vld [vmem:[#allocation2 + $0xc8] sm:$0xff]
      %v4004 = vld [vmem:[#allocation2 + $0xd0] sm:$0xff]
      %v4005 = vld [vmem:[#allocation2 + $0xd8] sm:$0xff]
      %v4006 = vld [vmem:[#allocation2 + $0xe0] sm:$0xff]
      %v4007 = vld [vmem:[#allocation2 + $0xe8] sm:$0xff]
      %v4008 = vld [vmem:[#allocation2 + $0xf0] sm:$0xff]
      %v4009 = vld [vmem:[#allocation2 + $0xf8] sm:$0xff]
      %s4010 = scalar_lea.vmem %s1, 14
      %v4011 = vld [vmem:[%s4010] sm:$0x3]
      %v4012 = vunpack.c.l.b16 %v3869
      %v4013 = vunpack.c.l.b16 %v3872
      %v4014 = vunpack.c.l.b16 %v3876
      %v4015 = vunpack.c.l.b16 %v3879
      %v4016 = vunpack.c.l.b16 %v3883
      %v4017 = vunpack.c.l.b16 %v3886
      %v4018 = vunpack.c.l.b16 %v3890
      %v4019 = vunpack.c.l.b16 %v3893
      %v4020 = vunpack.c.l.b16 %v3897
      %v4021 = vunpack.c.l.b16 %v3900
      %v4022 = vunpack.c.l.b16 %v3904
      %v4023 = vunpack.c.l.b16 %v3907
      %v4024 = vunpack.c.l.b16 %v3911
      %v4025 = vunpack.c.l.b16 %v3914
      %v4026 = vunpack.c.l.b16 %v3918
      %v4027 = vunpack.c.l.b16 %v3921
      %v4028 = vunpack.c.l.b16 %v3925
      %v4029 = vunpack.c.l.b16 %v3928
      %v4030 = vunpack.c.l.b16 %v3932
      %v4031 = vunpack.c.l.b16 %v3935
      %v4032 = vunpack.c.l.b16 %v3939
      %v4033 = vunpack.c.l.b16 %v3942
      %v4034 = vunpack.c.l.b16 %v3946
      %v4035 = vunpack.c.l.b16 %v3949
      %v4036 = vunpack.c.l.b16 %v3953
      %v4037 = vunpack.c.l.b16 %v3956
      %v4038 = vunpack.c.l.b16 %v3960
      %v4039 = vunpack.c.l.b16 %v3963
      %v4040 = vunpack.c.l.b16 %v3967
      %v4041 = vunpack.c.l.b16 %v3970
      %v4042 = vunpack.c.l.b16 %v3974
      %v4043 = vunpack.c.l.b16 %v3977
      %v4044 = vpack.c.b16 %v4013, %v4012
      %v4045 = vpack.c.b16 %v4015, %v4014
      %v4046 = vpack.c.b16 %v4017, %v4016
      %v4047 = vpack.c.b16 %v4019, %v4018
      %v4048 = vpack.c.b16 %v4021, %v4020
      %v4049 = vpack.c.b16 %v4023, %v4022
      %v4050 = vpack.c.b16 %v4025, %v4024
      %v4051 = vpack.c.b16 %v4027, %v4026
      %v4052 = vpack.c.b16 %v4029, %v4028
      %v4053 = vpack.c.b16 %v4031, %v4030
      %v4054 = vpack.c.b16 %v4033, %v4032
      %v4055 = vpack.c.b16 %v4035, %v4034
      %v4056 = vpack.c.b16 %v4037, %v4036
      %v4057 = vpack.c.b16 %v4039, %v4038
      %v4058 = vpack.c.b16 %v4041, %v4040
      %v4059 = vpack.c.b16 %v4043, %v4042
      %v4061 = vsel %vm376, %v4044, 0
      %v4064 = vsel %vm376, %v4045, 0
      %v4067 = vsel %vm376, %v4046, 0
      %v4070 = vsel %vm376, %v4047, 0
      %v4073 = vsel %vm376, %v4048, 0
      %v4076 = vsel %vm376, %v4049, 0
      %v4079 = vsel %vm376, %v4050, 0
      %v4082 = vsel %vm376, %v4051, 0
      %v4085 = vsel %vm376, %v4052, 0
      %v4088 = vsel %vm376, %v4053, 0
      %v4091 = vsel %vm376, %v4054, 0
      %v4094 = vsel %vm376, %v4055, 0
      %v4097 = vsel %vm376, %v4056, 0
      %v4100 = vsel %vm376, %v4057, 0
      %v4103 = vsel %vm376, %v4058, 0
      %v4106 = vsel %vm376, %v4059, 0
      %v4109 = vsel %vm425, %v4011, 0
      %4111 = vmatprep.subr.bf16.mxu0 0
      %4112 = vmatpush1.bf16.msra.mxu0 %v4109
      %4113 = vmatprep.subr.bf16.mxu0 0
      %4114 = vmatpush1.bf16.msra.mxu0 0
      %4115 = vmatprep.subr.bf16.mxu0 0
      %4116 = vmatpush1.bf16.msra.mxu0 0
      %4117 = vmatprep.subr.bf16.mxu0 0
      %4118 = vmatpush1.bf16.msra.mxu0 0
      %4119 = vmatprep.subr.bf16.mxu0 0
      %4120 = vmatpush1.bf16.msra.mxu0 0
      %4121 = vmatprep.subr.bf16.mxu0 0
      %4122 = vmatpush1.bf16.msra.mxu0 0
      %4123 = vmatprep.subr.bf16.mxu0 0
      %4124 = vmatpush1.bf16.msra.mxu0 0
      %4125 = vmatprep.subr.bf16.mxu0 0
      %4126 = vmatpush1.bf16.msra.mxu0 0
      %4127 = vmatprep.subr.bf16.mxu0 0
      %4128 = vmatpush1.bf16.msra.mxu0 0
      %4129 = vmatprep.subr.bf16.mxu0 0
      %4130 = vmatpush1.bf16.msra.mxu0 0
      %4131 = vmatprep.subr.bf16.mxu0 0
      %4132 = vmatpush1.bf16.msra.mxu0 0
      %4133 = vmatprep.subr.bf16.mxu0 0
      %4134 = vmatpush1.bf16.msra.mxu0 0
      %4135 = vmatprep.subr.bf16.mxu0 0
      %4136 = vmatpush1.bf16.msra.mxu0 0
      %4137 = vmatprep.subr.bf16.mxu0 0
      %4138 = vmatpush1.bf16.msra.mxu0 0
      %4139 = vmatprep.subr.bf16.mxu0 0
      %4140 = vmatpush1.bf16.msra.mxu0 0
      %4141 = vmatprep.subr.bf16.mxu0 0
      %4142 = vmatpush1.bf16.msra.mxu0 0
      %4143 = vmatprep.mubr.bf16.mxu0 0
      %4144 = vmatmul.mubr.bf16.gmra.mrb[0].mxu0 %v4061
      %v4145 = vpop.f32.mrb[0].mxu0
      %v4146 = vadd.f32 0.0, %v4145
      %v4147 = vpop.f32.mrb[0].mxu0
      %v4148 = vpop.f32.mrb[0].mxu0
      %v4149 = vadd.f32 0.0, %v4148
      %v4150 = vpop.f32.mrb[0].mxu0
      %4151 = vmatprep.mubr.bf16.mxu0 0
      %4152 = vmatmul.mubr.bf16.gmra.mrb[0].mxu0 %v4064
      %v4153 = vpop.f32.mrb[0].mxu0
      %v4154 = vadd.f32 0.0, %v4153
      %v4155 = vpop.f32.mrb[0].mxu0
      %v4156 = vpop.f32.mrb[0].mxu0
      %v4157 = vadd.f32 0.0, %v4156
      %v4158 = vpop.f32.mrb[0].mxu0
      %4159 = vmatprep.mubr.bf16.mxu0 0
      %4160 = vmatmul.mubr.bf16.gmra.mrb[0].mxu0 %v4067
      %v4161 = vpop.f32.mrb[0].mxu0
      %v4162 = vadd.f32 0.0, %v4161
      %v4163 = vpop.f32.mrb[0].mxu0
      %v4164 = vpop.f32.mrb[0].mxu0
      %v4165 = vadd.f32 0.0, %v4164
      %v4166 = vpop.f32.mrb[0].mxu0
      %4167 = vmatprep.mubr.bf16.mxu0 0
      %4168 = vmatmul.mubr.bf16.gmra.mrb[0].mxu0 %v4070
      %v4169 = vpop.f32.mrb[0].mxu0
      %v4170 = vadd.f32 0.0, %v4169
      %v4171 = vpop.f32.mrb[0].mxu0
      %v4172 = vpop.f32.mrb[0].mxu0
      %v4173 = vadd.f32 0.0, %v4172
      %v4174 = vpop.f32.mrb[0].mxu0
      %4175 = vmatprep.mubr.bf16.mxu0 0
      %4176 = vmatmul.mubr.bf16.gmra.mrb[0].mxu0 %v4073
      %v4177 = vpop.f32.mrb[0].mxu0
      %v4178 = vadd.f32 0.0, %v4177
      %v4179 = vpop.f32.mrb[0].mxu0
      %v4180 = vpop.f32.mrb[0].mxu0
      %v4181 = vadd.f32 0.0, %v4180
      %v4182 = vpop.f32.mrb[0].mxu0
      %4183 = vmatprep.mubr.bf16.mxu0 0
      %4184 = vmatmul.mubr.bf16.gmra.mrb[0].mxu0 %v4076
      %v4185 = vpop.f32.mrb[0].mxu0
      %v4186 = vadd.f32 0.0, %v4185
      %v4187 = vpop.f32.mrb[0].mxu0
      %v4188 = vpop.f32.mrb[0].mxu0
      %v4189 = vadd.f32 0.0, %v4188
      %v4190 = vpop.f32.mrb[0].mxu0
      %4191 = vmatprep.mubr.bf16.mxu0 0
      %4192 = vmatmul.mubr.bf16.gmra.mrb[0].mxu0 %v4079
      %v4193 = vpop.f32.mrb[0].mxu0
      %v4194 = vadd.f32 0.0, %v4193
      %v4195 = vpop.f32.mrb[0].mxu0
      %v4196 = vpop.f32.mrb[0].mxu0
      %v4197 = vadd.f32 0.0, %v4196
      %v4198 = vpop.f32.mrb[0].mxu0
      %4199 = vmatprep.mubr.bf16.mxu0 0
      %4200 = vmatmul.mubr.bf16.gmra.mrb[0].mxu0 %v4082
      %v4201 = vpop.f32.mrb[0].mxu0
      %v4202 = vadd.f32 0.0, %v4201
      %v4203 = vpop.f32.mrb[0].mxu0
      %v4204 = vpop.f32.mrb[0].mxu0
      %v4205 = vadd.f32 0.0, %v4204
      %v4206 = vpop.f32.mrb[0].mxu0
      %4207 = vmatprep.mubr.bf16.mxu0 0
      %4208 = vmatmul.mubr.bf16.gmra.mrb[0].mxu0 %v4085
      %v4209 = vpop.f32.mrb[0].mxu0
      %v4210 = vadd.f32 0.0, %v4209
      %v4211 = vpop.f32.mrb[0].mxu0
      %v4212 = vpop.f32.mrb[0].mxu0
      %v4213 = vadd.f32 0.0, %v4212
      %v4214 = vpop.f32.mrb[0].mxu0
      %4215 = vmatprep.mubr.bf16.mxu0 0
      %4216 = vmatmul.mubr.bf16.gmra.mrb[0].mxu0 %v4088
      %v4217 = vpop.f32.mrb[0].mxu0
      %v4218 = vadd.f32 0.0, %v4217
      %v4219 = vpop.f32.mrb[0].mxu0
      %v4220 = vpop.f32.mrb[0].mxu0
      %v4221 = vadd.f32 0.0, %v4220
      %v4222 = vpop.f32.mrb[0].mxu0
      %4223 = vmatprep.mubr.bf16.mxu0 0
      %4224 = vmatmul.mubr.bf16.gmra.mrb[0].mxu0 %v4091
      %v4225 = vpop.f32.mrb[0].mxu0
      %v4226 = vadd.f32 0.0, %v4225
      %v4227 = vpop.f32.mrb[0].mxu0
      %v4228 = vpop.f32.mrb[0].mxu0
      %v4229 = vadd.f32 0.0, %v4228
      %v4230 = vpop.f32.mrb[0].mxu0
      %4231 = vmatprep.mubr.bf16.mxu0 0
      %4232 = vmatmul.mubr.bf16.gmra.mrb[0].mxu0 %v4094
      %v4233 = vpop.f32.mrb[0].mxu0
      %v4234 = vadd.f32 0.0, %v4233
      %v4235 = vpop.f32.mrb[0].mxu0
      %v4236 = vpop.f32.mrb[0].mxu0
      %v4237 = vadd.f32 0.0, %v4236
      %v4238 = vpop.f32.mrb[0].mxu0
      %4239 = vmatprep.mubr.bf16.mxu0 0
      %4240 = vmatmul.mubr.bf16.gmra.mrb[0].mxu0 %v4097
      %v4241 = vpop.f32.mrb[0].mxu0
      %v4242 = vadd.f32 0.0, %v4241
      %v4243 = vpop.f32.mrb[0].mxu0
      %v4244 = vpop.f32.mrb[0].mxu0
      %v4245 = vadd.f32 0.0, %v4244
      %v4246 = vpop.f32.mrb[0].mxu0
      %4247 = vmatprep.mubr.bf16.mxu0 0
      %4248 = vmatmul.mubr.bf16.gmra.mrb[0].mxu0 %v4100
      %v4249 = vpop.f32.mrb[0].mxu0
      %v4250 = vadd.f32 0.0, %v4249
      %v4251 = vpop.f32.mrb[0].mxu0
      %v4252 = vpop.f32.mrb[0].mxu0
      %v4253 = vadd.f32 0.0, %v4252
      %v4254 = vpop.f32.mrb[0].mxu0
      %4255 = vmatprep.mubr.bf16.mxu0 0
      %4256 = vmatmul.mubr.bf16.gmra.mrb[0].mxu0 %v4103
      %v4257 = vpop.f32.mrb[0].mxu0
      %v4258 = vadd.f32 0.0, %v4257
      %v4259 = vpop.f32.mrb[0].mxu0
      %v4260 = vpop.f32.mrb[0].mxu0
      %v4261 = vadd.f32 0.0, %v4260
      %v4262 = vpop.f32.mrb[0].mxu0
      %4263 = vmatprep.mubr.bf16.mxu0 0
      %4264 = vmatmul.mubr.bf16.gmra.mrb[0].mxu0 %v4106
      %v4265 = vpop.f32.mrb[0].mxu0
      %v4266 = vadd.f32 0.0, %v4265
      %v4267 = vpop.f32.mrb[0].mxu0
      %v4268 = vpop.f32.mrb[0].mxu0
      %v4269 = vadd.f32 0.0, %v4268
      %v4270 = vpop.f32.mrb[0].mxu0
      %4271 = vdwg.mxu0
      %v4272 = vadd.f32 %v3978, %v4146
      %v4273 = vadd.f32 %v3979, %v4149
      %v4274 = vadd.f32 %v3980, %v4154
      %v4275 = vadd.f32 %v3981, %v4157
      %v4276 = vadd.f32 %v3982, %v4162
      %v4277 = vadd.f32 %v3983, %v4165
      %v4278 = vadd.f32 %v3984, %v4170
      %v4279 = vadd.f32 %v3985, %v4173
      %v4280 = vadd.f32 %v3986, %v4178
      %v4281 = vadd.f32 %v3987, %v4181
      %v4282 = vadd.f32 %v3988, %v4186
      %v4283 = vadd.f32 %v3989, %v4189
      %v4284 = vadd.f32 %v3990, %v4194
      %v4285 = vadd.f32 %v3991, %v4197
      %v4286 = vadd.f32 %v3992, %v4202
      %v4287 = vadd.f32 %v3993, %v4205
      %v4288 = vadd.f32 %v3994, %v4210
      %v4289 = vadd.f32 %v3995, %v4213
      %v4290 = vadd.f32 %v3996, %v4218
      %v4291 = vadd.f32 %v3997, %v4221
      %v4292 = vadd.f32 %v3998, %v4226
      %v4293 = vadd.f32 %v3999, %v4229
      %v4294 = vadd.f32 %v4000, %v4234
      %v4295 = vadd.f32 %v4001, %v4237
      %v4296 = vadd.f32 %v4002, %v4242
      %v4297 = vadd.f32 %v4003, %v4245
      %v4298 = vadd.f32 %v4004, %v4250
      %v4299 = vadd.f32 %v4005, %v4253
      %v4300 = vadd.f32 %v4006, %v4258
      %v4301 = vadd.f32 %v4007, %v4261
      %v4302 = vadd.f32 %v4008, %v4266
      %v4303 = vadd.f32 %v4009, %v4269
      %4304 = vst [vmem:[#allocation2] sm:$0xff] %v4272
      %4305 = vst [vmem:[#allocation2 + $0x8] sm:$0xff] %v4273
      %4306 = vst [vmem:[#allocation2 + $0x10] sm:$0xff] %v4274
      %4307 = vst [vmem:[#allocation2 + $0x18] sm:$0xff] %v4275
      %4308 = vst [vmem:[#allocation2 + $0x20] sm:$0xff] %v4276
      %4309 = vst [vmem:[#allocation2 + $0x28] sm:$0xff] %v4277
      %4310 = vst [vmem:[#allocation2 + $0x30] sm:$0xff] %v4278
      %4311 = vst [vmem:[#allocation2 + $0x38] sm:$0xff] %v4279
      %4312 = vst [vmem:[#allocation2 + $0x40] sm:$0xff] %v4280
      %4313 = vst [vmem:[#allocation2 + $0x48] sm:$0xff] %v4281
      %4314 = vst [vmem:[#allocation2 + $0x50] sm:$0xff] %v4282
      %4315 = vst [vmem:[#allocation2 + $0x58] sm:$0xff] %v4283
      %4316 = vst [vmem:[#allocation2 + $0x60] sm:$0xff] %v4284
      %4317 = vst [vmem:[#allocation2 + $0x68] sm:$0xff] %v4285
      %4318 = vst [vmem:[#allocation2 + $0x70] sm:$0xff] %v4286
      %4319 = vst [vmem:[#allocation2 + $0x78] sm:$0xff] %v4287
      %4320 = vst [vmem:[#allocation2 + $0x80] sm:$0xff] %v4288
      %4321 = vst [vmem:[#allocation2 + $0x88] sm:$0xff] %v4289
      %4322 = vst [vmem:[#allocation2 + $0x90] sm:$0xff] %v4290
      %4323 = vst [vmem:[#allocation2 + $0x98] sm:$0xff] %v4291
      %4324 = vst [vmem:[#allocation2 + $0xa0] sm:$0xff] %v4292
      %4325 = vst [vmem:[#allocation2 + $0xa8] sm:$0xff] %v4293
      %4326 = vst [vmem:[#allocation2 + $0xb0] sm:$0xff] %v4294
      %4327 = vst [vmem:[#allocation2 + $0xb8] sm:$0xff] %v4295
      %4328 = vst [vmem:[#allocation2 + $0xc0] sm:$0xff] %v4296
      %4329 = vst [vmem:[#allocation2 + $0xc8] sm:$0xff] %v4297
      %4330 = vst [vmem:[#allocation2 + $0xd0] sm:$0xff] %v4298
      %4331 = vst [vmem:[#allocation2 + $0xd8] sm:$0xff] %v4299
      %4332 = vst [vmem:[#allocation2 + $0xe0] sm:$0xff] %v4300
      %4333 = vst [vmem:[#allocation2 + $0xe8] sm:$0xff] %v4301
      %4334 = vst [vmem:[#allocation2 + $0xf0] sm:$0xff] %v4302
      %4335 = vst [vmem:[#allocation2 + $0xf8] sm:$0xff] %v4303
      %v4336 = vld [vmem:[%s3347] sm:$0xc]
      %v4337 = vld [vmem:[%s3347 + $0x4] sm:$0xf]
      %v4338 = vld [vmem:[%s3347 + $0x8] sm:$0x3]
      %v4339 = vld [vmem:[%s3347 + $0xc] sm:$0xc]
      %v4340 = vld [vmem:[%s3347 + $0x10] sm:$0xf]
      %v4341 = vld [vmem:[%s3347 + $0x14] sm:$0x3]
      %v4342 = vld [vmem:[%s3347 + $0x18] sm:$0xc]
      %v4343 = vld [vmem:[%s3347 + $0x1c] sm:$0xf]
      %v4344 = vld [vmem:[%s3347 + $0x20] sm:$0x3]
      %v4345 = vld [vmem:[%s3347 + $0x24] sm:$0xc]
      %v4346 = vld [vmem:[%s3347 + $0x28] sm:$0xf]
      %v4347 = vld [vmem:[%s3347 + $0x2c] sm:$0x3]
      %v4348 = vld [vmem:[%s3347 + $0x30] sm:$0xc]
      %v4349 = vld [vmem:[%s3347 + $0x34] sm:$0xf]
      %v4350 = vld [vmem:[%s3347 + $0x38] sm:$0x3]
      %v4351 = vld [vmem:[%s3347 + $0x3c] sm:$0xc]
      %v4352 = vld [vmem:[%s3347 + $0x40] sm:$0xf]
      %v4353 = vld [vmem:[%s3347 + $0x44] sm:$0x3]
      %v4354 = vld [vmem:[%s3347 + $0x48] sm:$0xc]
      %v4355 = vld [vmem:[%s3347 + $0x4c] sm:$0xf]
      %v4356 = vld [vmem:[%s3347 + $0x50] sm:$0x3]
      %v4357 = vld [vmem:[%s3347 + $0x54] sm:$0xc]
      %v4358 = vld [vmem:[%s3347 + $0x58] sm:$0xf]
      %v4359 = vld [vmem:[%s3347 + $0x5c] sm:$0x3]
      %v4360 = vld [vmem:[%s3347 + $0x60] sm:$0xc]
      %v4361 = vld [vmem:[%s3347 + $0x64] sm:$0xf]
      %v4362 = vld [vmem:[%s3347 + $0x68] sm:$0x3]
      %v4363 = vld [vmem:[%s3347 + $0x6c] sm:$0xc]
      %v4364 = vld [vmem:[%s3347 + $0x70] sm:$0xf]
      %v4365 = vld [vmem:[%s3347 + $0x74] sm:$0x3]
      %v4366 = vld [vmem:[%s3347 + $0x78] sm:$0xc]
      %v4367 = vld [vmem:[%s3347 + $0x7c] sm:$0xf]
      %v4368 = vld [vmem:[%s3347 + $0x80] sm:$0x3]
      %v4369 = vld [vmem:[%s3347 + $0x84] sm:$0xc]
      %v4370 = vld [vmem:[%s3347 + $0x88] sm:$0xf]
      %v4371 = vld [vmem:[%s3347 + $0x8c] sm:$0x3]
      %v4372 = vld [vmem:[%s3347 + $0x90] sm:$0xc]
      %v4373 = vld [vmem:[%s3347 + $0x94] sm:$0xf]
      %v4374 = vld [vmem:[%s3347 + $0x98] sm:$0x3]
      %v4375 = vld [vmem:[%s3347 + $0x9c] sm:$0xc]
      %v4376 = vld [vmem:[%s3347 + $0xa0] sm:$0xf]
      %v4377 = vld [vmem:[%s3347 + $0xa4] sm:$0x3]
      %v4378 = vld [vmem:[%s3347 + $0xa8] sm:$0xc]
      %v4379 = vld [vmem:[%s3347 + $0xac] sm:$0xf]
      %v4380 = vld [vmem:[%s3347 + $0xb0] sm:$0x3]
      %v4381 = vld [vmem:[%s3347 + $0xb4] sm:$0xc]
      %v4382 = vld [vmem:[%s3347 + $0xb8] sm:$0xf]
      %v4383 = vld [vmem:[%s3347 + $0xbc] sm:$0x3]
      %v4432 = vrot.slane %v4336, 6
      %v4433 = vrot.slane %v4432, 4
      %v4434 = vrot.slane %v4337, 6
      %v4435 = vsel %vm1321, %v4433, %v4434
      %v4436 = vrot.slane %v4434, 4
      %v4437 = vrot.slane %v4338, 6
      %v4438 = vsel %vm1321, %v4436, %v4437
      %v4439 = vrot.slane %v4339, 6
      %v4440 = vrot.slane %v4439, 4
      %v4441 = vrot.slane %v4340, 6
      %v4442 = vsel %vm1321, %v4440, %v4441
      %v4443 = vrot.slane %v4441, 4
      %v4444 = vrot.slane %v4341, 6
      %v4445 = vsel %vm1321, %v4443, %v4444
      %v4446 = vrot.slane %v4342, 6
      %v4447 = vrot.slane %v4446, 4
      %v4448 = vrot.slane %v4343, 6
      %v4449 = vsel %vm1321, %v4447, %v4448
      %v4450 = vrot.slane %v4448, 4
      %v4451 = vrot.slane %v4344, 6
      %v4452 = vsel %vm1321, %v4450, %v4451
      %v4453 = vrot.slane %v4345, 6
      %v4454 = vrot.slane %v4453, 4
      %v4455 = vrot.slane %v4346, 6
      %v4456 = vsel %vm1321, %v4454, %v4455
      %v4457 = vrot.slane %v4455, 4
      %v4458 = vrot.slane %v4347, 6
      %v4459 = vsel %vm1321, %v4457, %v4458
      %v4460 = vrot.slane %v4348, 6
      %v4461 = vrot.slane %v4460, 4
      %v4462 = vrot.slane %v4349, 6
      %v4463 = vsel %vm1321, %v4461, %v4462
      %v4464 = vrot.slane %v4462, 4
      %v4465 = vrot.slane %v4350, 6
      %v4466 = vsel %vm1321, %v4464, %v4465
      %v4467 = vrot.slane %v4351, 6
      %v4468 = vrot.slane %v4467, 4
      %v4469 = vrot.slane %v4352, 6
      %v4470 = vsel %vm1321, %v4468, %v4469
      %v4471 = vrot.slane %v4469, 4
      %v4472 = vrot.slane %v4353, 6
      %v4473 = vsel %vm1321, %v4471, %v4472
      %v4474 = vrot.slane %v4354, 6
      %v4475 = vrot.slane %v4474, 4
      %v4476 = vrot.slane %v4355, 6
      %v4477 = vsel %vm1321, %v4475, %v4476
      %v4478 = vrot.slane %v4476, 4
      %v4479 = vrot.slane %v4356, 6
      %v4480 = vsel %vm1321, %v4478, %v4479
      %v4481 = vrot.slane %v4357, 6
      %v4482 = vrot.slane %v4481, 4
      %v4483 = vrot.slane %v4358, 6
      %v4484 = vsel %vm1321, %v4482, %v4483
      %v4485 = vrot.slane %v4483, 4
      %v4486 = vrot.slane %v4359, 6
      %v4487 = vsel %vm1321, %v4485, %v4486
      %v4488 = vrot.slane %v4360, 6
      %v4489 = vrot.slane %v4488, 4
      %v4490 = vrot.slane %v4361, 6
      %v4491 = vsel %vm1321, %v4489, %v4490
      %v4492 = vrot.slane %v4490, 4
      %v4493 = vrot.slane %v4362, 6
      %v4494 = vsel %vm1321, %v4492, %v4493
      %v4495 = vrot.slane %v4363, 6
      %v4496 = vrot.slane %v4495, 4
      %v4497 = vrot.slane %v4364, 6
      %v4498 = vsel %vm1321, %v4496, %v4497
      %v4499 = vrot.slane %v4497, 4
      %v4500 = vrot.slane %v4365, 6
      %v4501 = vsel %vm1321, %v4499, %v4500
      %v4502 = vrot.slane %v4366, 6
      %v4503 = vrot.slane %v4502, 4
      %v4504 = vrot.slane %v4367, 6
      %v4505 = vsel %vm1321, %v4503, %v4504
      %v4506 = vrot.slane %v4504, 4
      %v4507 = vrot.slane %v4368, 6
      %v4508 = vsel %vm1321, %v4506, %v4507
      %v4509 = vrot.slane %v4369, 6
      %v4510 = vrot.slane %v4509, 4
      %v4511 = vrot.slane %v4370, 6
      %v4512 = vsel %vm1321, %v4510, %v4511
      %v4513 = vrot.slane %v4511, 4
      %v4514 = vrot.slane %v4371, 6
      %v4515 = vsel %vm1321, %v4513, %v4514
      %v4516 = vrot.slane %v4372, 6
      %v4517 = vrot.slane %v4516, 4
      %v4518 = vrot.slane %v4373, 6
      %v4519 = vsel %vm1321, %v4517, %v4518
      %v4520 = vrot.slane %v4518, 4
      %v4521 = vrot.slane %v4374, 6
      %v4522 = vsel %vm1321, %v4520, %v4521
      %v4523 = vrot.slane %v4375, 6
      %v4524 = vrot.slane %v4523, 4
      %v4525 = vrot.slane %v4376, 6
      %v4526 = vsel %vm1321, %v4524, %v4525
      %v4527 = vrot.slane %v4525, 4
      %v4528 = vrot.slane %v4377, 6
      %v4529 = vsel %vm1321, %v4527, %v4528
      %v4530 = vrot.slane %v4378, 6
      %v4531 = vrot.slane %v4530, 4
      %v4532 = vrot.slane %v4379, 6
      %v4533 = vsel %vm1321, %v4531, %v4532
      %v4534 = vrot.slane %v4532, 4
      %v4535 = vrot.slane %v4380, 6
      %v4536 = vsel %vm1321, %v4534, %v4535
      %v4537 = vrot.slane %v4381, 6
      %v4538 = vrot.slane %v4537, 4
      %v4539 = vrot.slane %v4382, 6
      %v4540 = vsel %vm1321, %v4538, %v4539
      %v4541 = vrot.slane %v4539, 4
      %v4542 = vrot.slane %v4383, 6
      %v4543 = vsel %vm1321, %v4541, %v4542
      %v4544 = vld [vmem:[#allocation2] sm:$0xff]
      %v4545 = vld [vmem:[#allocation2 + $0x8] sm:$0xff]
      %v4546 = vld [vmem:[#allocation2 + $0x10] sm:$0xff]
      %v4547 = vld [vmem:[#allocation2 + $0x18] sm:$0xff]
      %v4548 = vld [vmem:[#allocation2 + $0x20] sm:$0xff]
      %v4549 = vld [vmem:[#allocation2 + $0x28] sm:$0xff]
      %v4550 = vld [vmem:[#allocation2 + $0x30] sm:$0xff]
      %v4551 = vld [vmem:[#allocation2 + $0x38] sm:$0xff]
      %v4552 = vld [vmem:[#allocation2 + $0x40] sm:$0xff]
      %v4553 = vld [vmem:[#allocation2 + $0x48] sm:$0xff]
      %v4554 = vld [vmem:[#allocation2 + $0x50] sm:$0xff]
      %v4555 = vld [vmem:[#allocation2 + $0x58] sm:$0xff]
      %v4556 = vld [vmem:[#allocation2 + $0x60] sm:$0xff]
      %v4557 = vld [vmem:[#allocation2 + $0x68] sm:$0xff]
      %v4558 = vld [vmem:[#allocation2 + $0x70] sm:$0xff]
      %v4559 = vld [vmem:[#allocation2 + $0x78] sm:$0xff]
      %v4560 = vld [vmem:[#allocation2 + $0x80] sm:$0xff]
      %v4561 = vld [vmem:[#allocation2 + $0x88] sm:$0xff]
      %v4562 = vld [vmem:[#allocation2 + $0x90] sm:$0xff]
      %v4563 = vld [vmem:[#allocation2 + $0x98] sm:$0xff]
      %v4564 = vld [vmem:[#allocation2 + $0xa0] sm:$0xff]
      %v4565 = vld [vmem:[#allocation2 + $0xa8] sm:$0xff]
      %v4566 = vld [vmem:[#allocation2 + $0xb0] sm:$0xff]
      %v4567 = vld [vmem:[#allocation2 + $0xb8] sm:$0xff]
      %v4568 = vld [vmem:[#allocation2 + $0xc0] sm:$0xff]
      %v4569 = vld [vmem:[#allocation2 + $0xc8] sm:$0xff]
      %v4570 = vld [vmem:[#allocation2 + $0xd0] sm:$0xff]
      %v4571 = vld [vmem:[#allocation2 + $0xd8] sm:$0xff]
      %v4572 = vld [vmem:[#allocation2 + $0xe0] sm:$0xff]
      %v4573 = vld [vmem:[#allocation2 + $0xe8] sm:$0xff]
      %v4574 = vld [vmem:[#allocation2 + $0xf0] sm:$0xff]
      %v4575 = vld [vmem:[#allocation2 + $0xf8] sm:$0xff]
      %s4576 = scalar_lea.vmem %s1, 16
      %v4577 = vld [vmem:[%s4576] sm:$0x3]
      %v4578 = vunpack.c.l.b16 %v4435
      %v4579 = vunpack.c.l.b16 %v4438
      %v4580 = vunpack.c.l.b16 %v4442
      %v4581 = vunpack.c.l.b16 %v4445
      %v4582 = vunpack.c.l.b16 %v4449
      %v4583 = vunpack.c.l.b16 %v4452
      %v4584 = vunpack.c.l.b16 %v4456
      %v4585 = vunpack.c.l.b16 %v4459
      %v4586 = vunpack.c.l.b16 %v4463
      %v4587 = vunpack.c.l.b16 %v4466
      %v4588 = vunpack.c.l.b16 %v4470
      %v4589 = vunpack.c.l.b16 %v4473
      %v4590 = vunpack.c.l.b16 %v4477
      %v4591 = vunpack.c.l.b16 %v4480
      %v4592 = vunpack.c.l.b16 %v4484
      %v4593 = vunpack.c.l.b16 %v4487
      %v4594 = vunpack.c.l.b16 %v4491
      %v4595 = vunpack.c.l.b16 %v4494
      %v4596 = vunpack.c.l.b16 %v4498
      %v4597 = vunpack.c.l.b16 %v4501
      %v4598 = vunpack.c.l.b16 %v4505
      %v4599 = vunpack.c.l.b16 %v4508
      %v4600 = vunpack.c.l.b16 %v4512
      %v4601 = vunpack.c.l.b16 %v4515
      %v4602 = vunpack.c.l.b16 %v4519
      %v4603 = vunpack.c.l.b16 %v4522
      %v4604 = vunpack.c.l.b16 %v4526
      %v4605 = vunpack.c.l.b16 %v4529
      %v4606 = vunpack.c.l.b16 %v4533
      %v4607 = vunpack.c.l.b16 %v4536
      %v4608 = vunpack.c.l.b16 %v4540
      %v4609 = vunpack.c.l.b16 %v4543
      %v4610 = vpack.c.b16 %v4579, %v4578
      %v4611 = vpack.c.b16 %v4581, %v4580
      %v4612 = vpack.c.b16 %v4583, %v4582
      %v4613 = vpack.c.b16 %v4585, %v4584
      %v4614 = vpack.c.b16 %v4587, %v4586
      %v4615 = vpack.c.b16 %v4589, %v4588
      %v4616 = vpack.c.b16 %v4591, %v4590
      %v4617 = vpack.c.b16 %v4593, %v4592
      %v4618 = vpack.c.b16 %v4595, %v4594
      %v4619 = vpack.c.b16 %v4597, %v4596
      %v4620 = vpack.c.b16 %v4599, %v4598
      %v4621 = vpack.c.b16 %v4601, %v4600
      %v4622 = vpack.c.b16 %v4603, %v4602
      %v4623 = vpack.c.b16 %v4605, %v4604
      %v4624 = vpack.c.b16 %v4607, %v4606
      %v4625 = vpack.c.b16 %v4609, %v4608
      %v4627 = vsel %vm376, %v4610, 0
      %v4630 = vsel %vm376, %v4611, 0
      %v4633 = vsel %vm376, %v4612, 0
      %v4636 = vsel %vm376, %v4613, 0
      %v4639 = vsel %vm376, %v4614, 0
      %v4642 = vsel %vm376, %v4615, 0
      %v4645 = vsel %vm376, %v4616, 0
      %v4648 = vsel %vm376, %v4617, 0
      %v4651 = vsel %vm376, %v4618, 0
      %v4654 = vsel %vm376, %v4619, 0
      %v4657 = vsel %vm376, %v4620, 0
      %v4660 = vsel %vm376, %v4621, 0
      %v4663 = vsel %vm376, %v4622, 0
      %v4666 = vsel %vm376, %v4623, 0
      %v4669 = vsel %vm376, %v4624, 0
      %v4672 = vsel %vm376, %v4625, 0
      %v4675 = vsel %vm425, %v4577, 0
      %4677 = vmatprep.subr.bf16.mxu0 0
      %4678 = vmatpush1.bf16.msra.mxu0 %v4675
      %4679 = vmatprep.subr.bf16.mxu0 0
      %4680 = vmatpush1.bf16.msra.mxu0 0
      %4681 = vmatprep.subr.bf16.mxu0 0
      %4682 = vmatpush1.bf16.msra.mxu0 0
      %4683 = vmatprep.subr.bf16.mxu0 0
      %4684 = vmatpush1.bf16.msra.mxu0 0
      %4685 = vmatprep.subr.bf16.mxu0 0
      %4686 = vmatpush1.bf16.msra.mxu0 0
      %4687 = vmatprep.subr.bf16.mxu0 0
      %4688 = vmatpush1.bf16.msra.mxu0 0
      %4689 = vmatprep.subr.bf16.mxu0 0
      %4690 = vmatpush1.bf16.msra.mxu0 0
      %4691 = vmatprep.subr.bf16.mxu0 0
      %4692 = vmatpush1.bf16.msra.mxu0 0
      %4693 = vmatprep.subr.bf16.mxu0 0
      %4694 = vmatpush1.bf16.msra.mxu0 0
      %4695 = vmatprep.subr.bf16.mxu0 0
      %4696 = vmatpush1.bf16.msra.mxu0 0
      %4697 = vmatprep.subr.bf16.mxu0 0
      %4698 = vmatpush1.bf16.msra.mxu0 0
      %4699 = vmatprep.subr.bf16.mxu0 0
      %4700 = vmatpush1.bf16.msra.mxu0 0
      %4701 = vmatprep.subr.bf16.mxu0 0
      %4702 = vmatpush1.bf16.msra.mxu0 0
      %4703 = vmatprep.subr.bf16.mxu0 0
      %4704 = vmatpush1.bf16.msra.mxu0 0
      %4705 = vmatprep.subr.bf16.mxu0 0
      %4706 = vmatpush1.bf16.msra.mxu0 0
      %4707 = vmatprep.subr.bf16.mxu0 0
      %4708 = vmatpush1.bf16.msra.mxu0 0
      %4709 = vmatprep.mubr.bf16.mxu0 0
      %4710 = vmatmul.mubr.bf16.gmra.mrb[0].mxu0 %v4627
      %v4711 = vpop.f32.mrb[0].mxu0
      %v4712 = vadd.f32 0.0, %v4711
      %v4713 = vpop.f32.mrb[0].mxu0
      %v4714 = vpop.f32.mrb[0].mxu0
      %v4715 = vadd.f32 0.0, %v4714
      %v4716 = vpop.f32.mrb[0].mxu0
      %4717 = vmatprep.mubr.bf16.mxu0 0
      %4718 = vmatmul.mubr.bf16.gmra.mrb[0].mxu0 %v4630
      %v4719 = vpop.f32.mrb[0].mxu0
      %v4720 = vadd.f32 0.0, %v4719
      %v4721 = vpop.f32.mrb[0].mxu0
      %v4722 = vpop.f32.mrb[0].mxu0
      %v4723 = vadd.f32 0.0, %v4722
      %v4724 = vpop.f32.mrb[0].mxu0
      %4725 = vmatprep.mubr.bf16.mxu0 0
      %4726 = vmatmul.mubr.bf16.gmra.mrb[0].mxu0 %v4633
      %v4727 = vpop.f32.mrb[0].mxu0
      %v4728 = vadd.f32 0.0, %v4727
      %v4729 = vpop.f32.mrb[0].mxu0
      %v4730 = vpop.f32.mrb[0].mxu0
      %v4731 = vadd.f32 0.0, %v4730
      %v4732 = vpop.f32.mrb[0].mxu0
      %4733 = vmatprep.mubr.bf16.mxu0 0
      %4734 = vmatmul.mubr.bf16.gmra.mrb[0].mxu0 %v4636
      %v4735 = vpop.f32.mrb[0].mxu0
      %v4736 = vadd.f32 0.0, %v4735
      %v4737 = vpop.f32.mrb[0].mxu0
      %v4738 = vpop.f32.mrb[0].mxu0
      %v4739 = vadd.f32 0.0, %v4738
      %v4740 = vpop.f32.mrb[0].mxu0
      %4741 = vmatprep.mubr.bf16.mxu0 0
      %4742 = vmatmul.mubr.bf16.gmra.mrb[0].mxu0 %v4639
      %v4743 = vpop.f32.mrb[0].mxu0
      %v4744 = vadd.f32 0.0, %v4743
      %v4745 = vpop.f32.mrb[0].mxu0
      %v4746 = vpop.f32.mrb[0].mxu0
      %v4747 = vadd.f32 0.0, %v4746
      %v4748 = vpop.f32.mrb[0].mxu0
      %4749 = vmatprep.mubr.bf16.mxu0 0
      %4750 = vmatmul.mubr.bf16.gmra.mrb[0].mxu0 %v4642
      %v4751 = vpop.f32.mrb[0].mxu0
      %v4752 = vadd.f32 0.0, %v4751
      %v4753 = vpop.f32.mrb[0].mxu0
      %v4754 = vpop.f32.mrb[0].mxu0
      %v4755 = vadd.f32 0.0, %v4754
      %v4756 = vpop.f32.mrb[0].mxu0
      %4757 = vmatprep.mubr.bf16.mxu0 0
      %4758 = vmatmul.mubr.bf16.gmra.mrb[0].mxu0 %v4645
      %v4759 = vpop.f32.mrb[0].mxu0
      %v4760 = vadd.f32 0.0, %v4759
      %v4761 = vpop.f32.mrb[0].mxu0
      %v4762 = vpop.f32.mrb[0].mxu0
      %v4763 = vadd.f32 0.0, %v4762
      %v4764 = vpop.f32.mrb[0].mxu0
      %4765 = vmatprep.mubr.bf16.mxu0 0
      %4766 = vmatmul.mubr.bf16.gmra.mrb[0].mxu0 %v4648
      %v4767 = vpop.f32.mrb[0].mxu0
      %v4768 = vadd.f32 0.0, %v4767
      %v4769 = vpop.f32.mrb[0].mxu0
      %v4770 = vpop.f32.mrb[0].mxu0
      %v4771 = vadd.f32 0.0, %v4770
      %v4772 = vpop.f32.mrb[0].mxu0
      %4773 = vmatprep.mubr.bf16.mxu0 0
      %4774 = vmatmul.mubr.bf16.gmra.mrb[0].mxu0 %v4651
      %v4775 = vpop.f32.mrb[0].mxu0
      %v4776 = vadd.f32 0.0, %v4775
      %v4777 = vpop.f32.mrb[0].mxu0
      %v4778 = vpop.f32.mrb[0].mxu0
      %v4779 = vadd.f32 0.0, %v4778
      %v4780 = vpop.f32.mrb[0].mxu0
      %4781 = vmatprep.mubr.bf16.mxu0 0
      %4782 = vmatmul.mubr.bf16.gmra.mrb[0].mxu0 %v4654
      %v4783 = vpop.f32.mrb[0].mxu0
      %v4784 = vadd.f32 0.0, %v4783
      %v4785 = vpop.f32.mrb[0].mxu0
      %v4786 = vpop.f32.mrb[0].mxu0
      %v4787 = vadd.f32 0.0, %v4786
      %v4788 = vpop.f32.mrb[0].mxu0
      %4789 = vmatprep.mubr.bf16.mxu0 0
      %4790 = vmatmul.mubr.bf16.gmra.mrb[0].mxu0 %v4657
      %v4791 = vpop.f32.mrb[0].mxu0
      %v4792 = vadd.f32 0.0, %v4791
      %v4793 = vpop.f32.mrb[0].mxu0
      %v4794 = vpop.f32.mrb[0].mxu0
      %v4795 = vadd.f32 0.0, %v4794
      %v4796 = vpop.f32.mrb[0].mxu0
      %4797 = vmatprep.mubr.bf16.mxu0 0
      %4798 = vmatmul.mubr.bf16.gmra.mrb[0].mxu0 %v4660
      %v4799 = vpop.f32.mrb[0].mxu0
      %v4800 = vadd.f32 0.0, %v4799
      %v4801 = vpop.f32.mrb[0].mxu0
      %v4802 = vpop.f32.mrb[0].mxu0
      %v4803 = vadd.f32 0.0, %v4802
      %v4804 = vpop.f32.mrb[0].mxu0
      %4805 = vmatprep.mubr.bf16.mxu0 0
      %4806 = vmatmul.mubr.bf16.gmra.mrb[0].mxu0 %v4663
      %v4807 = vpop.f32.mrb[0].mxu0
      %v4808 = vadd.f32 0.0, %v4807
      %v4809 = vpop.f32.mrb[0].mxu0
      %v4810 = vpop.f32.mrb[0].mxu0
      %v4811 = vadd.f32 0.0, %v4810
      %v4812 = vpop.f32.mrb[0].mxu0
      %4813 = vmatprep.mubr.bf16.mxu0 0
      %4814 = vmatmul.mubr.bf16.gmra.mrb[0].mxu0 %v4666
      %v4815 = vpop.f32.mrb[0].mxu0
      %v4816 = vadd.f32 0.0, %v4815
      %v4817 = vpop.f32.mrb[0].mxu0
      %v4818 = vpop.f32.mrb[0].mxu0
      %v4819 = vadd.f32 0.0, %v4818
      %v4820 = vpop.f32.mrb[0].mxu0
      %4821 = vmatprep.mubr.bf16.mxu0 0
      %4822 = vmatmul.mubr.bf16.gmra.mrb[0].mxu0 %v4669
      %v4823 = vpop.f32.mrb[0].mxu0
      %v4824 = vadd.f32 0.0, %v4823
      %v4825 = vpop.f32.mrb[0].mxu0
      %v4826 = vpop.f32.mrb[0].mxu0
      %v4827 = vadd.f32 0.0, %v4826
      %v4828 = vpop.f32.mrb[0].mxu0
      %4829 = vmatprep.mubr.bf16.mxu0 0
      %4830 = vmatmul.mubr.bf16.gmra.mrb[0].mxu0 %v4672
      %v4831 = vpop.f32.mrb[0].mxu0
      %v4832 = vadd.f32 0.0, %v4831
      %v4833 = vpop.f32.mrb[0].mxu0
      %v4834 = vpop.f32.mrb[0].mxu0
      %v4835 = vadd.f32 0.0, %v4834
      %v4836 = vpop.f32.mrb[0].mxu0
      %4837 = vdwg.mxu0
      %v4838 = vadd.f32 %v4544, %v4712
      %v4839 = vadd.f32 %v4545, %v4715
      %v4840 = vadd.f32 %v4546, %v4720
      %v4841 = vadd.f32 %v4547, %v4723
      %v4842 = vadd.f32 %v4548, %v4728
      %v4843 = vadd.f32 %v4549, %v4731
      %v4844 = vadd.f32 %v4550, %v4736
      %v4845 = vadd.f32 %v4551, %v4739
      %v4846 = vadd.f32 %v4552, %v4744
      %v4847 = vadd.f32 %v4553, %v4747
      %v4848 = vadd.f32 %v4554, %v4752
      %v4849 = vadd.f32 %v4555, %v4755
      %v4850 = vadd.f32 %v4556, %v4760
      %v4851 = vadd.f32 %v4557, %v4763
      %v4852 = vadd.f32 %v4558, %v4768
      %v4853 = vadd.f32 %v4559, %v4771
      %v4854 = vadd.f32 %v4560, %v4776
      %v4855 = vadd.f32 %v4561, %v4779
      %v4856 = vadd.f32 %v4562, %v4784
      %v4857 = vadd.f32 %v4563, %v4787
      %v4858 = vadd.f32 %v4564, %v4792
      %v4859 = vadd.f32 %v4565, %v4795
      %v4860 = vadd.f32 %v4566, %v4800
      %v4861 = vadd.f32 %v4567, %v4803
      %v4862 = vadd.f32 %v4568, %v4808
      %v4863 = vadd.f32 %v4569, %v4811
      %v4864 = vadd.f32 %v4570, %v4816
      %v4865 = vadd.f32 %v4571, %v4819
      %v4866 = vadd.f32 %v4572, %v4824
      %v4867 = vadd.f32 %v4573, %v4827
      %v4868 = vadd.f32 %v4574, %v4832
      %v4869 = vadd.f32 %v4575, %v4835
      %4870 = vst [vmem:[#allocation2] sm:$0xff] %v4838
      %4871 = vst [vmem:[#allocation2 + $0x8] sm:$0xff] %v4839
      %4872 = vst [vmem:[#allocation2 + $0x10] sm:$0xff] %v4840
      %4873 = vst [vmem:[#allocation2 + $0x18] sm:$0xff] %v4841
      %4874 = vst [vmem:[#allocation2 + $0x20] sm:$0xff] %v4842
      %4875 = vst [vmem:[#allocation2 + $0x28] sm:$0xff] %v4843
      %4876 = vst [vmem:[#allocation2 + $0x30] sm:$0xff] %v4844
      %4877 = vst [vmem:[#allocation2 + $0x38] sm:$0xff] %v4845
      %4878 = vst [vmem:[#allocation2 + $0x40] sm:$0xff] %v4846
      %4879 = vst [vmem:[#allocation2 + $0x48] sm:$0xff] %v4847
      %4880 = vst [vmem:[#allocation2 + $0x50] sm:$0xff] %v4848
      %4881 = vst [vmem:[#allocation2 + $0x58] sm:$0xff] %v4849
      %4882 = vst [vmem:[#allocation2 + $0x60] sm:$0xff] %v4850
      %4883 = vst [vmem:[#allocation2 + $0x68] sm:$0xff] %v4851
      %4884 = vst [vmem:[#allocation2 + $0x70] sm:$0xff] %v4852
      %4885 = vst [vmem:[#allocation2 + $0x78] sm:$0xff] %v4853
      %4886 = vst [vmem:[#allocation2 + $0x80] sm:$0xff] %v4854
      %4887 = vst [vmem:[#allocation2 + $0x88] sm:$0xff] %v4855
      %4888 = vst [vmem:[#allocation2 + $0x90] sm:$0xff] %v4856
      %4889 = vst [vmem:[#allocation2 + $0x98] sm:$0xff] %v4857
      %4890 = vst [vmem:[#allocation2 + $0xa0] sm:$0xff] %v4858
      %4891 = vst [vmem:[#allocation2 + $0xa8] sm:$0xff] %v4859
      %4892 = vst [vmem:[#allocation2 + $0xb0] sm:$0xff] %v4860
      %4893 = vst [vmem:[#allocation2 + $0xb8] sm:$0xff] %v4861
      %4894 = vst [vmem:[#allocation2 + $0xc0] sm:$0xff] %v4862
      %4895 = vst [vmem:[#allocation2 + $0xc8] sm:$0xff] %v4863
      %4896 = vst [vmem:[#allocation2 + $0xd0] sm:$0xff] %v4864
      %4897 = vst [vmem:[#allocation2 + $0xd8] sm:$0xff] %v4865
      %4898 = vst [vmem:[#allocation2 + $0xe0] sm:$0xff] %v4866
      %4899 = vst [vmem:[#allocation2 + $0xe8] sm:$0xff] %v4867
      %4900 = vst [vmem:[#allocation2 + $0xf0] sm:$0xff] %v4868
      %4901 = vst [vmem:[#allocation2 + $0xf8] sm:$0xff] %v4869
      %v4902 = vld [vmem:[#allocation2] sm:$0xff]
      %v4903 = vld [vmem:[#allocation2 + $0x8] sm:$0xff]
      %v4904 = vld [vmem:[#allocation2 + $0x10] sm:$0xff]
      %v4905 = vld [vmem:[#allocation2 + $0x18] sm:$0xff]
      %v4906 = vld [vmem:[#allocation2 + $0x20] sm:$0xff]
      %v4907 = vld [vmem:[#allocation2 + $0x28] sm:$0xff]
      %v4908 = vld [vmem:[#allocation2 + $0x30] sm:$0xff]
      %v4909 = vld [vmem:[#allocation2 + $0x38] sm:$0xff]
      %v4910 = vld [vmem:[#allocation2 + $0x40] sm:$0xff]
      %v4911 = vld [vmem:[#allocation2 + $0x48] sm:$0xff]
      %v4912 = vld [vmem:[#allocation2 + $0x50] sm:$0xff]
      %v4913 = vld [vmem:[#allocation2 + $0x58] sm:$0xff]
      %v4914 = vld [vmem:[#allocation2 + $0x60] sm:$0xff]
      %v4915 = vld [vmem:[#allocation2 + $0x68] sm:$0xff]
      %v4916 = vld [vmem:[#allocation2 + $0x70] sm:$0xff]
      %v4917 = vld [vmem:[#allocation2 + $0x78] sm:$0xff]
      %v4918 = vld [vmem:[#allocation2 + $0x80] sm:$0xff]
      %v4919 = vld [vmem:[#allocation2 + $0x88] sm:$0xff]
      %v4920 = vld [vmem:[#allocation2 + $0x90] sm:$0xff]
      %v4921 = vld [vmem:[#allocation2 + $0x98] sm:$0xff]
      %v4922 = vld [vmem:[#allocation2 + $0xa0] sm:$0xff]
      %v4923 = vld [vmem:[#allocation2 + $0xa8] sm:$0xff]
      %v4924 = vld [vmem:[#allocation2 + $0xb0] sm:$0xff]
      %v4925 = vld [vmem:[#allocation2 + $0xb8] sm:$0xff]
      %v4926 = vld [vmem:[#allocation2 + $0xc0] sm:$0xff]
      %v4927 = vld [vmem:[#allocation2 + $0xc8] sm:$0xff]
      %v4928 = vld [vmem:[#allocation2 + $0xd0] sm:$0xff]
      %v4929 = vld [vmem:[#allocation2 + $0xd8] sm:$0xff]
      %v4930 = vld [vmem:[#allocation2 + $0xe0] sm:$0xff]
      %v4931 = vld [vmem:[#allocation2 + $0xe8] sm:$0xff]
      %v4932 = vld [vmem:[#allocation2 + $0xf0] sm:$0xff]
      %v4933 = vld [vmem:[#allocation2 + $0xf8] sm:$0xff]
      %v4934 = vld [vmem:[%s2] sm:$0x1]
      %v4936 = vlaneseq
      %v4937 = vshrl.u32 %v4936, 7
      %v4938 = vsub.s32 0, %v4937
      %v4939 = vrot.slane %v4934, %v4938
      %v4941 = vmul.f32 %v4902, %v4939
      %v4942 = vmul.f32 %v4903, %v4939
      %v4943 = vmul.f32 %v4904, %v4939
      %v4944 = vmul.f32 %v4905, %v4939
      %v4945 = vmul.f32 %v4906, %v4939
      %v4946 = vmul.f32 %v4907, %v4939
      %v4947 = vmul.f32 %v4908, %v4939
      %v4948 = vmul.f32 %v4909, %v4939
      %v4949 = vmul.f32 %v4910, %v4939
      %v4950 = vmul.f32 %v4911, %v4939
      %v4951 = vmul.f32 %v4912, %v4939
      %v4952 = vmul.f32 %v4913, %v4939
      %v4953 = vmul.f32 %v4914, %v4939
      %v4954 = vmul.f32 %v4915, %v4939
      %v4955 = vmul.f32 %v4916, %v4939
      %v4956 = vmul.f32 %v4917, %v4939
      %v4957 = vmul.f32 %v4918, %v4939
      %v4958 = vmul.f32 %v4919, %v4939
      %v4959 = vmul.f32 %v4920, %v4939
      %v4960 = vmul.f32 %v4921, %v4939
      %v4961 = vmul.f32 %v4922, %v4939
      %v4962 = vmul.f32 %v4923, %v4939
      %v4963 = vmul.f32 %v4924, %v4939
      %v4964 = vmul.f32 %v4925, %v4939
      %v4965 = vmul.f32 %v4926, %v4939
      %v4966 = vmul.f32 %v4927, %v4939
      %v4967 = vmul.f32 %v4928, %v4939
      %v4968 = vmul.f32 %v4929, %v4939
      %v4969 = vmul.f32 %v4930, %v4939
      %v4970 = vmul.f32 %v4931, %v4939
      %v4971 = vmul.f32 %v4932, %v4939
      %v4972 = vmul.f32 %v4933, %v4939
      %v4973 = vld [vmem:[%s3] sm:$0x1]
      %v4975 = vlaneseq
      %v4976 = vshrl.u32 %v4975, 7
      %v4977 = vsub.s32 0, %v4976
      %v4978 = vrot.slane %v4973, %v4977
      %v4980 = vadd.f32 %v4941, %v4978
      %v4981 = vadd.f32 %v4942, %v4978
      %v4982 = vadd.f32 %v4943, %v4978
      %v4983 = vadd.f32 %v4944, %v4978
      %v4984 = vadd.f32 %v4945, %v4978
      %v4985 = vadd.f32 %v4946, %v4978
      %v4986 = vadd.f32 %v4947, %v4978
      %v4987 = vadd.f32 %v4948, %v4978
      %v4988 = vadd.f32 %v4949, %v4978
      %v4989 = vadd.f32 %v4950, %v4978
      %v4990 = vadd.f32 %v4951, %v4978
      %v4991 = vadd.f32 %v4952, %v4978
      %v4992 = vadd.f32 %v4953, %v4978
      %v4993 = vadd.f32 %v4954, %v4978
      %v4994 = vadd.f32 %v4955, %v4978
      %v4995 = vadd.f32 %v4956, %v4978
      %v4996 = vadd.f32 %v4957, %v4978
      %v4997 = vadd.f32 %v4958, %v4978
      %v4998 = vadd.f32 %v4959, %v4978
      %v4999 = vadd.f32 %v4960, %v4978
      %v5000 = vadd.f32 %v4961, %v4978
      %v5001 = vadd.f32 %v4962, %v4978
      %v5002 = vadd.f32 %v4963, %v4978
      %v5003 = vadd.f32 %v4964, %v4978
      %v5004 = vadd.f32 %v4965, %v4978
      %v5005 = vadd.f32 %v4966, %v4978
      %v5006 = vadd.f32 %v4967, %v4978
      %v5007 = vadd.f32 %v4968, %v4978
      %v5008 = vadd.f32 %v4969, %v4978
      %v5009 = vadd.f32 %v4970, %v4978
      %v5010 = vadd.f32 %v4971, %v4978
      %v5011 = vadd.f32 %v4972, %v4978
      %vm5012 = vcmp.gt.f32.partialorder %v4980, 0.0
      %vm5013 = vcmp.gt.f32.partialorder %v4981, 0.0
      %vm5014 = vcmp.gt.f32.partialorder %v4982, 0.0
      %vm5015 = vcmp.gt.f32.partialorder %v4983, 0.0
      %vm5016 = vcmp.gt.f32.partialorder %v4984, 0.0
      %vm5017 = vcmp.gt.f32.partialorder %v4985, 0.0
      %vm5018 = vcmp.gt.f32.partialorder %v4986, 0.0
      %vm5019 = vcmp.gt.f32.partialorder %v4987, 0.0
      %vm5020 = vcmp.gt.f32.partialorder %v4988, 0.0
      %vm5021 = vcmp.gt.f32.partialorder %v4989, 0.0
      %vm5022 = vcmp.gt.f32.partialorder %v4990, 0.0
      %vm5023 = vcmp.gt.f32.partialorder %v4991, 0.0
      %vm5024 = vcmp.gt.f32.partialorder %v4992, 0.0
      %vm5025 = vcmp.gt.f32.partialorder %v4993, 0.0
      %vm5026 = vcmp.gt.f32.partialorder %v4994, 0.0
      %vm5027 = vcmp.gt.f32.partialorder %v4995, 0.0
      %vm5028 = vcmp.gt.f32.partialorder %v4996, 0.0
      %vm5029 = vcmp.gt.f32.partialorder %v4997, 0.0
      %vm5030 = vcmp.gt.f32.partialorder %v4998, 0.0
      %vm5031 = vcmp.gt.f32.partialorder %v4999, 0.0
      %vm5032 = vcmp.gt.f32.partialorder %v5000, 0.0
      %vm5033 = vcmp.gt.f32.partialorder %v5001, 0.0
      %vm5034 = vcmp.gt.f32.partialorder %v5002, 0.0
      %vm5035 = vcmp.gt.f32.partialorder %v5003, 0.0
      %vm5036 = vcmp.gt.f32.partialorder %v5004, 0.0
      %vm5037 = vcmp.gt.f32.partialorder %v5005, 0.0
      %vm5038 = vcmp.gt.f32.partialorder %v5006, 0.0
      %vm5039 = vcmp.gt.f32.partialorder %v5007, 0.0
      %vm5040 = vcmp.gt.f32.partialorder %v5008, 0.0
      %vm5041 = vcmp.gt.f32.partialorder %v5009, 0.0
      %vm5042 = vcmp.gt.f32.partialorder %v5010, 0.0
      %vm5043 = vcmp.gt.f32.partialorder %v5011, 0.0
      %v5044 = vmin.f32 %v4980, 0.0
      %v5045 = vmin.f32 %v4981, 0.0
      %v5046 = vmin.f32 %v4982, 0.0
      %v5047 = vmin.f32 %v4983, 0.0
      %v5048 = vmin.f32 %v4984, 0.0
      %v5049 = vmin.f32 %v4985, 0.0
      %v5050 = vmin.f32 %v4986, 0.0
      %v5051 = vmin.f32 %v4987, 0.0
      %v5052 = vmin.f32 %v4988, 0.0
      %v5053 = vmin.f32 %v4989, 0.0
      %v5054 = vmin.f32 %v4990, 0.0
      %v5055 = vmin.f32 %v4991, 0.0
      %v5056 = vmin.f32 %v4992, 0.0
      %v5057 = vmin.f32 %v4993, 0.0
      %v5058 = vmin.f32 %v4994, 0.0
      %v5059 = vmin.f32 %v4995, 0.0
      %v5060 = vmin.f32 %v4996, 0.0
      %v5061 = vmin.f32 %v4997, 0.0
      %v5062 = vmin.f32 %v4998, 0.0
      %v5063 = vmin.f32 %v4999, 0.0
      %v5064 = vmin.f32 %v5000, 0.0
      %v5065 = vmin.f32 %v5001, 0.0
      %v5066 = vmin.f32 %v5002, 0.0
      %v5067 = vmin.f32 %v5003, 0.0
      %v5068 = vmin.f32 %v5004, 0.0
      %v5069 = vmin.f32 %v5005, 0.0
      %v5070 = vmin.f32 %v5006, 0.0
      %v5071 = vmin.f32 %v5007, 0.0
      %v5072 = vmin.f32 %v5008, 0.0
      %v5073 = vmin.f32 %v5009, 0.0
      %v5074 = vmin.f32 %v5010, 0.0
      %v5075 = vmin.f32 %v5011, 0.0
      %v5076 = vmul.f32 %v5044, 1.442695
      %v5077 = vpow.pop %v5076
      %v5078 = vmul.f32 %v5045, 1.442695
      %v5079 = vpow.pop %v5078
      %v5080 = vmul.f32 %v5046, 1.442695
      %v5081 = vpow.pop %v5080
      %v5082 = vmul.f32 %v5047, 1.442695
      %v5083 = vpow.pop %v5082
      %v5084 = vmul.f32 %v5048, 1.442695
      %v5085 = vpow.pop %v5084
      %v5086 = vmul.f32 %v5049, 1.442695
      %v5087 = vpow.pop %v5086
      %v5088 = vmul.f32 %v5050, 1.442695
      %v5089 = vpow.pop %v5088
      %v5090 = vmul.f32 %v5051, 1.442695
      %v5091 = vpow.pop %v5090
      %v5092 = vmul.f32 %v5052, 1.442695
      %v5093 = vpow.pop %v5092
      %v5094 = vmul.f32 %v5053, 1.442695
      %v5095 = vpow.pop %v5094
      %v5096 = vmul.f32 %v5054, 1.442695
      %v5097 = vpow.pop %v5096
      %v5098 = vmul.f32 %v5055, 1.442695
      %v5099 = vpow.pop %v5098
      %v5100 = vmul.f32 %v5056, 1.442695
      %v5101 = vpow.pop %v5100
      %v5102 = vmul.f32 %v5057, 1.442695
      %v5103 = vpow.pop %v5102
      %v5104 = vmul.f32 %v5058, 1.442695
      %v5105 = vpow.pop %v5104
      %v5106 = vmul.f32 %v5059, 1.442695
      %v5107 = vpow.pop %v5106
      %v5108 = vmul.f32 %v5060, 1.442695
      %v5109 = vpow.pop %v5108
      %v5110 = vmul.f32 %v5061, 1.442695
      %v5111 = vpow.pop %v5110
      %v5112 = vmul.f32 %v5062, 1.442695
      %v5113 = vpow.pop %v5112
      %v5114 = vmul.f32 %v5063, 1.442695
      %v5115 = vpow.pop %v5114
      %v5116 = vmul.f32 %v5064, 1.442695
      %v5117 = vpow.pop %v5116
      %v5118 = vmul.f32 %v5065, 1.442695
      %v5119 = vpow.pop %v5118
      %v5120 = vmul.f32 %v5066, 1.442695
      %v5121 = vpow.pop %v5120
      %v5122 = vmul.f32 %v5067, 1.442695
      %v5123 = vpow.pop %v5122
      %v5124 = vmul.f32 %v5068, 1.442695
      %v5125 = vpow.pop %v5124
      %v5126 = vmul.f32 %v5069, 1.442695
      %v5127 = vpow.pop %v5126
      %v5128 = vmul.f32 %v5070, 1.442695
      %v5129 = vpow.pop %v5128
      %v5130 = vmul.f32 %v5071, 1.442695
      %v5131 = vpow.pop %v5130
      %v5132 = vmul.f32 %v5072, 1.442695
      %v5133 = vpow.pop %v5132
      %v5134 = vmul.f32 %v5073, 1.442695
      %v5135 = vpow.pop %v5134
      %v5136 = vmul.f32 %v5074, 1.442695
      %v5137 = vpow.pop %v5136
      %v5138 = vmul.f32 %v5075, 1.442695
      %v5139 = vpow.pop %v5138
      %v5140 = vsub.f32 %v5077, 1.0
      %v5141 = vsub.f32 %v5079, 1.0
      %v5142 = vsub.f32 %v5081, 1.0
      %v5143 = vsub.f32 %v5083, 1.0
      %v5144 = vsub.f32 %v5085, 1.0
      %v5145 = vsub.f32 %v5087, 1.0
      %v5146 = vsub.f32 %v5089, 1.0
      %v5147 = vsub.f32 %v5091, 1.0
      %v5148 = vsub.f32 %v5093, 1.0
      %v5149 = vsub.f32 %v5095, 1.0
      %v5150 = vsub.f32 %v5097, 1.0
      %v5151 = vsub.f32 %v5099, 1.0
      %v5152 = vsub.f32 %v5101, 1.0
      %v5153 = vsub.f32 %v5103, 1.0
      %v5154 = vsub.f32 %v5105, 1.0
      %v5155 = vsub.f32 %v5107, 1.0
      %v5156 = vsub.f32 %v5109, 1.0
      %v5157 = vsub.f32 %v5111, 1.0
      %v5158 = vsub.f32 %v5113, 1.0
      %v5159 = vsub.f32 %v5115, 1.0
      %v5160 = vsub.f32 %v5117, 1.0
      %v5161 = vsub.f32 %v5119, 1.0
      %v5162 = vsub.f32 %v5121, 1.0
      %v5163 = vsub.f32 %v5123, 1.0
      %v5164 = vsub.f32 %v5125, 1.0
      %v5165 = vsub.f32 %v5127, 1.0
      %v5166 = vsub.f32 %v5129, 1.0
      %v5167 = vsub.f32 %v5131, 1.0
      %v5168 = vsub.f32 %v5133, 1.0
      %v5169 = vsub.f32 %v5135, 1.0
      %v5170 = vsub.f32 %v5137, 1.0
      %v5171 = vsub.f32 %v5139, 1.0
      %v5172 = vsel %vm5012, %v4980, %v5140
      %v5173 = vsel %vm5013, %v4981, %v5141
      %v5174 = vsel %vm5014, %v4982, %v5142
      %v5175 = vsel %vm5015, %v4983, %v5143
      %v5176 = vsel %vm5016, %v4984, %v5144
      %v5177 = vsel %vm5017, %v4985, %v5145
      %v5178 = vsel %vm5018, %v4986, %v5146
      %v5179 = vsel %vm5019, %v4987, %v5147
      %v5180 = vsel %vm5020, %v4988, %v5148
      %v5181 = vsel %vm5021, %v4989, %v5149
      %v5182 = vsel %vm5022, %v4990, %v5150
      %v5183 = vsel %vm5023, %v4991, %v5151
      %v5184 = vsel %vm5024, %v4992, %v5152
      %v5185 = vsel %vm5025, %v4993, %v5153
      %v5186 = vsel %vm5026, %v4994, %v5154
      %v5187 = vsel %vm5027, %v4995, %v5155
      %v5188 = vsel %vm5028, %v4996, %v5156
      %v5189 = vsel %vm5029, %v4997, %v5157
      %v5190 = vsel %vm5030, %v4998, %v5158
      %v5191 = vsel %vm5031, %v4999, %v5159
      %v5192 = vsel %vm5032, %v5000, %v5160
      %v5193 = vsel %vm5033, %v5001, %v5161
      %v5194 = vsel %vm5034, %v5002, %v5162
      %v5195 = vsel %vm5035, %v5003, %v5163
      %v5196 = vsel %vm5036, %v5004, %v5164
      %v5197 = vsel %vm5037, %v5005, %v5165
      %v5198 = vsel %vm5038, %v5006, %v5166
      %v5199 = vsel %vm5039, %v5007, %v5167
      %v5200 = vsel %vm5040, %v5008, %v5168
      %v5201 = vsel %vm5041, %v5009, %v5169
      %v5202 = vsel %vm5042, %v5010, %v5170
      %v5203 = vsel %vm5043, %v5011, %v5171
      %5204 = vst [vmem:[%s197] sm:$0xff] %v5172
      %5205 = vst [vmem:[%s197 + $0x8] sm:$0xff] %v5173
      %5206 = vst [vmem:[%s197 + $0x10] sm:$0xff] %v5174
      %5207 = vst [vmem:[%s197 + $0x18] sm:$0xff] %v5175
      %5208 = vst [vmem:[%s197 + $0x20] sm:$0xff] %v5176
      %5209 = vst [vmem:[%s197 + $0x28] sm:$0xff] %v5177
      %5210 = vst [vmem:[%s197 + $0x30] sm:$0xff] %v5178
      %5211 = vst [vmem:[%s197 + $0x38] sm:$0xff] %v5179
      %5212 = vst [vmem:[%s197 + $0x40] sm:$0xff] %v5180
      %5213 = vst [vmem:[%s197 + $0x48] sm:$0xff] %v5181
      %5214 = vst [vmem:[%s197 + $0x50] sm:$0xff] %v5182
      %5215 = vst [vmem:[%s197 + $0x58] sm:$0xff] %v5183
      %5216 = vst [vmem:[%s197 + $0x60] sm:$0xff] %v5184
      %5217 = vst [vmem:[%s197 + $0x68] sm:$0xff] %v5185
      %5218 = vst [vmem:[%s197 + $0x70] sm:$0xff] %v5186
      %5219 = vst [vmem:[%s197 + $0x78] sm:$0xff] %v5187
      %5220 = vst [vmem:[%s197 + $0x80] sm:$0xff] %v5188
      %5221 = vst [vmem:[%s197 + $0x88] sm:$0xff] %v5189
      %5222 = vst [vmem:[%s197 + $0x90] sm:$0xff] %v5190
      %5223 = vst [vmem:[%s197 + $0x98] sm:$0xff] %v5191
      %5224 = vst [vmem:[%s197 + $0xa0] sm:$0xff] %v5192
      %5225 = vst [vmem:[%s197 + $0xa8] sm:$0xff] %v5193
      %5226 = vst [vmem:[%s197 + $0xb0] sm:$0xff] %v5194
      %5227 = vst [vmem:[%s197 + $0xb8] sm:$0xff] %v5195
      %5228 = vst [vmem:[%s197 + $0xc0] sm:$0xff] %v5196
      %5229 = vst [vmem:[%s197 + $0xc8] sm:$0xff] %v5197
      %5230 = vst [vmem:[%s197 + $0xd0] sm:$0xff] %v5198
      %5231 = vst [vmem:[%s197 + $0xd8] sm:$0xff] %v5199
      %5232 = vst [vmem:[%s197 + $0xe0] sm:$0xff] %v5200
      %5233 = vst [vmem:[%s197 + $0xe8] sm:$0xff] %v5201
      %5234 = vst [vmem:[%s197 + $0xf0] sm:$0xff] %v5202
      %5235 = vst [vmem:[%s197 + $0xf8] sm:$0xff] %v5203
      %p5236 = scmp.lt.s32.totalorder %s15, 1
      %s5237 = scalar_select %p5236, %s15, 1
      %s5238 = smul.addr %s5237, 32
      %s5239 = smul.addr %s5238, 8
      %s5240 = scalar_lea.vmem %s4, %s5239
      // Predicated region
      $region37: #{aspp_forward.1} parent=35 // pred_check
        %p5241 = pneg %p122
      $region38: #{aspp_forward.1} parent=35 // pred_check_branch
        %5243 = sbr.rel (%p5241) target = $region40
      $region39: #{aspp_forward.1} parent=35 // pred_region
        _
      $region40: #{aspp_forward.1} parent=35 // pred_fallthru
        _
    $region36: #{aspp_forward.1} parent=5 // pred_fallthru
      _
    %p5244 = scmp.le.s32.totalorder 2, %s10
    // Predicated region
    $region41: #{aspp_forward.1} parent=5 // pred_check
      %p5245 = pneg %p5244
    $region42: #{aspp_forward.1} parent=5 // pred_check_branch
      %5247 = sbr.rel (%p5245) target = $region44
    $region43: #{aspp_forward.1} parent=5 // pred_region
      %s5248 = ssub.s32 %s10, 2
      // Predicated region
      $region45: #{aspp_forward.1} parent=43 // pred_check
        %p5249 = pneg %p128
      $region46: #{aspp_forward.1} parent=43 // pred_check_branch
        %5251 = sbr.rel (%p5249) target = $region48
      $region47: #{aspp_forward.1} parent=43 // pred_region
        %p5252 = scmp.lt.s32.totalorder %s16, 1
        %s5253 = scalar_select %p5252, %s16, 1
        %s5254 = smul.addr %s5253, 32
        %s5255 = smul.addr %s5254, 8
        %s5256 = scalar_lea.vmem %s4, %s5255
      $region48: #{aspp_forward.1} parent=43 // pred_fallthru
        _
    $region44: #{aspp_forward.1} parent=5 // pred_fallthru
      _
  $region6: #{aspp_forward.1} parent=0 // loop_footer
    %s14 = sadd.s32 1, %s10
  $region7: #{aspp_forward.1} parent=0 // loop_footer_branch
    %9 = sbr.rel target = $region3
  $region8: #{aspp_forward.1} parent=0 // loop_exit
    _

</llo_original>
